<compile_context>
chip_gen: v7x
topology: tpu7x:2x2x1
jax: 0.10.0
libtpu: 0.0.40
codegen_flags: <defaults>
</compile_context>

<pallas_src>
import numpy as np
import jax
import jax.numpy as jnp
from jax.experimental import pallas as pl
from jax.experimental.pallas import tpu as pltpu


# -----------------------------------------------------------------------------
# fastmri.fft2c / ifft2c equivalents (centered, orthonormal 2-D FFT).
# TODO(synk): a 2-D FFT has no Pallas TPU primitive; kept as jnp.fft glue.
# -----------------------------------------------------------------------------
def fft2c(xr, xi):
    xc = (xr + 1j * xi).astype(jnp.complex64)
    xc = jnp.fft.ifftshift(xc, axes=(-2, -1))
    xc = jnp.fft.fft2(xc, axes=(-2, -1), norm="ortho")
    xc = jnp.fft.fftshift(xc, axes=(-2, -1))
    return jnp.real(xc).astype(jnp.float32), jnp.imag(xc).astype(jnp.float32)


def ifft2c(xr, xi):
    xc = (xr + 1j * xi).astype(jnp.complex64)
    xc = jnp.fft.ifftshift(xc, axes=(-2, -1))
    xc = jnp.fft.ifft2(xc, axes=(-2, -1), norm="ortho")
    xc = jnp.fft.fftshift(xc, axes=(-2, -1))
    return jnp.real(xc).astype(jnp.float32), jnp.imag(xc).astype(jnp.float32)


# -----------------------------------------------------------------------------
# Precomputed zero-padding validity masks for a 3x3 / pad=1 conv on the
# flattened pixel index p = h*W + w (the lane axis).  Row order = kh*3 + kw,
# i.e. offsets (dh, dw) = (kh-1, kw-1).  These masks also zero every
# wrap-around lane of a rotate, so roll+mask == shift-with-zero-padding.
# -----------------------------------------------------------------------------
def _conv_valid_masks(H, W):
    hh, ww = np.divmod(np.arange(H * W), W)
    rows = []
    for dh in (-1, 0, 1):
        for dw in (-1, 0, 1):
            ok = ((hh + dh >= 0) & (hh + dh < H) &
                  (ww + dw >= 0) & (ww + dw < W))
            rows.append(ok.astype(np.float32))
    return np.stack(rows, axis=0)                                # (9, H*W)


def _pick_batch_chunk(B, max_chunk=8):
    """Largest batch chunk <= max_chunk that still leaves >= 2 grid steps."""
    for bc in range(min(max_chunk, B), 0, -1):
        if B % bc == 0 and B // bc >= 2:
            return bc
    return 1


# -----------------------------------------------------------------------------
# Fused kernel: sens_reduce -> conv3x3+ReLU (VPU) -> conv3x3 (MXU) ->
# sens_expand (complex-mul part).  One grid step per batch chunk.
# -----------------------------------------------------------------------------
def _build_reduce_conv_expand(B, C, H, W, hid, bc):
    HW = H * W
    NL = bc * HW                       # lane width of the layer-2 patch matrix
    K1 = 2 * 9 + 1                     # layer-1 tap weights (r,i per tap) + bias col
    KP = 9 * hid + 8                   # layer-2 tap rows + [ones row | zero pad]
    offs = [dh * W + dw for dh in (-1, 0, 1) for dw in (-1, 0, 1)]
    assert HW % 128 == 0, "H*W must be a multiple of 128 (lane-dense layout)"
    assert hid % 8 == 0 and B % bc == 0

    def kernel(ir_ref, ii_ref, sr_ref, si_ref, mk_ref, w1_ref, w2_ref,
               er_ref, ei_ref, p2_ref):
        mk = mk_ref[...]                                     # (9, HW)
        w1 = w1_ref[...]                                     # (hid, K1)
        bias1 = jnp.broadcast_to(w1[:, K1 - 1:K1], (hid, HW))  # hoisted broadcast

        # Constant tail rows of the patch scratch: a ones row (feeds the bias
        # column of w2) and zero rows (their w2 columns are zero, but the
        # scratch is uninitialized so they must not carry NaNs).  Written every
        # step -> megacore-safe.
        p2_ref[9 * hid:9 * hid + 1, :] = jnp.ones((1, NL), jnp.float32)
        p2_ref[9 * hid + 1:KP, :] = jnp.zeros((7, NL), jnp.float32)

        # ---- per batch element: sens_reduce + layer 1 (VPU) + layer-2 im2col --
        for b in range(bc):
            irb, iib = ir_ref[b], ii_ref[b]                  # (C, HW)
            srb, sib = sr_ref[b], si_ref[b]

            # sens_reduce: sum_coils complex_mul(x, conj(s))
            red_r = jnp.sum(irb * srb + iib * sib, axis=0, keepdims=True)
            red_i = jnp.sum(iib * srb - irb * sib, axis=0, keepdims=True)

            # layer 1: 3x3 conv (pad=1) + ReLU accumulated on the VPU.
            acc = bias1
            for t, d in enumerate(offs):
                if d == 0:                                   # centre tap, mask==1
                    rr, ri = red_r, red_i
                else:
                    m_t = mk[t:t + 1, :]
                    sh = (-d) % HW                           # out[p] = in[p + d]
                    rr = pltpu.roll(red_r, sh, axis=1) * m_t
                    ri = pltpu.roll(red_i, sh, axis=1) * m_t
                acc = (acc + w1[:, 2 * t:2 * t + 1] * rr
                           + w1[:, 2 * t + 1:2 * t + 2] * ri)
            h1 = jnp.maximum(acc, 0.0)                       # (hid, HW)

            # layer-2 patch matrix: rolled+masked tap blocks stored directly at
            # 8-aligned sublane / 128-aligned lane offsets (no sublane concat).
            for t, d in enumerate(offs):
                if d == 0:
                    blk = h1
                else:
                    blk = pltpu.roll(h1, (-d) % HW, axis=1) * mk[t:t + 1, :]
                p2_ref[t * hid:(t + 1) * hid, b * HW:(b + 1) * HW] = blk

        # ---- layer 2: single MXU matmul over the whole chunk (N = bc*HW) -----
        o2 = jnp.dot(w2_ref[...], p2_ref[...],
                     preferred_element_type=jnp.float32)     # (8, bc*HW)

        # ---- sens_expand (complex-mul part): complex_mul(model_out, sens) ----
        for b in range(bc):
            mod_r = o2[0:1, b * HW:(b + 1) * HW]             # (1, HW)
            mod_i = o2[1:2, b * HW:(b + 1) * HW]
            srb, sib = sr_ref[b], si_ref[b]
            er_ref[b] = mod_r * srb - mod_i * sib
            ei_ref[b] = mod_r * sib + mod_i * srb

    img = pl.BlockSpec((bc, C, HW), lambda i: (i, 0, 0))
    mk_s = pl.BlockSpec((9, HW), lambda i: (0, 0))
    w1_s = pl.BlockSpec((hid, K1), lambda i: (0, 0))
    w2_s = pl.BlockSpec((8, KP), lambda i: (0, 0))

    # TODO(synk): at production fastMRI sizes (C~15-20, H*W~320^2) these blocks
    # exceed default scoped VMEM (and v7x's 64 MiB): tile the coil axis into
    # the grid, tile HW with a +/-(W+1) halo for the 3x3 conv, compute the
    # boundary masks in-kernel from iota compares, and set
    # pltpu.CompilerParams(vmem_limit_bytes=...) explicitly.
    return pl.pallas_call(
        kernel,
        out_shape=(jax.ShapeDtypeStruct((B, C, HW), jnp.float32),
                   jax.ShapeDtypeStruct((B, C, HW), jnp.float32)),
        grid=(B // bc,),
        in_specs=[img, img, img, img, mk_s, w1_s, w2_s],
        out_specs=(img, img),
        scratch_shapes=[pltpu.VMEM((KP, NL), jnp.float32)],
        compiler_params=pltpu.CompilerParams(dimension_semantics=("parallel",)),
    )


# -----------------------------------------------------------------------------
# Soft data-consistency + final combine:
#   out = current - (current - ref) * (mask * eta) - model_term
# (eta folded into the 0/1 mask outside; outputs aliased onto current_kspace.)
# -----------------------------------------------------------------------------
def _build_dc_combine(B, C, H, W, bc):
    HW = H * W

    def kernel(m_ref, cr_ref, ci_ref, rr_ref, ri_ref, tr_ref, ti_ref,
               or_ref, oi_ref):
        for b in range(bc):
            m = m_ref[b]                         # (1, HW), eta already folded in
            cr, ci = cr_ref[b], ci_ref[b]        # (C, HW)
            or_ref[b] = cr - (cr - rr_ref[b]) * m - tr_ref[b]
            oi_ref[b] = ci - (ci - ri_ref[b]) * m - ti_ref[b]

    k_spec = pl.BlockSpec((bc, C, HW), lambda i: (i, 0, 0))
    m_spec = pl.BlockSpec((bc, 1, HW), lambda i: (i, 0, 0))
    # TODO(synk): at production sizes add a coil/HW-chunk grid axis (lane tiles
    # >= 512) and pass the mask at its natural (B,1,1,W) width, expanding it
    # in-kernel, to trim HBM bytes on this purely bandwidth-bound step.
    return pl.pallas_call(
        kernel,
        out_shape=(jax.ShapeDtypeStruct((B, C, HW), jnp.float32),
                   jax.ShapeDtypeStruct((B, C, HW), jnp.float32)),
        grid=(B // bc,),
        in_specs=[m_spec, k_spec, k_spec, k_spec, k_spec, k_spec, k_spec],
        out_specs=(k_spec, k_spec),
        input_output_aliases={1: 0, 2: 1},       # write outputs onto cr / ci
        compiler_params=pltpu.CompilerParams(dimension_semantics=("parallel",)),
    )


# -----------------------------------------------------------------------------
# Module port
# -----------------------------------------------------------------------------
class VarNetBlockSTLPallas:
    """Pallas/JAX port of VarNetBlockSTL.

    The regularizer `model` is a built-in conv3x3 -> ReLU -> conv3x3 fully
    convolutional net on the 2-channel (real, imag) coil-combined image; its
    weights are kernel operands, so one compiled kernel serves any weight
    values / any unrolled block.
    """

    def __init__(self, hidden=8, seed=0):
        assert hidden % 8 == 0, "hidden must be a sublane multiple (im2col scratch)"
        self.hidden = hidden
        rng = np.random.default_rng(seed)
        w1 = (rng.standard_normal((3, 3, 2, hidden)) / np.sqrt(18.0)).astype(np.float32)
        b1 = (0.1 * rng.standard_normal((hidden,))).astype(np.float32)
        w2 = (rng.standard_normal((3, 3, hidden, 2)) / np.sqrt(9.0 * hidden)).astype(np.float32)
        b2 = (0.1 * rng.standard_normal((2,))).astype(np.float32)

        # HWIO copies kept for the pure-JAX reference check.
        self.w1_hwio = jnp.asarray(w1)
        self.b1_vec = jnp.asarray(b1)
        self.w2_hwio = jnp.asarray(w2)
        self.b2_vec = jnp.asarray(b2)

        # layer-1 operand: (hid, 19) = 9 taps x (w_r, w_i) columns + bias col.
        w1op = np.zeros((hidden, 19), np.float32)
        w1op[:, :18] = w1.transpose(3, 0, 1, 2).reshape(hidden, 18)
        w1op[:, 18] = b1
        # layer-2 operand: (8, 9*hid+8); rows 0..1 hold the real weights, and
        # column 9*hid is the bias column matching the ones row of the scratch.
        kp = 9 * hidden + 8
        w2op = np.zeros((8, kp), np.float32)
        w2op[:2, :9 * hidden] = w2.transpose(3, 0, 1, 2).reshape(2, 9 * hidden)
        w2op[:2, 9 * hidden] = b2
        self.w1op = jnp.asarray(w1op)
        self.w2op = jnp.asarray(w2op)

        self.eta = jnp.ones((1,), jnp.float32)     # nn.Parameter(torch.ones(1))
        self._fwd_cache = {}

    def _forward_fn(self, B, C, H, W):
        key = (B, C, H, W)
        if key in self._fwd_cache:
            return self._fwd_cache[key]

        HW = H * W
        bc = _pick_batch_chunk(B)
        reg_call = _build_reduce_conv_expand(B, C, H, W, self.hidden, bc)
        dc_call = _build_dc_combine(B, C, H, W, bc)
        conv_masks = jnp.asarray(_conv_valid_masks(H, W))          # (9, HW)

        def fwd(current_kspace, ref_kspace, mask, sens_maps, w1op, w2op, eta):
            cr = current_kspace[..., 0]
            ci = current_kspace[..., 1]
            rr = ref_kspace[..., 0]
            ri = ref_kspace[..., 1]
            sr = sens_maps[..., 0].reshape(B, C, HW)
            si = sens_maps[..., 1].reshape(B, C, HW)

            # eta folded into the 0/1 sampling mask; broadcast along H and
            # flattened so the DC kernel reads a lane-dense (1, HW) plane.
            m = (mask[..., 0] != 0).astype(jnp.float32) * eta[0]   # (B,1,1,W)
            m = jnp.broadcast_to(m, (B, 1, H, W)).reshape(B, 1, HW)

            # regularizer branch: ifft2c -> [reduce -> conv -> expand] -> fft2c
            ir, ii = ifft2c(cr, ci)
            er, ei = reg_call(ir.reshape(B, C, HW), ii.reshape(B, C, HW),
                              sr, si, conv_masks, w1op, w2op)
            tr, ti = fft2c(er.reshape(B, C, H, W), ei.reshape(B, C, H, W))

            # soft data consistency + combine
            out_r, out_i = dc_call(m,
                                   cr.reshape(B, C, HW), ci.reshape(B, C, HW),
                                   rr.reshape(B, C, HW), ri.reshape(B, C, HW),
                                   tr.reshape(B, C, HW), ti.reshape(B, C, HW))
            return jnp.stack([out_r.reshape(B, C, H, W),
                              out_i.reshape(B, C, H, W)], axis=-1)

        fwd = jax.jit(fwd)
        self._fwd_cache[key] = fwd
        return fwd

    def __call__(self, current_kspace, ref_kspace, mask, sens_maps):
        B, C, H, W, _ = current_kspace.shape
        fwd = self._forward_fn(B, C, H, W)
        return fwd(current_kspace, ref_kspace, mask, sens_maps,
                   self.w1op, self.w2op, self.eta)


# -----------------------------------------------------------------------------
# Pure-JAX reference (no Pallas) mirroring the PyTorch semantics.
# -----------------------------------------------------------------------------
def _reference_forward(block, current_kspace, ref_kspace, mask, sens_maps):
    cr, ci = current_kspace[..., 0], current_kspace[..., 1]
    rr, ri = ref_kspace[..., 0], ref_kspace[..., 1]
    sr, si = sens_maps[..., 0], sens_maps[..., 1]

    ir, ii = ifft2c(cr, ci)
    red_r = jnp.sum(ir * sr + ii * si, axis=1, keepdims=True)
    red_i = jnp.sum(ii * sr - ir * si, axis=1, keepdims=True)
    x = jnp.concatenate([red_r, red_i], axis=1)                    # (B,2,H,W)

    dn = ("NCHW", "HWIO", "NCHW")
    y = jax.lax.conv_general_dilated(x, block.w1_hwio, (1, 1), "SAME",
                                     dimension_numbers=dn,
                                     precision=jax.lax.Precision.HIGHEST)
    y = jnp.maximum(y + block.b1_vec[None, :, None, None], 0.0)
    y = jax.lax.conv_general_dilated(y, block.w2_hwio, (1, 1), "SAME",
                                     dimension_numbers=dn,
                                     precision=jax.lax.Precision.HIGHEST)
    y = y + block.b2_vec[None, :, None, None]
    mr, mi = y[:, 0:1], y[:, 1:2]

    er = mr * sr - mi * si
    ei = mr * si + mi * sr
    tr, ti = fft2c(er, ei)

    m = mask[..., 0] != 0
    eta = block.eta[0]
    out_r = cr - jnp.where(m, cr - rr, 0.0) * eta - tr
    out_i = ci - jnp.where(m, ci - ri, 0.0) * eta - ti
    return jnp.stack([out_r, out_i], axis=-1)


if __name__ == "__main__":
    B, C, H, W = 4, 4, 16, 16            # B=4 -> batch chunk 2, two parallel steps
    key = jax.random.PRNGKey(0)
    k1, k2, k3, k4 = jax.random.split(key, 4)
    current_kspace = jax.random.normal(k1, (B, C, H, W, 2), dtype=jnp.float32)
    ref_kspace = jax.random.normal(k2, (B, C, H, W, 2), dtype=jnp.float32)
    sens_maps = jax.random.normal(k3, (B, C, H, W, 2), dtype=jnp.float32)
    mask = (jax.random.uniform(k4, (B, 1, 1, W, 1)) > 0.5).astype(jnp.float32)

    block = VarNetBlockSTLPallas(hidden=8, seed=0)
    out = jax.block_until_ready(block(current_kspace, ref_kspace, mask, sens_maps))
    ref = jax.block_until_ready(
        _reference_forward(block, current_kspace, ref_kspace, mask, sens_maps))

    assert out.shape == (B, C, H, W, 2)
    assert bool(jnp.all(jnp.isfinite(out)))
    err = float(jnp.max(jnp.abs(out - ref)))
    # loose bound: covers MXU f32 matmul precision, still catches any semantic bug
    assert err < 5e-2, f"mismatch vs reference: max abs err {err}"
    print("KERNEL_OK")
</pallas_src>

<mosaic_0001>
module attributes {stable_mosaic.version = 11 : i64} {
  func.func @kernel(%arg0: i32, %arg1: memref<2x4x256xf32, #tpu.memory_space<vmem>>, %arg2: memref<2x4x256xf32, #tpu.memory_space<vmem>>, %arg3: memref<2x4x256xf32, #tpu.memory_space<vmem>>, %arg4: memref<2x4x256xf32, #tpu.memory_space<vmem>>, %arg5: memref<9x256xf32, #tpu.memory_space<vmem>>, %arg6: memref<8x19xf32, #tpu.memory_space<vmem>>, %arg7: memref<8x80xf32, #tpu.memory_space<vmem>>, %arg8: memref<2x4x256xf32, #tpu.memory_space<vmem>>, %arg9: memref<2x4x256xf32, #tpu.memory_space<vmem>>, %arg10: memref<80x512xf32, #tpu.memory_space<vmem>>) attributes {dimension_semantics = [#tpu.dimension_semantics<parallel>], iteration_bounds = array<i64: 2>, scalar_prefetch = 0 : i64, scratch_operands = 1 : i64, tpu.core_type = #tpu.core_type<tc>, window_params = [{transform_indices = @transform_0, window_bounds = array<i64: 2, 4, 256>}, {transform_indices = @transform_1, window_bounds = array<i64: 2, 4, 256>}, {transform_indices = @transform_2, window_bounds = array<i64: 2, 4, 256>}, {transform_indices = @transform_3, window_bounds = array<i64: 2, 4, 256>}, {pipeline_mode = #tpu.pipeline_mode<synchronous>, transform_indices = @transform_4, window_bounds = array<i64: 9, 256>}, {pipeline_mode = #tpu.pipeline_mode<synchronous>, transform_indices = @transform_5, window_bounds = array<i64: 8, 19>}, {pipeline_mode = #tpu.pipeline_mode<synchronous>, transform_indices = @transform_6, window_bounds = array<i64: 8, 80>}, {transform_indices = @transform_7, window_bounds = array<i64: 2, 4, 256>}, {transform_indices = @transform_8, window_bounds = array<i64: 2, 4, 256>}]} {
    %c0 = arith.constant 0 : index
    %c0_0 = arith.constant 0 : index
    %0 = vector.load %arg5[%c0, %c0_0] : memref<9x256xf32, #tpu.memory_space<vmem>>, vector<9x256xf32>
    %c0_1 = arith.constant 0 : index
    %c0_2 = arith.constant 0 : index
    %1 = vector.load %arg6[%c0_1, %c0_2] : memref<8x19xf32, #tpu.memory_space<vmem>>, vector<8x19xf32>
    %2 = vector.extract_strided_slice %1 {offsets = [0, 18], sizes = [8, 1], strides = [1, 1]} : vector<8x19xf32> to vector<8x1xf32>
    %3 = vector.shape_cast %2 : vector<8x1xf32> to vector<8x1xf32>
    %4 = vector.broadcast %3 : vector<8x1xf32> to vector<8x256xf32>
    %cst = arith.constant 1.000000e+00 : f32
    %5 = vector.broadcast %cst : f32 to vector<1x512xf32>
    %c72 = arith.constant 72 : index
    %c0_3 = arith.constant 0 : index
    %6 = vector.load %arg10[%c72, %c0_3] : memref<80x512xf32, #tpu.memory_space<vmem>>, vector<1x512xf32>
    tpu.vector_store %arg10[%c72, %c0_3], %5 {strides = array<i32>} : memref<80x512xf32, #tpu.memory_space<vmem>>, vector<1x512xf32>,
    %cst_4 = arith.constant 0.000000e+00 : f32
    %7 = vector.broadcast %cst_4 : f32 to vector<7x512xf32>
    %c73 = arith.constant 73 : index
    %c0_5 = arith.constant 0 : index
    %8 = vector.load %arg10[%c73, %c0_5] : memref<80x512xf32, #tpu.memory_space<vmem>>, vector<7x512xf32>
    tpu.vector_store %arg10[%c73, %c0_5], %7 {strides = array<i32>} : memref<80x512xf32, #tpu.memory_space<vmem>>, vector<7x512xf32>,
    %c0_6 = arith.constant 0 : index
    %c0_7 = arith.constant 0 : index
    %c0_8 = arith.constant 0 : index
    %9 = vector.load %arg1[%c0_6, %c0_7, %c0_8] : memref<2x4x256xf32, #tpu.memory_space<vmem>>, vector<1x4x256xf32>
    %10 = vector.shape_cast %9 : vector<1x4x256xf32> to vector<4x256xf32>
    %c0_9 = arith.constant 0 : index
    %c0_10 = arith.constant 0 : index
    %c0_11 = arith.constant 0 : index
    %11 = vector.load %arg2[%c0_9, %c0_10, %c0_11] : memref<2x4x256xf32, #tpu.memory_space<vmem>>, vector<1x4x256xf32>
    %12 = vector.shape_cast %11 : vector<1x4x256xf32> to vector<4x256xf32>
    %c0_12 = arith.constant 0 : index
    %c0_13 = arith.constant 0 : index
    %c0_14 = arith.constant 0 : index
    %13 = vector.load %arg3[%c0_12, %c0_13, %c0_14] : memref<2x4x256xf32, #tpu.memory_space<vmem>>, vector<1x4x256xf32>
    %14 = vector.shape_cast %13 : vector<1x4x256xf32> to vector<4x256xf32>
    %c0_15 = arith.constant 0 : index
    %c0_16 = arith.constant 0 : index
    %c0_17 = arith.constant 0 : index
    %15 = vector.load %arg4[%c0_15, %c0_16, %c0_17] : memref<2x4x256xf32, #tpu.memory_space<vmem>>, vector<1x4x256xf32>
    %16 = vector.shape_cast %15 : vector<1x4x256xf32> to vector<4x256xf32>
    %17 = arith.mulf %10, %14 : vector<4x256xf32>
    %18 = arith.mulf %12, %16 : vector<4x256xf32>
    %19 = arith.addf %17, %18 : vector<4x256xf32>
    %cst_18 = arith.constant dense<0.000000e+00> : vector<256xf32>
    %20 = vector.multi_reduction <add>, %19, %cst_18 [0] : vector<4x256xf32> to vector<256xf32>
    %21 = vector.shape_cast %20 : vector<256xf32> to vector<1x256xf32>
    %22 = arith.mulf %12, %14 : vector<4x256xf32>
    %23 = arith.mulf %10, %16 : vector<4x256xf32>
    %24 = arith.subf %22, %23 : vector<4x256xf32>
    %cst_19 = arith.constant dense<0.000000e+00> : vector<256xf32>
    %25 = vector.multi_reduction <add>, %24, %cst_19 [0] : vector<4x256xf32> to vector<256xf32>
    %26 = vector.shape_cast %25 : vector<256xf32> to vector<1x256xf32>
    %27 = vector.extract_strided_slice %0 {offsets = [0, 0], sizes = [1, 256], strides = [1, 1]} : vector<9x256xf32> to vector<1x256xf32>
    %c17_i32 = arith.constant 17 : i32
    %28 = tpu.dynamic_rotate %21 by %c17_i32 dim 1 : vector<1x256xf32>, i32 -> vector<1x256xf32>
    %29 = arith.mulf %28, %27 : vector<1x256xf32>
    %c17_i32_20 = arith.constant 17 : i32
    %30 = tpu.dynamic_rotate %26 by %c17_i32_20 dim 1 : vector<1x256xf32>, i32 -> vector<1x256xf32>
    %31 = arith.mulf %30, %27 : vector<1x256xf32>
    %32 = vector.extract_strided_slice %1 {offsets = [0, 0], sizes = [8, 1], strides = [1, 1]} : vector<8x19xf32> to vector<8x1xf32>
    %33 = vector.broadcast %32 : vector<8x1xf32> to vector<8x256xf32>
    %34 = vector.broadcast %29 : vector<1x256xf32> to vector<8x256xf32>
    %35 = arith.mulf %33, %34 : vector<8x256xf32>
    %36 = arith.addf %4, %35 : vector<8x256xf32>
    %37 = vector.extract_strided_slice %1 {offsets = [0, 1], sizes = [8, 1], strides = [1, 1]} : vector<8x19xf32> to vector<8x1xf32>
    %38 = vector.broadcast %37 : vector<8x1xf32> to vector<8x256xf32>
    %39 = vector.broadcast %31 : vector<1x256xf32> to vector<8x256xf32>
    %40 = arith.mulf %38, %39 : vector<8x256xf32>
    %41 = arith.addf %36, %40 : vector<8x256xf32>
    %42 = vector.extract_strided_slice %0 {offsets = [1, 0], sizes = [1, 256], strides = [1, 1]} : vector<9x256xf32> to vector<1x256xf32>
    %c16_i32 = arith.constant 16 : i32
    %43 = tpu.dynamic_rotate %21 by %c16_i32 dim 1 : vector<1x256xf32>, i32 -> vector<1x256xf32>
    %44 = arith.mulf %43, %42 : vector<1x256xf32>
    %c16_i32_21 = arith.constant 16 : i32
    %45 = tpu.dynamic_rotate %26 by %c16_i32_21 dim 1 : vector<1x256xf32>, i32 -> vector<1x256xf32>
    %46 = arith.mulf %45, %42 : vector<1x256xf32>
    %47 = vector.extract_strided_slice %1 {offsets = [0, 2], sizes = [8, 1], strides = [1, 1]} : vector<8x19xf32> to vector<8x1xf32>
    %48 = vector.broadcast %47 : vector<8x1xf32> to vector<8x256xf32>
    %49 = vector.broadcast %44 : vector<1x256xf32> to vector<8x256xf32>
    %50 = arith.mulf %48, %49 : vector<8x256xf32>
    %51 = arith.addf %41, %50 : vector<8x256xf32>
    %52 = vector.extract_strided_slice %1 {offsets = [0, 3], sizes = [8, 1], strides = [1, 1]} : vector<8x19xf32> to vector<8x1xf32>
    %53 = vector.broadcast %52 : vector<8x1xf32> to vector<8x256xf32>
    %54 = vector.broadcast %46 : vector<1x256xf32> to vector<8x256xf32>
    %55 = arith.mulf %53, %54 : vector<8x256xf32>
    %56 = arith.addf %51, %55 : vector<8x256xf32>
    %57 = vector.extract_strided_slice %0 {offsets = [2, 0], sizes = [1, 256], strides = [1, 1]} : vector<9x256xf32> to vector<1x256xf32>
    %c15_i32 = arith.constant 15 : i32
    %58 = tpu.dynamic_rotate %21 by %c15_i32 dim 1 : vector<1x256xf32>, i32 -> vector<1x256xf32>
    %59 = arith.mulf %58, %57 : vector<1x256xf32>
    %c15_i32_22 = arith.constant 15 : i32
    %60 = tpu.dynamic_rotate %26 by %c15_i32_22 dim 1 : vector<1x256xf32>, i32 -> vector<1x256xf32>
    %61 = arith.mulf %60, %57 : vector<1x256xf32>
    %62 = vector.extract_strided_slice %1 {offsets = [0, 4], sizes = [8, 1], strides = [1, 1]} : vector<8x19xf32> to vector<8x1xf32>
    %63 = vector.broadcast %62 : vector<8x1xf32> to vector<8x256xf32>
    %64 = vector.broadcast %59 : vector<1x256xf32> to vector<8x256xf32>
    %65 = arith.mulf %63, %64 : vector<8x256xf32>
    %66 = arith.addf %56, %65 : vector<8x256xf32>
    %67 = vector.extract_strided_slice %1 {offsets = [0, 5], sizes = [8, 1], strides = [1, 1]} : vector<8x19xf32> to vector<8x1xf32>
    %68 = vector.broadcast %67 : vector<8x1xf32> to vector<8x256xf32>
    %69 = vector.broadcast %61 : vector<1x256xf32> to vector<8x256xf32>
    %70 = arith.mulf %68, %69 : vector<8x256xf32>
    %71 = arith.addf %66, %70 : vector<8x256xf32>
    %72 = vector.extract_strided_slice %0 {offsets = [3, 0], sizes = [1, 256], strides = [1, 1]} : vector<9x256xf32> to vector<1x256xf32>
    %c1_i32 = arith.constant 1 : i32
    %73 = tpu.dynamic_rotate %21 by %c1_i32 dim 1 : vector<1x256xf32>, i32 -> vector<1x256xf32>
    %74 = arith.mulf %73, %72 : vector<1x256xf32>
    %c1_i32_23 = arith.constant 1 : i32
    %75 = tpu.dynamic_rotate %26 by %c1_i32_23 dim 1 : vector<1x256xf32>, i32 -> vector<1x256xf32>
    %76 = arith.mulf %75, %72 : vector<1x256xf32>
    %77 = vector.extract_strided_slice %1 {offsets = [0, 6], sizes = [8, 1], strides = [1, 1]} : vector<8x19xf32> to vector<8x1xf32>
    %78 = vector.broadcast %77 : vector<8x1xf32> to vector<8x256xf32>
    %79 = vector.broadcast %74 : vector<1x256xf32> to vector<8x256xf32>
    %80 = arith.mulf %78, %79 : vector<8x256xf32>
    %81 = arith.addf %71, %80 : vector<8x256xf32>
    %82 = vector.extract_strided_slice %1 {offsets = [0, 7], sizes = [8, 1], strides = [1, 1]} : vector<8x19xf32> to vector<8x1xf32>
    %83 = vector.broadcast %82 : vector<8x1xf32> to vector<8x256xf32>
    %84 = vector.broadcast %76 : vector<1x256xf32> to vector<8x256xf32>
    %85 = arith.mulf %83, %84 : vector<8x256xf32>
    %86 = arith.addf %81, %85 : vector<8x256xf32>
    %87 = vector.extract_strided_slice %1 {offsets = [0, 8], sizes = [8, 1], strides = [1, 1]} : vector<8x19xf32> to vector<8x1xf32>
    %88 = vector.broadcast %87 : vector<8x1xf32> to vector<8x256xf32>
    %89 = vector.broadcast %21 : vector<1x256xf32> to vector<8x256xf32>
    %90 = arith.mulf %88, %89 : vector<8x256xf32>
    %91 = arith.addf %86, %90 : vector<8x256xf32>
    %92 = vector.extract_strided_slice %1 {offsets = [0, 9], sizes = [8, 1], strides = [1, 1]} : vector<8x19xf32> to vector<8x1xf32>
    %93 = vector.broadcast %92 : vector<8x1xf32> to vector<8x256xf32>
    %94 = vector.broadcast %26 : vector<1x256xf32> to vector<8x256xf32>
    %95 = arith.mulf %93, %94 : vector<8x256xf32>
    %96 = arith.addf %91, %95 : vector<8x256xf32>
    %97 = vector.extract_strided_slice %0 {offsets = [5, 0], sizes = [1, 256], strides = [1, 1]} : vector<9x256xf32> to vector<1x256xf32>
    %c255_i32 = arith.constant 255 : i32
    %98 = tpu.dynamic_rotate %21 by %c255_i32 dim 1 : vector<1x256xf32>, i32 -> vector<1x256xf32>
    %99 = arith.mulf %98, %97 : vector<1x256xf32>
    %c255_i32_24 = arith.constant 255 : i32
    %100 = tpu.dynamic_rotate %26 by %c255_i32_24 dim 1 : vector<1x256xf32>, i32 -> vector<1x256xf32>
    %101 = arith.mulf %100, %97 : vector<1x256xf32>
    %102 = vector.extract_strided_slice %1 {offsets = [0, 10], sizes = [8, 1], strides = [1, 1]} : vector<8x19xf32> to vector<8x1xf32>
    %103 = vector.broadcast %102 : vector<8x1xf32> to vector<8x256xf32>
    %104 = vector.broadcast %99 : vector<1x256xf32> to vector<8x256xf32>
    %105 = arith.mulf %103, %104 : vector<8x256xf32>
    %106 = arith.addf %96, %105 : vector<8x256xf32>
    %107 = vector.extract_strided_slice %1 {offsets = [0, 11], sizes = [8, 1], strides = [1, 1]} : vector<8x19xf32> to vector<8x1xf32>
    %108 = vector.broadcast %107 : vector<8x1xf32> to vector<8x256xf32>
    %109 = vector.broadcast %101 : vector<1x256xf32> to vector<8x256xf32>
    %110 = arith.mulf %108, %109 : vector<8x256xf32>
    %111 = arith.addf %106, %110 : vector<8x256xf32>
    %112 = vector.extract_strided_slice %0 {offsets = [6, 0], sizes = [1, 256], strides = [1, 1]} : vector<9x256xf32> to vector<1x256xf32>
    %c241_i32 = arith.constant 241 : i32
    %113 = tpu.dynamic_rotate %21 by %c241_i32 dim 1 : vector<1x256xf32>, i32 -> vector<1x256xf32>
    %114 = arith.mulf %113, %112 : vector<1x256xf32>
    %c241_i32_25 = arith.constant 241 : i32
    %115 = tpu.dynamic_rotate %26 by %c241_i32_25 dim 1 : vector<1x256xf32>, i32 -> vector<1x256xf32>
    %116 = arith.mulf %115, %112 : vector<1x256xf32>
    %117 = vector.extract_strided_slice %1 {offsets = [0, 12], sizes = [8, 1], strides = [1, 1]} : vector<8x19xf32> to vector<8x1xf32>
    %118 = vector.broadcast %117 : vector<8x1xf32> to vector<8x256xf32>
    %119 = vector.broadcast %114 : vector<1x256xf32> to vector<8x256xf32>
    %120 = arith.mulf %118, %119 : vector<8x256xf32>
    %121 = arith.addf %111, %120 : vector<8x256xf32>
    %122 = vector.extract_strided_slice %1 {offsets = [0, 13], sizes = [8, 1], strides = [1, 1]} : vector<8x19xf32> to vector<8x1xf32>
    %123 = vector.broadcast %122 : vector<8x1xf32> to vector<8x256xf32>
    %124 = vector.broadcast %116 : vector<1x256xf32> to vector<8x256xf32>
    %125 = arith.mulf %123, %124 : vector<8x256xf32>
    %126 = arith.addf %121, %125 : vector<8x256xf32>
    %127 = vector.extract_strided_slice %0 {offsets = [7, 0], sizes = [1, 256], strides = [1, 1]} : vector<9x256xf32> to vector<1x256xf32>
    %c240_i32 = arith.constant 240 : i32
    %128 = tpu.dynamic_rotate %21 by %c240_i32 dim 1 : vector<1x256xf32>, i32 -> vector<1x256xf32>
    %129 = arith.mulf %128, %127 : vector<1x256xf32>
    %c240_i32_26 = arith.constant 240 : i32
    %130 = tpu.dynamic_rotate %26 by %c240_i32_26 dim 1 : vector<1x256xf32>, i32 -> vector<1x256xf32>
    %131 = arith.mulf %130, %127 : vector<1x256xf32>
    %132 = vector.extract_strided_slice %1 {offsets = [0, 14], sizes = [8, 1], strides = [1, 1]} : vector<8x19xf32> to vector<8x1xf32>
    %133 = vector.broadcast %132 : vector<8x1xf32> to vector<8x256xf32>
    %134 = vector.broadcast %129 : vector<1x256xf32> to vector<8x256xf32>
    %135 = arith.mulf %133, %134 : vector<8x256xf32>
    %136 = arith.addf %126, %135 : vector<8x256xf32>
    %137 = vector.extract_strided_slice %1 {offsets = [0, 15], sizes = [8, 1], strides = [1, 1]} : vector<8x19xf32> to vector<8x1xf32>
    %138 = vector.broadcast %137 : vector<8x1xf32> to vector<8x256xf32>
    %139 = vector.broadcast %131 : vector<1x256xf32> to vector<8x256xf32>
    %140 = arith.mulf %138, %139 : vector<8x256xf32>
    %141 = arith.addf %136, %140 : vector<8x256xf32>
    %142 = vector.extract_strided_slice %0 {offsets = [8, 0], sizes = [1, 256], strides = [1, 1]} : vector<9x256xf32> to vector<1x256xf32>
    %c239_i32 = arith.constant 239 : i32
    %143 = tpu.dynamic_rotate %21 by %c239_i32 dim 1 : vector<1x256xf32>, i32 -> vector<1x256xf32>
    %144 = arith.mulf %143, %142 : vector<1x256xf32>
    %c239_i32_27 = arith.constant 239 : i32
    %145 = tpu.dynamic_rotate %26 by %c239_i32_27 dim 1 : vector<1x256xf32>, i32 -> vector<1x256xf32>
    %146 = arith.mulf %145, %142 : vector<1x256xf32>
    %147 = vector.extract_strided_slice %1 {offsets = [0, 16], sizes = [8, 1], strides = [1, 1]} : vector<8x19xf32> to vector<8x1xf32>
    %148 = vector.broadcast %147 : vector<8x1xf32> to vector<8x256xf32>
    %149 = vector.broadcast %144 : vector<1x256xf32> to vector<8x256xf32>
    %150 = arith.mulf %148, %149 : vector<8x256xf32>
    %151 = arith.addf %141, %150 : vector<8x256xf32>
    %152 = vector.extract_strided_slice %1 {offsets = [0, 17], sizes = [8, 1], strides = [1, 1]} : vector<8x19xf32> to vector<8x1xf32>
    %153 = vector.broadcast %152 : vector<8x1xf32> to vector<8x256xf32>
    %154 = vector.broadcast %146 : vector<1x256xf32> to vector<8x256xf32>
    %155 = arith.mulf %153, %154 : vector<8x256xf32>
    %156 = arith.addf %151, %155 : vector<8x256xf32>
    %cst_28 = arith.constant 0.000000e+00 : f32
    %157 = vector.broadcast %cst_28 : f32 to vector<8x256xf32>
    %158 = arith.maximumf %156, %157 : vector<8x256xf32>
    %c17_i32_29 = arith.constant 17 : i32
    %159 = tpu.dynamic_rotate %158 by %c17_i32_29 dim 1 : vector<8x256xf32>, i32 -> vector<8x256xf32>
    %160 = vector.extract_strided_slice %0 {offsets = [0, 0], sizes = [1, 256], strides = [1, 1]} : vector<9x256xf32> to vector<1x256xf32>
    %161 = vector.broadcast %160 : vector<1x256xf32> to vector<8x256xf32>
    %162 = arith.mulf %159, %161 : vector<8x256xf32>
    %c0_30 = arith.constant 0 : index
    %c0_31 = arith.constant 0 : index
    %163 = vector.load %arg10[%c0_30, %c0_31] : memref<80x512xf32, #tpu.memory_space<vmem>>, vector<8x256xf32>
    tpu.vector_store %arg10[%c0_30, %c0_31], %162 {strides = array<i32>} : memref<80x512xf32, #tpu.memory_space<vmem>>, vector<8x256xf32>,
    %c16_i32_32 = arith.constant 16 : i32
    %164 = tpu.dynamic_rotate %158 by %c16_i32_32 dim 1 : vector<8x256xf32>, i32 -> vector<8x256xf32>
    %165 = vector.extract_strided_slice %0 {offsets = [1, 0], sizes = [1, 256], strides = [1, 1]} : vector<9x256xf32> to vector<1x256xf32>
    %166 = vector.broadcast %165 : vector<1x256xf32> to vector<8x256xf32>
    %167 = arith.mulf %164, %166 : vector<8x256xf32>
    %c8 = arith.constant 8 : index
    %c0_33 = arith.constant 0 : index
    %168 = vector.load %arg10[%c8, %c0_33] : memref<80x512xf32, #tpu.memory_space<vmem>>, vector<8x256xf32>
    tpu.vector_store %arg10[%c8, %c0_33], %167 {strides = array<i32>} : memref<80x512xf32, #tpu.memory_space<vmem>>, vector<8x256xf32>,
    %c15_i32_34 = arith.constant 15 : i32
    %169 = tpu.dynamic_rotate %158 by %c15_i32_34 dim 1 : vector<8x256xf32>, i32 -> vector<8x256xf32>
    %170 = vector.extract_strided_slice %0 {offsets = [2, 0], sizes = [1, 256], strides = [1, 1]} : vector<9x256xf32> to vector<1x256xf32>
    %171 = vector.broadcast %170 : vector<1x256xf32> to vector<8x256xf32>
    %172 = arith.mulf %169, %171 : vector<8x256xf32>
    %c16 = arith.constant 16 : index
    %c0_35 = arith.constant 0 : index
    %173 = vector.load %arg10[%c16, %c0_35] : memref<80x512xf32, #tpu.memory_space<vmem>>, vector<8x256xf32>
    tpu.vector_store %arg10[%c16, %c0_35], %172 {strides = array<i32>} : memref<80x512xf32, #tpu.memory_space<vmem>>, vector<8x256xf32>,
    %c1_i32_36 = arith.constant 1 : i32
    %174 = tpu.dynamic_rotate %158 by %c1_i32_36 dim 1 : vector<8x256xf32>, i32 -> vector<8x256xf32>
    %175 = vector.extract_strided_slice %0 {offsets = [3, 0], sizes = [1, 256], strides = [1, 1]} : vector<9x256xf32> to vector<1x256xf32>
    %176 = vector.broadcast %175 : vector<1x256xf32> to vector<8x256xf32>
    %177 = arith.mulf %174, %176 : vector<8x256xf32>
    %c24 = arith.constant 24 : index
    %c0_37 = arith.constant 0 : index
    %178 = vector.load %arg10[%c24, %c0_37] : memref<80x512xf32, #tpu.memory_space<vmem>>, vector<8x256xf32>
    tpu.vector_store %arg10[%c24, %c0_37], %177 {strides = array<i32>} : memref<80x512xf32, #tpu.memory_space<vmem>>, vector<8x256xf32>,
    %c32 = arith.constant 32 : index
    %c0_38 = arith.constant 0 : index
    %179 = vector.load %arg10[%c32, %c0_38] : memref<80x512xf32, #tpu.memory_space<vmem>>, vector<8x256xf32>
    tpu.vector_store %arg10[%c32, %c0_38], %158 {strides = array<i32>} : memref<80x512xf32, #tpu.memory_space<vmem>>, vector<8x256xf32>,
    %c255_i32_39 = arith.constant 255 : i32
    %180 = tpu.dynamic_rotate %158 by %c255_i32_39 dim 1 : vector<8x256xf32>, i32 -> vector<8x256xf32>
    %181 = vector.extract_strided_slice %0 {offsets = [5, 0], sizes = [1, 256], strides = [1, 1]} : vector<9x256xf32> to vector<1x256xf32>
    %182 = vector.broadcast %181 : vector<1x256xf32> to vector<8x256xf32>
    %183 = arith.mulf %180, %182 : vector<8x256xf32>
    %c40 = arith.constant 40 : index
    %c0_40 = arith.constant 0 : index
    %184 = vector.load %arg10[%c40, %c0_40] : memref<80x512xf32, #tpu.memory_space<vmem>>, vector<8x256xf32>
    tpu.vector_store %arg10[%c40, %c0_40], %183 {strides = array<i32>} : memref<80x512xf32, #tpu.memory_space<vmem>>, vector<8x256xf32>,
    %c241_i32_41 = arith.constant 241 : i32
    %185 = tpu.dynamic_rotate %158 by %c241_i32_41 dim 1 : vector<8x256xf32>, i32 -> vector<8x256xf32>
    %186 = vector.extract_strided_slice %0 {offsets = [6, 0], sizes = [1, 256], strides = [1, 1]} : vector<9x256xf32> to vector<1x256xf32>
    %187 = vector.broadcast %186 : vector<1x256xf32> to vector<8x256xf32>
    %188 = arith.mulf %185, %187 : vector<8x256xf32>
    %c48 = arith.constant 48 : index
    %c0_42 = arith.constant 0 : index
    %189 = vector.load %arg10[%c48, %c0_42] : memref<80x512xf32, #tpu.memory_space<vmem>>, vector<8x256xf32>
    tpu.vector_store %arg10[%c48, %c0_42], %188 {strides = array<i32>} : memref<80x512xf32, #tpu.memory_space<vmem>>, vector<8x256xf32>,
    %c240_i32_43 = arith.constant 240 : i32
    %190 = tpu.dynamic_rotate %158 by %c240_i32_43 dim 1 : vector<8x256xf32>, i32 -> vector<8x256xf32>
    %191 = vector.extract_strided_slice %0 {offsets = [7, 0], sizes = [1, 256], strides = [1, 1]} : vector<9x256xf32> to vector<1x256xf32>
    %192 = vector.broadcast %191 : vector<1x256xf32> to vector<8x256xf32>
    %193 = arith.mulf %190, %192 : vector<8x256xf32>
    %c56 = arith.constant 56 : index
    %c0_44 = arith.constant 0 : index
    %194 = vector.load %arg10[%c56, %c0_44] : memref<80x512xf32, #tpu.memory_space<vmem>>, vector<8x256xf32>
    tpu.vector_store %arg10[%c56, %c0_44], %193 {strides = array<i32>} : memref<80x512xf32, #tpu.memory_space<vmem>>, vector<8x256xf32>,
    %c239_i32_45 = arith.constant 239 : i32
    %195 = tpu.dynamic_rotate %158 by %c239_i32_45 dim 1 : vector<8x256xf32>, i32 -> vector<8x256xf32>
    %196 = vector.extract_strided_slice %0 {offsets = [8, 0], sizes = [1, 256], strides = [1, 1]} : vector<9x256xf32> to vector<1x256xf32>
    %197 = vector.broadcast %196 : vector<1x256xf32> to vector<8x256xf32>
    %198 = arith.mulf %195, %197 : vector<8x256xf32>
    %c64 = arith.constant 64 : index
    %c0_46 = arith.constant 0 : index
    %199 = vector.load %arg10[%c64, %c0_46] : memref<80x512xf32, #tpu.memory_space<vmem>>, vector<8x256xf32>
    tpu.vector_store %arg10[%c64, %c0_46], %198 {strides = array<i32>} : memref<80x512xf32, #tpu.memory_space<vmem>>, vector<8x256xf32>,
    %c1 = arith.constant 1 : index
    %c0_47 = arith.constant 0 : index
    %c0_48 = arith.constant 0 : index
    %200 = vector.load %arg1[%c1, %c0_47, %c0_48] : memref<2x4x256xf32, #tpu.memory_space<vmem>>, vector<1x4x256xf32>
    %201 = vector.shape_cast %200 : vector<1x4x256xf32> to vector<4x256xf32>
    %c1_49 = arith.constant 1 : index
    %c0_50 = arith.constant 0 : index
    %c0_51 = arith.constant 0 : index
    %202 = vector.load %arg2[%c1_49, %c0_50, %c0_51] : memref<2x4x256xf32, #tpu.memory_space<vmem>>, vector<1x4x256xf32>
    %203 = vector.shape_cast %202 : vector<1x4x256xf32> to vector<4x256xf32>
    %c1_52 = arith.constant 1 : index
    %c0_53 = arith.constant 0 : index
    %c0_54 = arith.constant 0 : index
    %204 = vector.load %arg3[%c1_52, %c0_53, %c0_54] : memref<2x4x256xf32, #tpu.memory_space<vmem>>, vector<1x4x256xf32>
    %205 = vector.shape_cast %204 : vector<1x4x256xf32> to vector<4x256xf32>
    %c1_55 = arith.constant 1 : index
    %c0_56 = arith.constant 0 : index
    %c0_57 = arith.constant 0 : index
    %206 = vector.load %arg4[%c1_55, %c0_56, %c0_57] : memref<2x4x256xf32, #tpu.memory_space<vmem>>, vector<1x4x256xf32>
    %207 = vector.shape_cast %206 : vector<1x4x256xf32> to vector<4x256xf32>
    %208 = arith.mulf %201, %205 : vector<4x256xf32>
    %209 = arith.mulf %203, %207 : vector<4x256xf32>
    %210 = arith.addf %208, %209 : vector<4x256xf32>
    %cst_58 = arith.constant dense<0.000000e+00> : vector<256xf32>
    %211 = vector.multi_reduction <add>, %210, %cst_58 [0] : vector<4x256xf32> to vector<256xf32>
    %212 = vector.shape_cast %211 : vector<256xf32> to vector<1x256xf32>
    %213 = arith.mulf %203, %205 : vector<4x256xf32>
    %214 = arith.mulf %201, %207 : vector<4x256xf32>
    %215 = arith.subf %213, %214 : vector<4x256xf32>
    %cst_59 = arith.constant dense<0.000000e+00> : vector<256xf32>
    %216 = vector.multi_reduction <add>, %215, %cst_59 [0] : vector<4x256xf32> to vector<256xf32>
    %217 = vector.shape_cast %216 : vector<256xf32> to vector<1x256xf32>
    %218 = vector.extract_strided_slice %0 {offsets = [0, 0], sizes = [1, 256], strides = [1, 1]} : vector<9x256xf32> to vector<1x256xf32>
    %c17_i32_60 = arith.constant 17 : i32
    %219 = tpu.dynamic_rotate %212 by %c17_i32_60 dim 1 : vector<1x256xf32>, i32 -> vector<1x256xf32>
    %220 = arith.mulf %219, %218 : vector<1x256xf32>
    %c17_i32_61 = arith.constant 17 : i32
    %221 = tpu.dynamic_rotate %217 by %c17_i32_61 dim 1 : vector<1x256xf32>, i32 -> vector<1x256xf32>
    %222 = arith.mulf %221, %218 : vector<1x256xf32>
    %223 = vector.extract_strided_slice %1 {offsets = [0, 0], sizes = [8, 1], strides = [1, 1]} : vector<8x19xf32> to vector<8x1xf32>
    %224 = vector.broadcast %223 : vector<8x1xf32> to vector<8x256xf32>
    %225 = vector.broadcast %220 : vector<1x256xf32> to vector<8x256xf32>
    %226 = arith.mulf %224, %225 : vector<8x256xf32>
    %227 = arith.addf %4, %226 : vector<8x256xf32>
    %228 = vector.extract_strided_slice %1 {offsets = [0, 1], sizes = [8, 1], strides = [1, 1]} : vector<8x19xf32> to vector<8x1xf32>
    %229 = vector.broadcast %228 : vector<8x1xf32> to vector<8x256xf32>
    %230 = vector.broadcast %222 : vector<1x256xf32> to vector<8x256xf32>
    %231 = arith.mulf %229, %230 : vector<8x256xf32>
    %232 = arith.addf %227, %231 : vector<8x256xf32>
    %233 = vector.extract_strided_slice %0 {offsets = [1, 0], sizes = [1, 256], strides = [1, 1]} : vector<9x256xf32> to vector<1x256xf32>
    %c16_i32_62 = arith.constant 16 : i32
    %234 = tpu.dynamic_rotate %212 by %c16_i32_62 dim 1 : vector<1x256xf32>, i32 -> vector<1x256xf32>
    %235 = arith.mulf %234, %233 : vector<1x256xf32>
    %c16_i32_63 = arith.constant 16 : i32
    %236 = tpu.dynamic_rotate %217 by %c16_i32_63 dim 1 : vector<1x256xf32>, i32 -> vector<1x256xf32>
    %237 = arith.mulf %236, %233 : vector<1x256xf32>
    %238 = vector.extract_strided_slice %1 {offsets = [0, 2], sizes = [8, 1], strides = [1, 1]} : vector<8x19xf32> to vector<8x1xf32>
    %239 = vector.broadcast %238 : vector<8x1xf32> to vector<8x256xf32>
    %240 = vector.broadcast %235 : vector<1x256xf32> to vector<8x256xf32>
    %241 = arith.mulf %239, %240 : vector<8x256xf32>
    %242 = arith.addf %232, %241 : vector<8x256xf32>
    %243 = vector.extract_strided_slice %1 {offsets = [0, 3], sizes = [8, 1], strides = [1, 1]} : vector<8x19xf32> to vector<8x1xf32>
    %244 = vector.broadcast %243 : vector<8x1xf32> to vector<8x256xf32>
    %245 = vector.broadcast %237 : vector<1x256xf32> to vector<8x256xf32>
    %246 = arith.mulf %244, %245 : vector<8x256xf32>
    %247 = arith.addf %242, %246 : vector<8x256xf32>
    %248 = vector.extract_strided_slice %0 {offsets = [2, 0], sizes = [1, 256], strides = [1, 1]} : vector<9x256xf32> to vector<1x256xf32>
    %c15_i32_64 = arith.constant 15 : i32
    %249 = tpu.dynamic_rotate %212 by %c15_i32_64 dim 1 : vector<1x256xf32>, i32 -> vector<1x256xf32>
    %250 = arith.mulf %249, %248 : vector<1x256xf32>
    %c15_i32_65 = arith.constant 15 : i32
    %251 = tpu.dynamic_rotate %217 by %c15_i32_65 dim 1 : vector<1x256xf32>, i32 -> vector<1x256xf32>
    %252 = arith.mulf %251, %248 : vector<1x256xf32>
    %253 = vector.extract_strided_slice %1 {offsets = [0, 4], sizes = [8, 1], strides = [1, 1]} : vector<8x19xf32> to vector<8x1xf32>
    %254 = vector.broadcast %253 : vector<8x1xf32> to vector<8x256xf32>
    %255 = vector.broadcast %250 : vector<1x256xf32> to vector<8x256xf32>
    %256 = arith.mulf %254, %255 : vector<8x256xf32>
    %257 = arith.addf %247, %256 : vector<8x256xf32>
    %258 = vector.extract_strided_slice %1 {offsets = [0, 5], sizes = [8, 1], strides = [1, 1]} : vector<8x19xf32> to vector<8x1xf32>
    %259 = vector.broadcast %258 : vector<8x1xf32> to vector<8x256xf32>
    %260 = vector.broadcast %252 : vector<1x256xf32> to vector<8x256xf32>
    %261 = arith.mulf %259, %260 : vector<8x256xf32>
    %262 = arith.addf %257, %261 : vector<8x256xf32>
    %263 = vector.extract_strided_slice %0 {offsets = [3, 0], sizes = [1, 256], strides = [1, 1]} : vector<9x256xf32> to vector<1x256xf32>
    %c1_i32_66 = arith.constant 1 : i32
    %264 = tpu.dynamic_rotate %212 by %c1_i32_66 dim 1 : vector<1x256xf32>, i32 -> vector<1x256xf32>
    %265 = arith.mulf %264, %263 : vector<1x256xf32>
    %c1_i32_67 = arith.constant 1 : i32
    %266 = tpu.dynamic_rotate %217 by %c1_i32_67 dim 1 : vector<1x256xf32>, i32 -> vector<1x256xf32>
    %267 = arith.mulf %266, %263 : vector<1x256xf32>
    %268 = vector.extract_strided_slice %1 {offsets = [0, 6], sizes = [8, 1], strides = [1, 1]} : vector<8x19xf32> to vector<8x1xf32>
    %269 = vector.broadcast %268 : vector<8x1xf32> to vector<8x256xf32>
    %270 = vector.broadcast %265 : vector<1x256xf32> to vector<8x256xf32>
    %271 = arith.mulf %269, %270 : vector<8x256xf32>
    %272 = arith.addf %262, %271 : vector<8x256xf32>
    %273 = vector.extract_strided_slice %1 {offsets = [0, 7], sizes = [8, 1], strides = [1, 1]} : vector<8x19xf32> to vector<8x1xf32>
    %274 = vector.broadcast %273 : vector<8x1xf32> to vector<8x256xf32>
    %275 = vector.broadcast %267 : vector<1x256xf32> to vector<8x256xf32>
    %276 = arith.mulf %274, %275 : vector<8x256xf32>
    %277 = arith.addf %272, %276 : vector<8x256xf32>
    %278 = vector.extract_strided_slice %1 {offsets = [0, 8], sizes = [8, 1], strides = [1, 1]} : vector<8x19xf32> to vector<8x1xf32>
    %279 = vector.broadcast %278 : vector<8x1xf32> to vector<8x256xf32>
    %280 = vector.broadcast %212 : vector<1x256xf32> to vector<8x256xf32>
    %281 = arith.mulf %279, %280 : vector<8x256xf32>
    %282 = arith.addf %277, %281 : vector<8x256xf32>
    %283 = vector.extract_strided_slice %1 {offsets = [0, 9], sizes = [8, 1], strides = [1, 1]} : vector<8x19xf32> to vector<8x1xf32>
    %284 = vector.broadcast %283 : vector<8x1xf32> to vector<8x256xf32>
    %285 = vector.broadcast %217 : vector<1x256xf32> to vector<8x256xf32>
    %286 = arith.mulf %284, %285 : vector<8x256xf32>
    %287 = arith.addf %282, %286 : vector<8x256xf32>
    %288 = vector.extract_strided_slice %0 {offsets = [5, 0], sizes = [1, 256], strides = [1, 1]} : vector<9x256xf32> to vector<1x256xf32>
    %c255_i32_68 = arith.constant 255 : i32
    %289 = tpu.dynamic_rotate %212 by %c255_i32_68 dim 1 : vector<1x256xf32>, i32 -> vector<1x256xf32>
    %290 = arith.mulf %289, %288 : vector<1x256xf32>
    %c255_i32_69 = arith.constant 255 : i32
    %291 = tpu.dynamic_rotate %217 by %c255_i32_69 dim 1 : vector<1x256xf32>, i32 -> vector<1x256xf32>
    %292 = arith.mulf %291, %288 : vector<1x256xf32>
    %293 = vector.extract_strided_slice %1 {offsets = [0, 10], sizes = [8, 1], strides = [1, 1]} : vector<8x19xf32> to vector<8x1xf32>
    %294 = vector.broadcast %293 : vector<8x1xf32> to vector<8x256xf32>
    %295 = vector.broadcast %290 : vector<1x256xf32> to vector<8x256xf32>
    %296 = arith.mulf %294, %295 : vector<8x256xf32>
    %297 = arith.addf %287, %296 : vector<8x256xf32>
    %298 = vector.extract_strided_slice %1 {offsets = [0, 11], sizes = [8, 1], strides = [1, 1]} : vector<8x19xf32> to vector<8x1xf32>
    %299 = vector.broadcast %298 : vector<8x1xf32> to vector<8x256xf32>
    %300 = vector.broadcast %292 : vector<1x256xf32> to vector<8x256xf32>
    %301 = arith.mulf %299, %300 : vector<8x256xf32>
    %302 = arith.addf %297, %301 : vector<8x256xf32>
    %303 = vector.extract_strided_slice %0 {offsets = [6, 0], sizes = [1, 256], strides = [1, 1]} : vector<9x256xf32> to vector<1x256xf32>
    %c241_i32_70 = arith.constant 241 : i32
    %304 = tpu.dynamic_rotate %212 by %c241_i32_70 dim 1 : vector<1x256xf32>, i32 -> vector<1x256xf32>
    %305 = arith.mulf %304, %303 : vector<1x256xf32>
    %c241_i32_71 = arith.constant 241 : i32
    %306 = tpu.dynamic_rotate %217 by %c241_i32_71 dim 1 : vector<1x256xf32>, i32 -> vector<1x256xf32>
    %307 = arith.mulf %306, %303 : vector<1x256xf32>
    %308 = vector.extract_strided_slice %1 {offsets = [0, 12], sizes = [8, 1], strides = [1, 1]} : vector<8x19xf32> to vector<8x1xf32>
    %309 = vector.broadcast %308 : vector<8x1xf32> to vector<8x256xf32>
    %310 = vector.broadcast %305 : vector<1x256xf32> to vector<8x256xf32>
    %311 = arith.mulf %309, %310 : vector<8x256xf32>
    %312 = arith.addf %302, %311 : vector<8x256xf32>
    %313 = vector.extract_strided_slice %1 {offsets = [0, 13], sizes = [8, 1], strides = [1, 1]} : vector<8x19xf32> to vector<8x1xf32>
    %314 = vector.broadcast %313 : vector<8x1xf32> to vector<8x256xf32>
    %315 = vector.broadcast %307 : vector<1x256xf32> to vector<8x256xf32>
    %316 = arith.mulf %314, %315 : vector<8x256xf32>
    %317 = arith.addf %312, %316 : vector<8x256xf32>
    %318 = vector.extract_strided_slice %0 {offsets = [7, 0], sizes = [1, 256], strides = [1, 1]} : vector<9x256xf32> to vector<1x256xf32>
    %c240_i32_72 = arith.constant 240 : i32
    %319 = tpu.dynamic_rotate %212 by %c240_i32_72 dim 1 : vector<1x256xf32>, i32 -> vector<1x256xf32>
    %320 = arith.mulf %319, %318 : vector<1x256xf32>
    %c240_i32_73 = arith.constant 240 : i32
    %321 = tpu.dynamic_rotate %217 by %c240_i32_73 dim 1 : vector<1x256xf32>, i32 -> vector<1x256xf32>
    %322 = arith.mulf %321, %318 : vector<1x256xf32>
    %323 = vector.extract_strided_slice %1 {offsets = [0, 14], sizes = [8, 1], strides = [1, 1]} : vector<8x19xf32> to vector<8x1xf32>
    %324 = vector.broadcast %323 : vector<8x1xf32> to vector<8x256xf32>
    %325 = vector.broadcast %320 : vector<1x256xf32> to vector<8x256xf32>
    %326 = arith.mulf %324, %325 : vector<8x256xf32>
    %327 = arith.addf %317, %326 : vector<8x256xf32>
    %328 = vector.extract_strided_slice %1 {offsets = [0, 15], sizes = [8, 1], strides = [1, 1]} : vector<8x19xf32> to vector<8x1xf32>
    %329 = vector.broadcast %328 : vector<8x1xf32> to vector<8x256xf32>
    %330 = vector.broadcast %322 : vector<1x256xf32> to vector<8x256xf32>
    %331 = arith.mulf %329, %330 : vector<8x256xf32>
    %332 = arith.addf %327, %331 : vector<8x256xf32>
    %333 = vector.extract_strided_slice %0 {offsets = [8, 0], sizes = [1, 256], strides = [1, 1]} : vector<9x256xf32> to vector<1x256xf32>
    %c239_i32_74 = arith.constant 239 : i32
    %334 = tpu.dynamic_rotate %212 by %c239_i32_74 dim 1 : vector<1x256xf32>, i32 -> vector<1x256xf32>
    %335 = arith.mulf %334, %333 : vector<1x256xf32>
    %c239_i32_75 = arith.constant 239 : i32
    %336 = tpu.dynamic_rotate %217 by %c239_i32_75 dim 1 : vector<1x256xf32>, i32 -> vector<1x256xf32>
    %337 = arith.mulf %336, %333 : vector<1x256xf32>
    %338 = vector.extract_strided_slice %1 {offsets = [0, 16], sizes = [8, 1], strides = [1, 1]} : vector<8x19xf32> to vector<8x1xf32>
    %339 = vector.broadcast %338 : vector<8x1xf32> to vector<8x256xf32>
    %340 = vector.broadcast %335 : vector<1x256xf32> to vector<8x256xf32>
    %341 = arith.mulf %339, %340 : vector<8x256xf32>
    %342 = arith.addf %332, %341 : vector<8x256xf32>
    %343 = vector.extract_strided_slice %1 {offsets = [0, 17], sizes = [8, 1], strides = [1, 1]} : vector<8x19xf32> to vector<8x1xf32>
    %344 = vector.broadcast %343 : vector<8x1xf32> to vector<8x256xf32>
    %345 = vector.broadcast %337 : vector<1x256xf32> to vector<8x256xf32>
    %346 = arith.mulf %344, %345 : vector<8x256xf32>
    %347 = arith.addf %342, %346 : vector<8x256xf32>
    %cst_76 = arith.constant 0.000000e+00 : f32
    %348 = vector.broadcast %cst_76 : f32 to vector<8x256xf32>
    %349 = arith.maximumf %347, %348 : vector<8x256xf32>
    %c17_i32_77 = arith.constant 17 : i32
    %350 = tpu.dynamic_rotate %349 by %c17_i32_77 dim 1 : vector<8x256xf32>, i32 -> vector<8x256xf32>
    %351 = vector.extract_strided_slice %0 {offsets = [0, 0], sizes = [1, 256], strides = [1, 1]} : vector<9x256xf32> to vector<1x256xf32>
    %352 = vector.broadcast %351 : vector<1x256xf32> to vector<8x256xf32>
    %353 = arith.mulf %350, %352 : vector<8x256xf32>
    %c0_78 = arith.constant 0 : index
    %c256 = arith.constant 256 : index
    %354 = vector.load %arg10[%c0_78, %c256] : memref<80x512xf32, #tpu.memory_space<vmem>>, vector<8x256xf32>
    tpu.vector_store %arg10[%c0_78, %c256], %353 {strides = array<i32>} : memref<80x512xf32, #tpu.memory_space<vmem>>, vector<8x256xf32>,
    %c16_i32_79 = arith.constant 16 : i32
    %355 = tpu.dynamic_rotate %349 by %c16_i32_79 dim 1 : vector<8x256xf32>, i32 -> vector<8x256xf32>
    %356 = vector.extract_strided_slice %0 {offsets = [1, 0], sizes = [1, 256], strides = [1, 1]} : vector<9x256xf32> to vector<1x256xf32>
    %357 = vector.broadcast %356 : vector<1x256xf32> to vector<8x256xf32>
    %358 = arith.mulf %355, %357 : vector<8x256xf32>
    %c8_80 = arith.constant 8 : index
    %c256_81 = arith.constant 256 : index
    %359 = vector.load %arg10[%c8_80, %c256_81] : memref<80x512xf32, #tpu.memory_space<vmem>>, vector<8x256xf32>
    tpu.vector_store %arg10[%c8_80, %c256_81], %358 {strides = array<i32>} : memref<80x512xf32, #tpu.memory_space<vmem>>, vector<8x256xf32>,
    %c15_i32_82 = arith.constant 15 : i32
    %360 = tpu.dynamic_rotate %349 by %c15_i32_82 dim 1 : vector<8x256xf32>, i32 -> vector<8x256xf32>
    %361 = vector.extract_strided_slice %0 {offsets = [2, 0], sizes = [1, 256], strides = [1, 1]} : vector<9x256xf32> to vector<1x256xf32>
    %362 = vector.broadcast %361 : vector<1x256xf32> to vector<8x256xf32>
    %363 = arith.mulf %360, %362 : vector<8x256xf32>
    %c16_83 = arith.constant 16 : index
    %c256_84 = arith.constant 256 : index
    %364 = vector.load %arg10[%c16_83, %c256_84] : memref<80x512xf32, #tpu.memory_space<vmem>>, vector<8x256xf32>
    tpu.vector_store %arg10[%c16_83, %c256_84], %363 {strides = array<i32>} : memref<80x512xf32, #tpu.memory_space<vmem>>, vector<8x256xf32>,
    %c1_i32_85 = arith.constant 1 : i32
    %365 = tpu.dynamic_rotate %349 by %c1_i32_85 dim 1 : vector<8x256xf32>, i32 -> vector<8x256xf32>
    %366 = vector.extract_strided_slice %0 {offsets = [3, 0], sizes = [1, 256], strides = [1, 1]} : vector<9x256xf32> to vector<1x256xf32>
    %367 = vector.broadcast %366 : vector<1x256xf32> to vector<8x256xf32>
    %368 = arith.mulf %365, %367 : vector<8x256xf32>
    %c24_86 = arith.constant 24 : index
    %c256_87 = arith.constant 256 : index
    %369 = vector.load %arg10[%c24_86, %c256_87] : memref<80x512xf32, #tpu.memory_space<vmem>>, vector<8x256xf32>
    tpu.vector_store %arg10[%c24_86, %c256_87], %368 {strides = array<i32>} : memref<80x512xf32, #tpu.memory_space<vmem>>, vector<8x256xf32>,
    %c32_88 = arith.constant 32 : index
    %c256_89 = arith.constant 256 : index
    %370 = vector.load %arg10[%c32_88, %c256_89] : memref<80x512xf32, #tpu.memory_space<vmem>>, vector<8x256xf32>
    tpu.vector_store %arg10[%c32_88, %c256_89], %349 {strides = array<i32>} : memref<80x512xf32, #tpu.memory_space<vmem>>, vector<8x256xf32>,
    %c255_i32_90 = arith.constant 255 : i32
    %371 = tpu.dynamic_rotate %349 by %c255_i32_90 dim 1 : vector<8x256xf32>, i32 -> vector<8x256xf32>
    %372 = vector.extract_strided_slice %0 {offsets = [5, 0], sizes = [1, 256], strides = [1, 1]} : vector<9x256xf32> to vector<1x256xf32>
    %373 = vector.broadcast %372 : vector<1x256xf32> to vector<8x256xf32>
    %374 = arith.mulf %371, %373 : vector<8x256xf32>
    %c40_91 = arith.constant 40 : index
    %c256_92 = arith.constant 256 : index
    %375 = vector.load %arg10[%c40_91, %c256_92] : memref<80x512xf32, #tpu.memory_space<vmem>>, vector<8x256xf32>
    tpu.vector_store %arg10[%c40_91, %c256_92], %374 {strides = array<i32>} : memref<80x512xf32, #tpu.memory_space<vmem>>, vector<8x256xf32>,
    %c241_i32_93 = arith.constant 241 : i32
    %376 = tpu.dynamic_rotate %349 by %c241_i32_93 dim 1 : vector<8x256xf32>, i32 -> vector<8x256xf32>
    %377 = vector.extract_strided_slice %0 {offsets = [6, 0], sizes = [1, 256], strides = [1, 1]} : vector<9x256xf32> to vector<1x256xf32>
    %378 = vector.broadcast %377 : vector<1x256xf32> to vector<8x256xf32>
    %379 = arith.mulf %376, %378 : vector<8x256xf32>
    %c48_94 = arith.constant 48 : index
    %c256_95 = arith.constant 256 : index
    %380 = vector.load %arg10[%c48_94, %c256_95] : memref<80x512xf32, #tpu.memory_space<vmem>>, vector<8x256xf32>
    tpu.vector_store %arg10[%c48_94, %c256_95], %379 {strides = array<i32>} : memref<80x512xf32, #tpu.memory_space<vmem>>, vector<8x256xf32>,
    %c240_i32_96 = arith.constant 240 : i32
    %381 = tpu.dynamic_rotate %349 by %c240_i32_96 dim 1 : vector<8x256xf32>, i32 -> vector<8x256xf32>
    %382 = vector.extract_strided_slice %0 {offsets = [7, 0], sizes = [1, 256], strides = [1, 1]} : vector<9x256xf32> to vector<1x256xf32>
    %383 = vector.broadcast %382 : vector<1x256xf32> to vector<8x256xf32>
    %384 = arith.mulf %381, %383 : vector<8x256xf32>
    %c56_97 = arith.constant 56 : index
    %c256_98 = arith.constant 256 : index
    %385 = vector.load %arg10[%c56_97, %c256_98] : memref<80x512xf32, #tpu.memory_space<vmem>>, vector<8x256xf32>
    tpu.vector_store %arg10[%c56_97, %c256_98], %384 {strides = array<i32>} : memref<80x512xf32, #tpu.memory_space<vmem>>, vector<8x256xf32>,
    %c239_i32_99 = arith.constant 239 : i32
    %386 = tpu.dynamic_rotate %349 by %c239_i32_99 dim 1 : vector<8x256xf32>, i32 -> vector<8x256xf32>
    %387 = vector.extract_strided_slice %0 {offsets = [8, 0], sizes = [1, 256], strides = [1, 1]} : vector<9x256xf32> to vector<1x256xf32>
    %388 = vector.broadcast %387 : vector<1x256xf32> to vector<8x256xf32>
    %389 = arith.mulf %386, %388 : vector<8x256xf32>
    %c64_100 = arith.constant 64 : index
    %c256_101 = arith.constant 256 : index
    %390 = vector.load %arg10[%c64_100, %c256_101] : memref<80x512xf32, #tpu.memory_space<vmem>>, vector<8x256xf32>
    tpu.vector_store %arg10[%c64_100, %c256_101], %389 {strides = array<i32>} : memref<80x512xf32, #tpu.memory_space<vmem>>, vector<8x256xf32>,
    %c0_102 = arith.constant 0 : index
    %c0_103 = arith.constant 0 : index
    %391 = vector.load %arg7[%c0_102, %c0_103] : memref<8x80xf32, #tpu.memory_space<vmem>>, vector<8x80xf32>
    %c0_104 = arith.constant 0 : index
    %c0_105 = arith.constant 0 : index
    %392 = vector.load %arg10[%c0_104, %c0_105] : memref<80x512xf32, #tpu.memory_space<vmem>>, vector<80x512xf32>
    %cst_106 = arith.constant dense<0.000000e+00> : vector<8x512xf32>
    %393 = tpu.matmul %391, %392, %cst_106 {dimension_numbers = #tpu.dot_dimension_numbers<[1], [0], [0], [1], [0, 0, 1, 1], [], []>} : vector<8x80xf32>, vector<80x512xf32>, vector<8x512xf32> -> vector<8x512xf32>
    %394 = vector.extract_strided_slice %393 {offsets = [0, 0], sizes = [1, 256], strides = [1, 1]} : vector<8x512xf32> to vector<1x256xf32>
    %395 = vector.extract_strided_slice %393 {offsets = [1, 0], sizes = [1, 256], strides = [1, 1]} : vector<8x512xf32> to vector<1x256xf32>
    %c0_107 = arith.constant 0 : index
    %c0_108 = arith.constant 0 : index
    %c0_109 = arith.constant 0 : index
    %396 = vector.load %arg3[%c0_107, %c0_108, %c0_109] : memref<2x4x256xf32, #tpu.memory_space<vmem>>, vector<1x4x256xf32>
    %397 = vector.shape_cast %396 : vector<1x4x256xf32> to vector<4x256xf32>
    %c0_110 = arith.constant 0 : index
    %c0_111 = arith.constant 0 : index
    %c0_112 = arith.constant 0 : index
    %398 = vector.load %arg4[%c0_110, %c0_111, %c0_112] : memref<2x4x256xf32, #tpu.memory_space<vmem>>, vector<1x4x256xf32>
    %399 = vector.shape_cast %398 : vector<1x4x256xf32> to vector<4x256xf32>
    %400 = vector.broadcast %394 : vector<1x256xf32> to vector<4x256xf32>
    %401 = arith.mulf %400, %397 : vector<4x256xf32>
    %402 = vector.broadcast %395 : vector<1x256xf32> to vector<4x256xf32>
    %403 = arith.mulf %402, %399 : vector<4x256xf32>
    %404 = arith.subf %401, %403 : vector<4x256xf32>
    %c0_113 = arith.constant 0 : index
    %c0_114 = arith.constant 0 : index
    %c0_115 = arith.constant 0 : index
    %405 = vector.load %arg8[%c0_113, %c0_114, %c0_115] : memref<2x4x256xf32, #tpu.memory_space<vmem>>, vector<1x4x256xf32>
    %406 = vector.shape_cast %405 : vector<1x4x256xf32> to vector<4x256xf32>
    %407 = vector.shape_cast %404 : vector<4x256xf32> to vector<1x4x256xf32>
    tpu.vector_store %arg8[%c0_113, %c0_114, %c0_115], %407 {strides = array<i32>} : memref<2x4x256xf32, #tpu.memory_space<vmem>>, vector<1x4x256xf32>,
    %408 = vector.broadcast %394 : vector<1x256xf32> to vector<4x256xf32>
    %409 = arith.mulf %408, %399 : vector<4x256xf32>
    %410 = vector.broadcast %395 : vector<1x256xf32> to vector<4x256xf32>
    %411 = arith.mulf %410, %397 : vector<4x256xf32>
    %412 = arith.addf %409, %411 : vector<4x256xf32>
    %c0_116 = arith.constant 0 : index
    %c0_117 = arith.constant 0 : index
    %c0_118 = arith.constant 0 : index
    %413 = vector.load %arg9[%c0_116, %c0_117, %c0_118] : memref<2x4x256xf32, #tpu.memory_space<vmem>>, vector<1x4x256xf32>
    %414 = vector.shape_cast %413 : vector<1x4x256xf32> to vector<4x256xf32>
    %415 = vector.shape_cast %412 : vector<4x256xf32> to vector<1x4x256xf32>
    tpu.vector_store %arg9[%c0_116, %c0_117, %c0_118], %415 {strides = array<i32>} : memref<2x4x256xf32, #tpu.memory_space<vmem>>, vector<1x4x256xf32>,
    %416 = vector.extract_strided_slice %393 {offsets = [0, 256], sizes = [1, 256], strides = [1, 1]} : vector<8x512xf32> to vector<1x256xf32>
    %417 = vector.extract_strided_slice %393 {offsets = [1, 256], sizes = [1, 256], strides = [1, 1]} : vector<8x512xf32> to vector<1x256xf32>
    %c1_119 = arith.constant 1 : index
    %c0_120 = arith.constant 0 : index
    %c0_121 = arith.constant 0 : index
    %418 = vector.load %arg3[%c1_119, %c0_120, %c0_121] : memref<2x4x256xf32, #tpu.memory_space<vmem>>, vector<1x4x256xf32>
    %419 = vector.shape_cast %418 : vector<1x4x256xf32> to vector<4x256xf32>
    %c1_122 = arith.constant 1 : index
    %c0_123 = arith.constant 0 : index
    %c0_124 = arith.constant 0 : index
    %420 = vector.load %arg4[%c1_122, %c0_123, %c0_124] : memref<2x4x256xf32, #tpu.memory_space<vmem>>, vector<1x4x256xf32>
    %421 = vector.shape_cast %420 : vector<1x4x256xf32> to vector<4x256xf32>
    %422 = vector.broadcast %416 : vector<1x256xf32> to vector<4x256xf32>
    %423 = arith.mulf %422, %419 : vector<4x256xf32>
    %424 = vector.broadcast %417 : vector<1x256xf32> to vector<4x256xf32>
    %425 = arith.mulf %424, %421 : vector<4x256xf32>
    %426 = arith.subf %423, %425 : vector<4x256xf32>
    %c1_125 = arith.constant 1 : index
    %c0_126 = arith.constant 0 : index
    %c0_127 = arith.constant 0 : index
    %427 = vector.load %arg8[%c1_125, %c0_126, %c0_127] : memref<2x4x256xf32, #tpu.memory_space<vmem>>, vector<1x4x256xf32>
    %428 = vector.shape_cast %427 : vector<1x4x256xf32> to vector<4x256xf32>
    %429 = vector.shape_cast %426 : vector<4x256xf32> to vector<1x4x256xf32>
    tpu.vector_store %arg8[%c1_125, %c0_126, %c0_127], %429 {strides = array<i32>} : memref<2x4x256xf32, #tpu.memory_space<vmem>>, vector<1x4x256xf32>,
    %430 = vector.broadcast %416 : vector<1x256xf32> to vector<4x256xf32>
    %431 = arith.mulf %430, %421 : vector<4x256xf32>
    %432 = vector.broadcast %417 : vector<1x256xf32> to vector<4x256xf32>
    %433 = arith.mulf %432, %419 : vector<4x256xf32>
    %434 = arith.addf %431, %433 : vector<4x256xf32>
    %c1_128 = arith.constant 1 : index
    %c0_129 = arith.constant 0 : index
    %c0_130 = arith.constant 0 : index
    %435 = vector.load %arg9[%c1_128, %c0_129, %c0_130] : memref<2x4x256xf32, #tpu.memory_space<vmem>>, vector<1x4x256xf32>
    %436 = vector.shape_cast %435 : vector<1x4x256xf32> to vector<4x256xf32>
    %437 = vector.shape_cast %434 : vector<4x256xf32> to vector<1x4x256xf32>
    tpu.vector_store %arg9[%c1_128, %c0_129, %c0_130], %437 {strides = array<i32>} : memref<2x4x256xf32, #tpu.memory_space<vmem>>, vector<1x4x256xf32>,
    return
  }
  func.func @transform_0(%arg0: i32) -> (i32, i32, i32) {
    %c0_i32 = arith.constant 0 : i32
    %c0_i32_0 = arith.constant 0 : i32
    %c0_i32_1 = arith.constant 0 : i32
    return %arg0, %c0_i32, %c0_i32_0 : i32, i32, i32
  }
  func.func @transform_1(%arg0: i32) -> (i32, i32, i32) {
    %c0_i32 = arith.constant 0 : i32
    %c0_i32_0 = arith.constant 0 : i32
    %c0_i32_1 = arith.constant 0 : i32
    return %arg0, %c0_i32, %c0_i32_0 : i32, i32, i32
  }
  func.func @transform_2(%arg0: i32) -> (i32, i32, i32) {
    %c0_i32 = arith.constant 0 : i32
    %c0_i32_0 = arith.constant 0 : i32
    %c0_i32_1 = arith.constant 0 : i32
    return %arg0, %c0_i32, %c0_i32_0 : i32, i32, i32
  }
  func.func @transform_3(%arg0: i32) -> (i32, i32, i32) {
    %c0_i32 = arith.constant 0 : i32
    %c0_i32_0 = arith.constant 0 : i32
    %c0_i32_1 = arith.constant 0 : i32
    return %arg0, %c0_i32, %c0_i32_0 : i32, i32, i32
  }
  func.func @transform_4(%arg0: i32) -> (i32, i32) {
    %c0_i32 = arith.constant 0 : i32
    %c0_i32_0 = arith.constant 0 : i32
    %c0_i32_1 = arith.constant 0 : i32
    return %c0_i32, %c0_i32_0 : i32, i32
  }
  func.func @transform_5(%arg0: i32) -> (i32, i32) {
    %c0_i32 = arith.constant 0 : i32
    %c0_i32_0 = arith.constant 0 : i32
    %c0_i32_1 = arith.constant 0 : i32
    return %c0_i32, %c0_i32_0 : i32, i32
  }
  func.func @transform_6(%arg0: i32) -> (i32, i32) {
    %c0_i32 = arith.constant 0 : i32
    %c0_i32_0 = arith.constant 0 : i32
    %c0_i32_1 = arith.constant 0 : i32
    return %c0_i32, %c0_i32_0 : i32, i32
  }
  func.func @transform_7(%arg0: i32) -> (i32, i32, i32) {
    %c0_i32 = arith.constant 0 : i32
    %c0_i32_0 = arith.constant 0 : i32
    %c0_i32_1 = arith.constant 0 : i32
    return %arg0, %c0_i32, %c0_i32_0 : i32, i32, i32
  }
  func.func @transform_8(%arg0: i32) -> (i32, i32, i32) {
    %c0_i32 = arith.constant 0 : i32
    %c0_i32_0 = arith.constant 0 : i32
    %c0_i32_1 = arith.constant 0 : i32
    return %arg0, %c0_i32, %c0_i32_0 : i32, i32, i32
  }
}

module attributes {stable_mosaic.version = 11 : i64} {
  func.func @kernel(%arg0: i32, %arg1: memref<2x1x256xf32, #tpu.memory_space<vmem>>, %arg2: memref<2x4x256xf32, #tpu.memory_space<vmem>>, %arg3: memref<2x4x256xf32, #tpu.memory_space<vmem>>, %arg4: memref<2x4x256xf32, #tpu.memory_space<vmem>>, %arg5: memref<2x4x256xf32, #tpu.memory_space<vmem>>, %arg6: memref<2x4x256xf32, #tpu.memory_space<vmem>>, %arg7: memref<2x4x256xf32, #tpu.memory_space<vmem>>, %arg8: memref<2x4x256xf32, #tpu.memory_space<vmem>>, %arg9: memref<2x4x256xf32, #tpu.memory_space<vmem>>) attributes {dimension_semantics = [#tpu.dimension_semantics<parallel>], iteration_bounds = array<i64: 2>, scalar_prefetch = 0 : i64, scratch_operands = 0 : i64, tpu.core_type = #tpu.core_type<tc>, window_params = [{transform_indices = @transform_0, window_bounds = array<i64: 2, 1, 256>}, {transform_indices = @transform_1, window_bounds = array<i64: 2, 4, 256>}, {transform_indices = @transform_2, window_bounds = array<i64: 2, 4, 256>}, {transform_indices = @transform_3, window_bounds = array<i64: 2, 4, 256>}, {transform_indices = @transform_4, window_bounds = array<i64: 2, 4, 256>}, {transform_indices = @transform_5, window_bounds = array<i64: 2, 4, 256>}, {transform_indices = @transform_6, window_bounds = array<i64: 2, 4, 256>}, {transform_indices = @transform_7, window_bounds = array<i64: 2, 4, 256>}, {transform_indices = @transform_8, window_bounds = array<i64: 2, 4, 256>}]} {
    %c0 = arith.constant 0 : index
    %c0_0 = arith.constant 0 : index
    %c0_1 = arith.constant 0 : index
    %0 = vector.load %arg1[%c0, %c0_0, %c0_1] : memref<2x1x256xf32, #tpu.memory_space<vmem>>, vector<1x1x256xf32>
    %1 = vector.shape_cast %0 : vector<1x1x256xf32> to vector<1x256xf32>
    %c0_2 = arith.constant 0 : index
    %c0_3 = arith.constant 0 : index
    %c0_4 = arith.constant 0 : index
    %2 = vector.load %arg2[%c0_2, %c0_3, %c0_4] : memref<2x4x256xf32, #tpu.memory_space<vmem>>, vector<1x4x256xf32>
    %3 = vector.shape_cast %2 : vector<1x4x256xf32> to vector<4x256xf32>
    %c0_5 = arith.constant 0 : index
    %c0_6 = arith.constant 0 : index
    %c0_7 = arith.constant 0 : index
    %4 = vector.load %arg3[%c0_5, %c0_6, %c0_7] : memref<2x4x256xf32, #tpu.memory_space<vmem>>, vector<1x4x256xf32>
    %5 = vector.shape_cast %4 : vector<1x4x256xf32> to vector<4x256xf32>
    %c0_8 = arith.constant 0 : index
    %c0_9 = arith.constant 0 : index
    %c0_10 = arith.constant 0 : index
    %6 = vector.load %arg4[%c0_8, %c0_9, %c0_10] : memref<2x4x256xf32, #tpu.memory_space<vmem>>, vector<1x4x256xf32>
    %7 = vector.shape_cast %6 : vector<1x4x256xf32> to vector<4x256xf32>
    %8 = arith.subf %3, %7 : vector<4x256xf32>
    %9 = vector.broadcast %1 : vector<1x256xf32> to vector<4x256xf32>
    %10 = arith.mulf %8, %9 : vector<4x256xf32>
    %11 = arith.subf %3, %10 : vector<4x256xf32>
    %c0_11 = arith.constant 0 : index
    %c0_12 = arith.constant 0 : index
    %c0_13 = arith.constant 0 : index
    %12 = vector.load %arg6[%c0_11, %c0_12, %c0_13] : memref<2x4x256xf32, #tpu.memory_space<vmem>>, vector<1x4x256xf32>
    %13 = vector.shape_cast %12 : vector<1x4x256xf32> to vector<4x256xf32>
    %14 = arith.subf %11, %13 : vector<4x256xf32>
    %c0_14 = arith.constant 0 : index
    %c0_15 = arith.constant 0 : index
    %c0_16 = arith.constant 0 : index
    %15 = vector.load %arg8[%c0_14, %c0_15, %c0_16] : memref<2x4x256xf32, #tpu.memory_space<vmem>>, vector<1x4x256xf32>
    %16 = vector.shape_cast %15 : vector<1x4x256xf32> to vector<4x256xf32>
    %17 = vector.shape_cast %14 : vector<4x256xf32> to vector<1x4x256xf32>
    tpu.vector_store %arg8[%c0_14, %c0_15, %c0_16], %17 {strides = array<i32>} : memref<2x4x256xf32, #tpu.memory_space<vmem>>, vector<1x4x256xf32>,
    %c0_17 = arith.constant 0 : index
    %c0_18 = arith.constant 0 : index
    %c0_19 = arith.constant 0 : index
    %18 = vector.load %arg5[%c0_17, %c0_18, %c0_19] : memref<2x4x256xf32, #tpu.memory_space<vmem>>, vector<1x4x256xf32>
    %19 = vector.shape_cast %18 : vector<1x4x256xf32> to vector<4x256xf32>
    %20 = arith.subf %5, %19 : vector<4x256xf32>
    %21 = vector.broadcast %1 : vector<1x256xf32> to vector<4x256xf32>
    %22 = arith.mulf %20, %21 : vector<4x256xf32>
    %23 = arith.subf %5, %22 : vector<4x256xf32>
    %c0_20 = arith.constant 0 : index
    %c0_21 = arith.constant 0 : index
    %c0_22 = arith.constant 0 : index
    %24 = vector.load %arg7[%c0_20, %c0_21, %c0_22] : memref<2x4x256xf32, #tpu.memory_space<vmem>>, vector<1x4x256xf32>
    %25 = vector.shape_cast %24 : vector<1x4x256xf32> to vector<4x256xf32>
    %26 = arith.subf %23, %25 : vector<4x256xf32>
    %c0_23 = arith.constant 0 : index
    %c0_24 = arith.constant 0 : index
    %c0_25 = arith.constant 0 : index
    %27 = vector.load %arg9[%c0_23, %c0_24, %c0_25] : memref<2x4x256xf32, #tpu.memory_space<vmem>>, vector<1x4x256xf32>
    %28 = vector.shape_cast %27 : vector<1x4x256xf32> to vector<4x256xf32>
    %29 = vector.shape_cast %26 : vector<4x256xf32> to vector<1x4x256xf32>
    tpu.vector_store %arg9[%c0_23, %c0_24, %c0_25], %29 {strides = array<i32>} : memref<2x4x256xf32, #tpu.memory_space<vmem>>, vector<1x4x256xf32>,
    %c1 = arith.constant 1 : index
    %c0_26 = arith.constant 0 : index
    %c0_27 = arith.constant 0 : index
    %30 = vector.load %arg1[%c1, %c0_26, %c0_27] : memref<2x1x256xf32, #tpu.memory_space<vmem>>, vector<1x1x256xf32>
    %31 = vector.shape_cast %30 : vector<1x1x256xf32> to vector<1x256xf32>
    %c1_28 = arith.constant 1 : index
    %c0_29 = arith.constant 0 : index
    %c0_30 = arith.constant 0 : index
    %32 = vector.load %arg2[%c1_28, %c0_29, %c0_30] : memref<2x4x256xf32, #tpu.memory_space<vmem>>, vector<1x4x256xf32>
    %33 = vector.shape_cast %32 : vector<1x4x256xf32> to vector<4x256xf32>
    %c1_31 = arith.constant 1 : index
    %c0_32 = arith.constant 0 : index
    %c0_33 = arith.constant 0 : index
    %34 = vector.load %arg3[%c1_31, %c0_32, %c0_33] : memref<2x4x256xf32, #tpu.memory_space<vmem>>, vector<1x4x256xf32>
    %35 = vector.shape_cast %34 : vector<1x4x256xf32> to vector<4x256xf32>
    %c1_34 = arith.constant 1 : index
    %c0_35 = arith.constant 0 : index
    %c0_36 = arith.constant 0 : index
    %36 = vector.load %arg4[%c1_34, %c0_35, %c0_36] : memref<2x4x256xf32, #tpu.memory_space<vmem>>, vector<1x4x256xf32>
    %37 = vector.shape_cast %36 : vector<1x4x256xf32> to vector<4x256xf32>
    %38 = arith.subf %33, %37 : vector<4x256xf32>
    %39 = vector.broadcast %31 : vector<1x256xf32> to vector<4x256xf32>
    %40 = arith.mulf %38, %39 : vector<4x256xf32>
    %41 = arith.subf %33, %40 : vector<4x256xf32>
    %c1_37 = arith.constant 1 : index
    %c0_38 = arith.constant 0 : index
    %c0_39 = arith.constant 0 : index
    %42 = vector.load %arg6[%c1_37, %c0_38, %c0_39] : memref<2x4x256xf32, #tpu.memory_space<vmem>>, vector<1x4x256xf32>
    %43 = vector.shape_cast %42 : vector<1x4x256xf32> to vector<4x256xf32>
    %44 = arith.subf %41, %43 : vector<4x256xf32>
    %c1_40 = arith.constant 1 : index
    %c0_41 = arith.constant 0 : index
    %c0_42 = arith.constant 0 : index
    %45 = vector.load %arg8[%c1_40, %c0_41, %c0_42] : memref<2x4x256xf32, #tpu.memory_space<vmem>>, vector<1x4x256xf32>
    %46 = vector.shape_cast %45 : vector<1x4x256xf32> to vector<4x256xf32>
    %47 = vector.shape_cast %44 : vector<4x256xf32> to vector<1x4x256xf32>
    tpu.vector_store %arg8[%c1_40, %c0_41, %c0_42], %47 {strides = array<i32>} : memref<2x4x256xf32, #tpu.memory_space<vmem>>, vector<1x4x256xf32>,
    %c1_43 = arith.constant 1 : index
    %c0_44 = arith.constant 0 : index
    %c0_45 = arith.constant 0 : index
    %48 = vector.load %arg5[%c1_43, %c0_44, %c0_45] : memref<2x4x256xf32, #tpu.memory_space<vmem>>, vector<1x4x256xf32>
    %49 = vector.shape_cast %48 : vector<1x4x256xf32> to vector<4x256xf32>
    %50 = arith.subf %35, %49 : vector<4x256xf32>
    %51 = vector.broadcast %31 : vector<1x256xf32> to vector<4x256xf32>
    %52 = arith.mulf %50, %51 : vector<4x256xf32>
    %53 = arith.subf %35, %52 : vector<4x256xf32>
    %c1_46 = arith.constant 1 : index
    %c0_47 = arith.constant 0 : index
    %c0_48 = arith.constant 0 : index
    %54 = vector.load %arg7[%c1_46, %c0_47, %c0_48] : memref<2x4x256xf32, #tpu.memory_space<vmem>>, vector<1x4x256xf32>
    %55 = vector.shape_cast %54 : vector<1x4x256xf32> to vector<4x256xf32>
    %56 = arith.subf %53, %55 : vector<4x256xf32>
    %c1_49 = arith.constant 1 : index
    %c0_50 = arith.constant 0 : index
    %c0_51 = arith.constant 0 : index
    %57 = vector.load %arg9[%c1_49, %c0_50, %c0_51] : memref<2x4x256xf32, #tpu.memory_space<vmem>>, vector<1x4x256xf32>
    %58 = vector.shape_cast %57 : vector<1x4x256xf32> to vector<4x256xf32>
    %59 = vector.shape_cast %56 : vector<4x256xf32> to vector<1x4x256xf32>
    tpu.vector_store %arg9[%c1_49, %c0_50, %c0_51], %59 {strides = array<i32>} : memref<2x4x256xf32, #tpu.memory_space<vmem>>, vector<1x4x256xf32>,
    return
  }
  func.func @transform_0(%arg0: i32) -> (i32, i32, i32) {
    %c0_i32 = arith.constant 0 : i32
    %c0_i32_0 = arith.constant 0 : i32
    %c0_i32_1 = arith.constant 0 : i32
    return %arg0, %c0_i32, %c0_i32_0 : i32, i32, i32
  }
  func.func @transform_1(%arg0: i32) -> (i32, i32, i32) {
    %c0_i32 = arith.constant 0 : i32
    %c0_i32_0 = arith.constant 0 : i32
    %c0_i32_1 = arith.constant 0 : i32
    return %arg0, %c0_i32, %c0_i32_0 : i32, i32, i32
  }
  func.func @transform_2(%arg0: i32) -> (i32, i32, i32) {
    %c0_i32 = arith.constant 0 : i32
    %c0_i32_0 = arith.constant 0 : i32
    %c0_i32_1 = arith.constant 0 : i32
    return %arg0, %c0_i32, %c0_i32_0 : i32, i32, i32
  }
  func.func @transform_3(%arg0: i32) -> (i32, i32, i32) {
    %c0_i32 = arith.constant 0 : i32
    %c0_i32_0 = arith.constant 0 : i32
    %c0_i32_1 = arith.constant 0 : i32
    return %arg0, %c0_i32, %c0_i32_0 : i32, i32, i32
  }
  func.func @transform_4(%arg0: i32) -> (i32, i32, i32) {
    %c0_i32 = arith.constant 0 : i32
    %c0_i32_0 = arith.constant 0 : i32
    %c0_i32_1 = arith.constant 0 : i32
    return %arg0, %c0_i32, %c0_i32_0 : i32, i32, i32
  }
  func.func @transform_5(%arg0: i32) -> (i32, i32, i32) {
    %c0_i32 = arith.constant 0 : i32
    %c0_i32_0 = arith.constant 0 : i32
    %c0_i32_1 = arith.constant 0 : i32
    return %arg0, %c0_i32, %c0_i32_0 : i32, i32, i32
  }
  func.func @transform_6(%arg0: i32) -> (i32, i32, i32) {
    %c0_i32 = arith.constant 0 : i32
    %c0_i32_0 = arith.constant 0 : i32
    %c0_i32_1 = arith.constant 0 : i32
    return %arg0, %c0_i32, %c0_i32_0 : i32, i32, i32
  }
  func.func @transform_7(%arg0: i32) -> (i32, i32, i32) {
    %c0_i32 = arith.constant 0 : i32
    %c0_i32_0 = arith.constant 0 : i32
    %c0_i32_1 = arith.constant 0 : i32
    return %arg0, %c0_i32, %c0_i32_0 : i32, i32, i32
  }
  func.func @transform_8(%arg0: i32) -> (i32, i32, i32) {
    %c0_i32 = arith.constant 0 : i32
    %c0_i32_0 = arith.constant 0 : i32
    %c0_i32_1 = arith.constant 0 : i32
    return %arg0, %c0_i32, %c0_i32_0 : i32, i32, i32
  }
}

</mosaic_0001>

<llo_original>
// kernel: squeeze.17
$region0: #{squeeze.17}
  %s0 = inlined_call_operand.vmem [shape: f32[4,4,16,16], index: 0, kind: input, shape index: {}]
  %s1 = inlined_call_operand.vmem [shape: f32[4,4,256], index: 1, kind: output, shape index: {}]
  $region1: #{squeeze.17} parent=0
    #allocation0 [shape = 'u8[32768]{0}', space=vmem, size = 0x8000, scoped, tag = 'scoped mem for output reshape']
    %v2 = vld [vmem:[%s0] ss:$8 sm:$0xf]
    %v3 = vld [vmem:[%s0] ss:$8 sm:$0xf0]
    %vm4 = vcmask 1047556
    %v5 = vsel %vm4, %v3, %v2
    %vm6 = vcmask 130048
    %7 = vst.msk [vmem:[#allocation0] ss:$8 sm:$0x3] %vm6, %v5
    %s8 = scalar_lea.vmem [#allocation0], 4294967281
    %9 = vst.msk [vmem:[%s8] ss:$8 sm:$0xc] %vm6, %v5
    %s10 = scalar_lea.vmem [#allocation0], 4294967266
    %11 = vst.msk [vmem:[%s10] ss:$8 sm:$0x30] %vm6, %v5
    %s12 = scalar_lea.vmem [#allocation0], 4294967251
    %13 = vst.msk [vmem:[%s12] ss:$8 sm:$0xc0] %vm6, %v5
    %s14 = scalar_lea.vmem %s0, 64
    %v15 = vld [vmem:[%s14] ss:$8 sm:$0xf]
    %s16 = scalar_lea.vmem %s0, 64
    %v17 = vld [vmem:[%s16] ss:$8 sm:$0xf0]
    %vm18 = vcmask 1047556
    %v19 = vsel %vm18, %v17, %v15
    %vm20 = vcmask 130048
    %s21 = scalar_lea.vmem [#allocation0], 16
    %22 = vst.msk [vmem:[%s21] ss:$8 sm:$0x3] %vm20, %v19
    %s23 = scalar_lea.vmem [#allocation0], 1
    %24 = vst.msk [vmem:[%s23] ss:$8 sm:$0xc] %vm20, %v19
    %s25 = scalar_lea.vmem [#allocation0], 4294967282
    %26 = vst.msk [vmem:[%s25] ss:$8 sm:$0x30] %vm20, %v19
    %s27 = scalar_lea.vmem [#allocation0], 4294967267
    %28 = vst.msk [vmem:[%s27] ss:$8 sm:$0xc0] %vm20, %v19
    %s29 = scalar_lea.vmem %s0, 128
    %v30 = vld [vmem:[%s29] ss:$8 sm:$0xf]
    %s31 = scalar_lea.vmem %s0, 128
    %v32 = vld [vmem:[%s31] ss:$8 sm:$0xf0]
    %vm33 = vcmask 1047556
    %v34 = vsel %vm33, %v32, %v30
    %vm35 = vcmask 130048
    %s36 = scalar_lea.vmem [#allocation0], 32
    %37 = vst.msk [vmem:[%s36] ss:$8 sm:$0x3] %vm35, %v34
    %s38 = scalar_lea.vmem [#allocation0], 17
    %39 = vst.msk [vmem:[%s38] ss:$8 sm:$0xc] %vm35, %v34
    %s40 = scalar_lea.vmem [#allocation0], 2
    %41 = vst.msk [vmem:[%s40] ss:$8 sm:$0x30] %vm35, %v34
    %s42 = scalar_lea.vmem [#allocation0], 4294967283
    %43 = vst.msk [vmem:[%s42] ss:$8 sm:$0xc0] %vm35, %v34
    %s44 = scalar_lea.vmem %s0, 192
    %v45 = vld [vmem:[%s44] ss:$8 sm:$0xf]
    %s46 = scalar_lea.vmem %s0, 192
    %v47 = vld [vmem:[%s46] ss:$8 sm:$0xf0]
    %vm48 = vcmask 1047556
    %v49 = vsel %vm48, %v47, %v45
    %vm50 = vcmask 130048
    %s51 = scalar_lea.vmem [#allocation0], 48
    %52 = vst.msk [vmem:[%s51] ss:$8 sm:$0x3] %vm50, %v49
    %s53 = scalar_lea.vmem [#allocation0], 33
    %54 = vst.msk [vmem:[%s53] ss:$8 sm:$0xc] %vm50, %v49
    %s55 = scalar_lea.vmem [#allocation0], 18
    %56 = vst.msk [vmem:[%s55] ss:$8 sm:$0x30] %vm50, %v49
    %s57 = scalar_lea.vmem [#allocation0], 3
    %58 = vst.msk [vmem:[%s57] ss:$8 sm:$0xc0] %vm50, %v49
    %s59 = scalar_lea.vmem %s0, 7
    %s60 = smov 3
    %v61 = vld [vmem:[%s59] ss:$16 sm:%s60]
    %s62 = scalar_lea.vmem %s0, 7
    %s63 = smov 12
    %v64 = vld [vmem:[%s62] ss:$16 sm:%s63]
    %vm65 = vcmask 1043458
    %v66 = vsel %vm65, %v64, %v61
    %s67 = scalar_lea.vmem %s0, 4294967247
    %s68 = smov 48
    %v69 = vld [vmem:[%s67] ss:$16 sm:%s68]
    %vm70 = vcmask 1045508
    %v71 = vsel %vm70, %v69, %v66
    %s72 = scalar_lea.vmem %s0, 4294967247
    %s73 = smov 192
    %v74 = vld [vmem:[%s72] ss:$16 sm:%s73]
    %vm75 = vcmask 1047558
    %v76 = vsel %vm75, %v74, %v71
    %77 = vrot.lane.b32.xlu0 %v76, 112
    %v78 = vpop.permute.xlu0 %77
    %vm79 = vcmask 1048448
    %80 = vst.msk [vmem:[#allocation0] sm:$0xf] %vm79, %v78
    %s81 = scalar_lea.vmem [#allocation0], 4
    %82 = vst.msk [vmem:[%s81] sm:$0xf0] %vm79, %v78
    %s83 = scalar_lea.vmem %s0, 135
    %s84 = smov 3
    %v85 = vld [vmem:[%s83] ss:$16 sm:%s84]
    %s86 = scalar_lea.vmem %s0, 135
    %s87 = smov 12
    %v88 = vld [vmem:[%s86] ss:$16 sm:%s87]
    %vm89 = vcmask 1043458
    %v90 = vsel %vm89, %v88, %v85
    %s91 = scalar_lea.vmem %s0, 79
    %s92 = smov 48
    %v93 = vld [vmem:[%s91] ss:$16 sm:%s92]
    %vm94 = vcmask 1045508
    %v95 = vsel %vm94, %v93, %v90
    %s96 = scalar_lea.vmem %s0, 79
    %s97 = smov 192
    %v98 = vld [vmem:[%s96] ss:$16 sm:%s97]
    %vm99 = vcmask 1047558
    %v100 = vsel %vm99, %v98, %v95
    %101 = vrot.lane.b32.xlu0 %v100, 112
    %v102 = vpop.permute.xlu0 %101
    %vm103 = vcmask 1048448
    %s104 = scalar_lea.vmem [#allocation0], 32
    %105 = vst.msk [vmem:[%s104] sm:$0xf] %vm103, %v102
    %s106 = scalar_lea.vmem [#allocation0], 36
    %107 = vst.msk [vmem:[%s106] sm:$0xf0] %vm103, %v102
    %s108 = scalar_lea.vmem %s0, 71
    %s109 = smov 3
    %v110 = vld [vmem:[%s108] ss:$16 sm:%s109]
    %s111 = scalar_lea.vmem %s0, 71
    %s112 = smov 12
    %v113 = vld [vmem:[%s111] ss:$16 sm:%s112]
    %vm114 = vcmask 1043458
    %v115 = vsel %vm114, %v113, %v110
    %s116 = scalar_lea.vmem %s0, 15
    %s117 = smov 48
    %v118 = vld [vmem:[%s116] ss:$16 sm:%s117]
    %vm119 = vcmask 1045508
    %v120 = vsel %vm119, %v118, %v115
    %s121 = scalar_lea.vmem %s0, 15
    %s122 = smov 192
    %v123 = vld [vmem:[%s121] ss:$16 sm:%s122]
    %vm124 = vcmask 1047558
    %v125 = vsel %vm124, %v123, %v120
    %126 = vrot.lane.b32.xlu0 %v125, 112
    %v127 = vpop.permute.xlu0 %126
    %vm128 = vcmask 1048448
    %s129 = scalar_lea.vmem [#allocation0], 16
    %130 = vst.msk [vmem:[%s129] sm:$0xf] %vm128, %v127
    %s131 = scalar_lea.vmem [#allocation0], 20
    %132 = vst.msk [vmem:[%s131] sm:$0xf0] %vm128, %v127
    %s133 = scalar_lea.vmem %s0, 199
    %s134 = smov 3
    %v135 = vld [vmem:[%s133] ss:$16 sm:%s134]
    %s136 = scalar_lea.vmem %s0, 199
    %s137 = smov 12
    %v138 = vld [vmem:[%s136] ss:$16 sm:%s137]
    %vm139 = vcmask 1043458
    %v140 = vsel %vm139, %v138, %v135
    %s141 = scalar_lea.vmem %s0, 143
    %s142 = smov 48
    %v143 = vld [vmem:[%s141] ss:$16 sm:%s142]
    %vm144 = vcmask 1045508
    %v145 = vsel %vm144, %v143, %v140
    %s146 = scalar_lea.vmem %s0, 143
    %s147 = smov 192
    %v148 = vld [vmem:[%s146] ss:$16 sm:%s147]
    %vm149 = vcmask 1047558
    %v150 = vsel %vm149, %v148, %v145
    %151 = vrot.lane.b32.xlu0 %v150, 112
    %v152 = vpop.permute.xlu0 %151
    %vm153 = vcmask 1048448
    %s154 = scalar_lea.vmem [#allocation0], 48
    %155 = vst.msk [vmem:[%s154] sm:$0xf] %vm153, %v152
    %s156 = scalar_lea.vmem [#allocation0], 52
    %157 = vst.msk [vmem:[%s156] sm:$0xf0] %vm153, %v152
    %s158 = scalar_lea.vmem %s0, 6
    %s159 = smov 3
    %v160 = vld [vmem:[%s158] ss:$16 sm:%s159]
    %s161 = scalar_lea.vmem %s0, 6
    %s162 = smov 12
    %v163 = vld [vmem:[%s161] ss:$16 sm:%s162]
    %vm164 = vcmask 1043458
    %v165 = vsel %vm164, %v163, %v160
    %s166 = scalar_lea.vmem %s0, 4294967246
    %s167 = smov 48
    %v168 = vld [vmem:[%s166] ss:$16 sm:%s167]
    %vm169 = vcmask 1045508
    %v170 = vsel %vm169, %v168, %v165
    %s171 = scalar_lea.vmem %s0, 4294967246
    %s172 = smov 192
    %v173 = vld [vmem:[%s171] ss:$16 sm:%s172]
    %vm174 = vcmask 1047558
    %v175 = vsel %vm174, %v173, %v170
    %176 = vrot.lane.b32.xlu0 %v175, 96
    %v177 = vpop.permute.xlu0 %176
    %vm178 = vcmask 917248
    %179 = vst.msk [vmem:[#allocation0] sm:$0xf] %vm178, %v177
    %s180 = scalar_lea.vmem [#allocation0], 4
    %181 = vst.msk [vmem:[%s180] sm:$0xf0] %vm178, %v177
    %s182 = scalar_lea.vmem %s0, 134
    %s183 = smov 3
    %v184 = vld [vmem:[%s182] ss:$16 sm:%s183]
    %s185 = scalar_lea.vmem %s0, 134
    %s186 = smov 12
    %v187 = vld [vmem:[%s185] ss:$16 sm:%s186]
    %vm188 = vcmask 1043458
    %v189 = vsel %vm188, %v187, %v184
    %s190 = scalar_lea.vmem %s0, 78
    %s191 = smov 48
    %v192 = vld [vmem:[%s190] ss:$16 sm:%s191]
    %vm193 = vcmask 1045508
    %v194 = vsel %vm193, %v192, %v189
    %s195 = scalar_lea.vmem %s0, 78
    %s196 = smov 192
    %v197 = vld [vmem:[%s195] ss:$16 sm:%s196]
    %vm198 = vcmask 1047558
    %v199 = vsel %vm198, %v197, %v194
    %200 = vrot.lane.b32.xlu0 %v199, 96
    %v201 = vpop.permute.xlu0 %200
    %vm202 = vcmask 917248
    %s203 = scalar_lea.vmem [#allocation0], 32
    %204 = vst.msk [vmem:[%s203] sm:$0xf] %vm202, %v201
    %s205 = scalar_lea.vmem [#allocation0], 36
    %206 = vst.msk [vmem:[%s205] sm:$0xf0] %vm202, %v201
    %s207 = scalar_lea.vmem %s0, 70
    %s208 = smov 3
    %v209 = vld [vmem:[%s207] ss:$16 sm:%s208]
    %s210 = scalar_lea.vmem %s0, 70
    %s211 = smov 12
    %v212 = vld [vmem:[%s210] ss:$16 sm:%s211]
    %vm213 = vcmask 1043458
    %v214 = vsel %vm213, %v212, %v209
    %s215 = scalar_lea.vmem %s0, 14
    %s216 = smov 48
    %v217 = vld [vmem:[%s215] ss:$16 sm:%s216]
    %vm218 = vcmask 1045508
    %v219 = vsel %vm218, %v217, %v214
    %s220 = scalar_lea.vmem %s0, 14
    %s221 = smov 192
    %v222 = vld [vmem:[%s220] ss:$16 sm:%s221]
    %vm223 = vcmask 1047558
    %v224 = vsel %vm223, %v222, %v219
    %225 = vrot.lane.b32.xlu0 %v224, 96
    %v226 = vpop.permute.xlu0 %225
    %vm227 = vcmask 917248
    %s228 = scalar_lea.vmem [#allocation0], 16
    %229 = vst.msk [vmem:[%s228] sm:$0xf] %vm227, %v226
    %s230 = scalar_lea.vmem [#allocation0], 20
    %231 = vst.msk [vmem:[%s230] sm:$0xf0] %vm227, %v226
    %s232 = scalar_lea.vmem %s0, 198
    %s233 = smov 3
    %v234 = vld [vmem:[%s232] ss:$16 sm:%s233]
    %s235 = scalar_lea.vmem %s0, 198
    %s236 = smov 12
    %v237 = vld [vmem:[%s235] ss:$16 sm:%s236]
    %vm238 = vcmask 1043458
    %v239 = vsel %vm238, %v237, %v234
    %s240 = scalar_lea.vmem %s0, 142
    %s241 = smov 48
    %v242 = vld [vmem:[%s240] ss:$16 sm:%s241]
    %vm243 = vcmask 1045508
    %v244 = vsel %vm243, %v242, %v239
    %s245 = scalar_lea.vmem %s0, 142
    %s246 = smov 192
    %v247 = vld [vmem:[%s245] ss:$16 sm:%s246]
    %vm248 = vcmask 1047558
    %v249 = vsel %vm248, %v247, %v244
    %250 = vrot.lane.b32.xlu0 %v249, 96
    %v251 = vpop.permute.xlu0 %250
    %vm252 = vcmask 917248
    %s253 = scalar_lea.vmem [#allocation0], 48
    %254 = vst.msk [vmem:[%s253] sm:$0xf] %vm252, %v251
    %s255 = scalar_lea.vmem [#allocation0], 52
    %256 = vst.msk [vmem:[%s255] sm:$0xf0] %vm252, %v251
    %s257 = scalar_lea.vmem %s0, 5
    %s258 = smov 3
    %v259 = vld [vmem:[%s257] ss:$16 sm:%s258]
    %s260 = scalar_lea.vmem %s0, 5
    %s261 = smov 12
    %v262 = vld [vmem:[%s260] ss:$16 sm:%s261]
    %vm263 = vcmask 1043458
    %v264 = vsel %vm263, %v262, %v259
    %s265 = scalar_lea.vmem %s0, 4294967245
    %s266 = smov 48
    %v267 = vld [vmem:[%s265] ss:$16 sm:%s266]
    %vm268 = vcmask 1045508
    %v269 = vsel %vm268, %v267, %v264
    %s270 = scalar_lea.vmem %s0, 4294967245
    %s271 = smov 192
    %v272 = vld [vmem:[%s270] ss:$16 sm:%s271]
    %vm273 = vcmask 1047558
    %v274 = vsel %vm273, %v272, %v269
    %275 = vrot.lane.b32.xlu0 %v274, 80
    %v276 = vpop.permute.xlu0 %275
    %vm277 = vcmask 786048
    %278 = vst.msk [vmem:[#allocation0] sm:$0xf] %vm277, %v276
    %s279 = scalar_lea.vmem [#allocation0], 4
    %280 = vst.msk [vmem:[%s279] sm:$0xf0] %vm277, %v276
    %s281 = scalar_lea.vmem %s0, 133
    %s282 = smov 3
    %v283 = vld [vmem:[%s281] ss:$16 sm:%s282]
    %s284 = scalar_lea.vmem %s0, 133
    %s285 = smov 12
    %v286 = vld [vmem:[%s284] ss:$16 sm:%s285]
    %vm287 = vcmask 1043458
    %v288 = vsel %vm287, %v286, %v283
    %s289 = scalar_lea.vmem %s0, 77
    %s290 = smov 48
    %v291 = vld [vmem:[%s289] ss:$16 sm:%s290]
    %vm292 = vcmask 1045508
    %v293 = vsel %vm292, %v291, %v288
    %s294 = scalar_lea.vmem %s0, 77
    %s295 = smov 192
    %v296 = vld [vmem:[%s294] ss:$16 sm:%s295]
    %vm297 = vcmask 1047558
    %v298 = vsel %vm297, %v296, %v293
    %299 = vrot.lane.b32.xlu0 %v298, 80
    %v300 = vpop.permute.xlu0 %299
    %vm301 = vcmask 786048
    %s302 = scalar_lea.vmem [#allocation0], 32
    %303 = vst.msk [vmem:[%s302] sm:$0xf] %vm301, %v300
    %s304 = scalar_lea.vmem [#allocation0], 36
    %305 = vst.msk [vmem:[%s304] sm:$0xf0] %vm301, %v300
    %s306 = scalar_lea.vmem %s0, 69
    %s307 = smov 3
    %v308 = vld [vmem:[%s306] ss:$16 sm:%s307]
    %s309 = scalar_lea.vmem %s0, 69
    %s310 = smov 12
    %v311 = vld [vmem:[%s309] ss:$16 sm:%s310]
    %vm312 = vcmask 1043458
    %v313 = vsel %vm312, %v311, %v308
    %s314 = scalar_lea.vmem %s0, 13
    %s315 = smov 48
    %v316 = vld [vmem:[%s314] ss:$16 sm:%s315]
    %vm317 = vcmask 1045508
    %v318 = vsel %vm317, %v316, %v313
    %s319 = scalar_lea.vmem %s0, 13
    %s320 = smov 192
    %v321 = vld [vmem:[%s319] ss:$16 sm:%s320]
    %vm322 = vcmask 1047558
    %v323 = vsel %vm322, %v321, %v318
    %324 = vrot.lane.b32.xlu0 %v323, 80
    %v325 = vpop.permute.xlu0 %324
    %vm326 = vcmask 786048
    %s327 = scalar_lea.vmem [#allocation0], 16
    %328 = vst.msk [vmem:[%s327] sm:$0xf] %vm326, %v325
    %s329 = scalar_lea.vmem [#allocation0], 20
    %330 = vst.msk [vmem:[%s329] sm:$0xf0] %vm326, %v325
    %s331 = scalar_lea.vmem %s0, 197
    %s332 = smov 3
    %v333 = vld [vmem:[%s331] ss:$16 sm:%s332]
    %s334 = scalar_lea.vmem %s0, 197
    %s335 = smov 12
    %v336 = vld [vmem:[%s334] ss:$16 sm:%s335]
    %vm337 = vcmask 1043458
    %v338 = vsel %vm337, %v336, %v333
    %s339 = scalar_lea.vmem %s0, 141
    %s340 = smov 48
    %v341 = vld [vmem:[%s339] ss:$16 sm:%s340]
    %vm342 = vcmask 1045508
    %v343 = vsel %vm342, %v341, %v338
    %s344 = scalar_lea.vmem %s0, 141
    %s345 = smov 192
    %v346 = vld [vmem:[%s344] ss:$16 sm:%s345]
    %vm347 = vcmask 1047558
    %v348 = vsel %vm347, %v346, %v343
    %349 = vrot.lane.b32.xlu0 %v348, 80
    %v350 = vpop.permute.xlu0 %349
    %vm351 = vcmask 786048
    %s352 = scalar_lea.vmem [#allocation0], 48
    %353 = vst.msk [vmem:[%s352] sm:$0xf] %vm351, %v350
    %s354 = scalar_lea.vmem [#allocation0], 52
    %355 = vst.msk [vmem:[%s354] sm:$0xf0] %vm351, %v350
    %s356 = scalar_lea.vmem %s0, 4
    %s357 = smov 3
    %v358 = vld [vmem:[%s356] ss:$16 sm:%s357]
    %s359 = scalar_lea.vmem %s0, 4
    %s360 = smov 12
    %v361 = vld [vmem:[%s359] ss:$16 sm:%s360]
    %vm362 = vcmask 1043458
    %v363 = vsel %vm362, %v361, %v358
    %s364 = scalar_lea.vmem %s0, 4294967244
    %s365 = smov 48
    %v366 = vld [vmem:[%s364] ss:$16 sm:%s365]
    %vm367 = vcmask 1045508
    %v368 = vsel %vm367, %v366, %v363
    %s369 = scalar_lea.vmem %s0, 4294967244
    %s370 = smov 192
    %v371 = vld [vmem:[%s369] ss:$16 sm:%s370]
    %vm372 = vcmask 1047558
    %v373 = vsel %vm372, %v371, %v368
    %374 = vrot.lane.b32.xlu0 %v373, 64
    %v375 = vpop.permute.xlu0 %374
    %vm376 = vcmask 654848
    %377 = vst.msk [vmem:[#allocation0] sm:$0xf] %vm376, %v375
    %s378 = scalar_lea.vmem [#allocation0], 4
    %379 = vst.msk [vmem:[%s378] sm:$0xf0] %vm376, %v375
    %s380 = scalar_lea.vmem %s0, 132
    %s381 = smov 3
    %v382 = vld [vmem:[%s380] ss:$16 sm:%s381]
    %s383 = scalar_lea.vmem %s0, 132
    %s384 = smov 12
    %v385 = vld [vmem:[%s383] ss:$16 sm:%s384]
    %vm386 = vcmask 1043458
    %v387 = vsel %vm386, %v385, %v382
    %s388 = scalar_lea.vmem %s0, 76
    %s389 = smov 48
    %v390 = vld [vmem:[%s388] ss:$16 sm:%s389]
    %vm391 = vcmask 1045508
    %v392 = vsel %vm391, %v390, %v387
    %s393 = scalar_lea.vmem %s0, 76
    %s394 = smov 192
    %v395 = vld [vmem:[%s393] ss:$16 sm:%s394]
    %vm396 = vcmask 1047558
    %v397 = vsel %vm396, %v395, %v392
    %398 = vrot.lane.b32.xlu0 %v397, 64
    %v399 = vpop.permute.xlu0 %398
    %vm400 = vcmask 654848
    %s401 = scalar_lea.vmem [#allocation0], 32
    %402 = vst.msk [vmem:[%s401] sm:$0xf] %vm400, %v399
    %s403 = scalar_lea.vmem [#allocation0], 36
    %404 = vst.msk [vmem:[%s403] sm:$0xf0] %vm400, %v399
    %s405 = scalar_lea.vmem %s0, 68
    %s406 = smov 3
    %v407 = vld [vmem:[%s405] ss:$16 sm:%s406]
    %s408 = scalar_lea.vmem %s0, 68
    %s409 = smov 12
    %v410 = vld [vmem:[%s408] ss:$16 sm:%s409]
    %vm411 = vcmask 1043458
    %v412 = vsel %vm411, %v410, %v407
    %s413 = scalar_lea.vmem %s0, 12
    %s414 = smov 48
    %v415 = vld [vmem:[%s413] ss:$16 sm:%s414]
    %vm416 = vcmask 1045508
    %v417 = vsel %vm416, %v415, %v412
    %s418 = scalar_lea.vmem %s0, 12
    %s419 = smov 192
    %v420 = vld [vmem:[%s418] ss:$16 sm:%s419]
    %vm421 = vcmask 1047558
    %v422 = vsel %vm421, %v420, %v417
    %423 = vrot.lane.b32.xlu0 %v422, 64
    %v424 = vpop.permute.xlu0 %423
    %vm425 = vcmask 654848
    %s426 = scalar_lea.vmem [#allocation0], 16
    %427 = vst.msk [vmem:[%s426] sm:$0xf] %vm425, %v424
    %s428 = scalar_lea.vmem [#allocation0], 20
    %429 = vst.msk [vmem:[%s428] sm:$0xf0] %vm425, %v424
    %s430 = scalar_lea.vmem %s0, 196
    %s431 = smov 3
    %v432 = vld [vmem:[%s430] ss:$16 sm:%s431]
    %s433 = scalar_lea.vmem %s0, 196
    %s434 = smov 12
    %v435 = vld [vmem:[%s433] ss:$16 sm:%s434]
    %vm436 = vcmask 1043458
    %v437 = vsel %vm436, %v435, %v432
    %s438 = scalar_lea.vmem %s0, 140
    %s439 = smov 48
    %v440 = vld [vmem:[%s438] ss:$16 sm:%s439]
    %vm441 = vcmask 1045508
    %v442 = vsel %vm441, %v440, %v437
    %s443 = scalar_lea.vmem %s0, 140
    %s444 = smov 192
    %v445 = vld [vmem:[%s443] ss:$16 sm:%s444]
    %vm446 = vcmask 1047558
    %v447 = vsel %vm446, %v445, %v442
    %448 = vrot.lane.b32.xlu0 %v447, 64
    %v449 = vpop.permute.xlu0 %448
    %vm450 = vcmask 654848
    %s451 = scalar_lea.vmem [#allocation0], 48
    %452 = vst.msk [vmem:[%s451] sm:$0xf] %vm450, %v449
    %s453 = scalar_lea.vmem [#allocation0], 52
    %454 = vst.msk [vmem:[%s453] sm:$0xf0] %vm450, %v449
    %s455 = scalar_lea.vmem %s0, 3
    %s456 = smov 3
    %v457 = vld [vmem:[%s455] ss:$16 sm:%s456]
    %s458 = scalar_lea.vmem %s0, 3
    %s459 = smov 12
    %v460 = vld [vmem:[%s458] ss:$16 sm:%s459]
    %vm461 = vcmask 1043458
    %v462 = vsel %vm461, %v460, %v457
    %s463 = scalar_lea.vmem %s0, 4294967243
    %s464 = smov 48
    %v465 = vld [vmem:[%s463] ss:$16 sm:%s464]
    %vm466 = vcmask 1045508
    %v467 = vsel %vm466, %v465, %v462
    %s468 = scalar_lea.vmem %s0, 4294967243
    %s469 = smov 192
    %v470 = vld [vmem:[%s468] ss:$16 sm:%s469]
    %vm471 = vcmask 1047558
    %v472 = vsel %vm471, %v470, %v467
    %473 = vrot.lane.b32.xlu0 %v472, 48
    %v474 = vpop.permute.xlu0 %473
    %vm475 = vcmask 523648
    %476 = vst.msk [vmem:[#allocation0] sm:$0xf] %vm475, %v474
    %s477 = scalar_lea.vmem [#allocation0], 4
    %478 = vst.msk [vmem:[%s477] sm:$0xf0] %vm475, %v474
    %s479 = scalar_lea.vmem %s0, 131
    %s480 = smov 3
    %v481 = vld [vmem:[%s479] ss:$16 sm:%s480]
    %s482 = scalar_lea.vmem %s0, 131
    %s483 = smov 12
    %v484 = vld [vmem:[%s482] ss:$16 sm:%s483]
    %vm485 = vcmask 1043458
    %v486 = vsel %vm485, %v484, %v481
    %s487 = scalar_lea.vmem %s0, 75
    %s488 = smov 48
    %v489 = vld [vmem:[%s487] ss:$16 sm:%s488]
    %vm490 = vcmask 1045508
    %v491 = vsel %vm490, %v489, %v486
    %s492 = scalar_lea.vmem %s0, 75
    %s493 = smov 192
    %v494 = vld [vmem:[%s492] ss:$16 sm:%s493]
    %vm495 = vcmask 1047558
    %v496 = vsel %vm495, %v494, %v491
    %497 = vrot.lane.b32.xlu0 %v496, 48
    %v498 = vpop.permute.xlu0 %497
    %vm499 = vcmask 523648
    %s500 = scalar_lea.vmem [#allocation0], 32
    %501 = vst.msk [vmem:[%s500] sm:$0xf] %vm499, %v498
    %s502 = scalar_lea.vmem [#allocation0], 36
    %503 = vst.msk [vmem:[%s502] sm:$0xf0] %vm499, %v498
    %s504 = scalar_lea.vmem %s0, 67
    %s505 = smov 3
    %v506 = vld [vmem:[%s504] ss:$16 sm:%s505]
    %s507 = scalar_lea.vmem %s0, 67
    %s508 = smov 12
    %v509 = vld [vmem:[%s507] ss:$16 sm:%s508]
    %vm510 = vcmask 1043458
    %v511 = vsel %vm510, %v509, %v506
    %s512 = scalar_lea.vmem %s0, 11
    %s513 = smov 48
    %v514 = vld [vmem:[%s512] ss:$16 sm:%s513]
    %vm515 = vcmask 1045508
    %v516 = vsel %vm515, %v514, %v511
    %s517 = scalar_lea.vmem %s0, 11
    %s518 = smov 192
    %v519 = vld [vmem:[%s517] ss:$16 sm:%s518]
    %vm520 = vcmask 1047558
    %v521 = vsel %vm520, %v519, %v516
    %522 = vrot.lane.b32.xlu0 %v521, 48
    %v523 = vpop.permute.xlu0 %522
    %vm524 = vcmask 523648
    %s525 = scalar_lea.vmem [#allocation0], 16
    %526 = vst.msk [vmem:[%s525] sm:$0xf] %vm524, %v523
    %s527 = scalar_lea.vmem [#allocation0], 20
    %528 = vst.msk [vmem:[%s527] sm:$0xf0] %vm524, %v523
    %s529 = scalar_lea.vmem %s0, 195
    %s530 = smov 3
    %v531 = vld [vmem:[%s529] ss:$16 sm:%s530]
    %s532 = scalar_lea.vmem %s0, 195
    %s533 = smov 12
    %v534 = vld [vmem:[%s532] ss:$16 sm:%s533]
    %vm535 = vcmask 1043458
    %v536 = vsel %vm535, %v534, %v531
    %s537 = scalar_lea.vmem %s0, 139
    %s538 = smov 48
    %v539 = vld [vmem:[%s537] ss:$16 sm:%s538]
    %vm540 = vcmask 1045508
    %v541 = vsel %vm540, %v539, %v536
    %s542 = scalar_lea.vmem %s0, 139
    %s543 = smov 192
    %v544 = vld [vmem:[%s542] ss:$16 sm:%s543]
    %vm545 = vcmask 1047558
    %v546 = vsel %vm545, %v544, %v541
    %547 = vrot.lane.b32.xlu0 %v546, 48
    %v548 = vpop.permute.xlu0 %547
    %vm549 = vcmask 523648
    %s550 = scalar_lea.vmem [#allocation0], 48
    %551 = vst.msk [vmem:[%s550] sm:$0xf] %vm549, %v548
    %s552 = scalar_lea.vmem [#allocation0], 52
    %553 = vst.msk [vmem:[%s552] sm:$0xf0] %vm549, %v548
    %s554 = scalar_lea.vmem %s0, 2
    %s555 = smov 3
    %v556 = vld [vmem:[%s554] ss:$16 sm:%s555]
    %s557 = scalar_lea.vmem %s0, 2
    %s558 = smov 12
    %v559 = vld [vmem:[%s557] ss:$16 sm:%s558]
    %vm560 = vcmask 1043458
    %v561 = vsel %vm560, %v559, %v556
    %s562 = scalar_lea.vmem %s0, 4294967242
    %s563 = smov 48
    %v564 = vld [vmem:[%s562] ss:$16 sm:%s563]
    %vm565 = vcmask 1045508
    %v566 = vsel %vm565, %v564, %v561
    %s567 = scalar_lea.vmem %s0, 4294967242
    %s568 = smov 192
    %v569 = vld [vmem:[%s567] ss:$16 sm:%s568]
    %vm570 = vcmask 1047558
    %v571 = vsel %vm570, %v569, %v566
    %572 = vrot.lane.b32.xlu0 %v571, 32
    %v573 = vpop.permute.xlu0 %572
    %vm574 = vcmask 392448
    %575 = vst.msk [vmem:[#allocation0] sm:$0xf] %vm574, %v573
    %s576 = scalar_lea.vmem [#allocation0], 4
    %577 = vst.msk [vmem:[%s576] sm:$0xf0] %vm574, %v573
    %s578 = scalar_lea.vmem %s0, 130
    %s579 = smov 3
    %v580 = vld [vmem:[%s578] ss:$16 sm:%s579]
    %s581 = scalar_lea.vmem %s0, 130
    %s582 = smov 12
    %v583 = vld [vmem:[%s581] ss:$16 sm:%s582]
    %vm584 = vcmask 1043458
    %v585 = vsel %vm584, %v583, %v580
    %s586 = scalar_lea.vmem %s0, 74
    %s587 = smov 48
    %v588 = vld [vmem:[%s586] ss:$16 sm:%s587]
    %vm589 = vcmask 1045508
    %v590 = vsel %vm589, %v588, %v585
    %s591 = scalar_lea.vmem %s0, 74
    %s592 = smov 192
    %v593 = vld [vmem:[%s591] ss:$16 sm:%s592]
    %vm594 = vcmask 1047558
    %v595 = vsel %vm594, %v593, %v590
    %596 = vrot.lane.b32.xlu0 %v595, 32
    %v597 = vpop.permute.xlu0 %596
    %vm598 = vcmask 392448
    %s599 = scalar_lea.vmem [#allocation0], 32
    %600 = vst.msk [vmem:[%s599] sm:$0xf] %vm598, %v597
    %s601 = scalar_lea.vmem [#allocation0], 36
    %602 = vst.msk [vmem:[%s601] sm:$0xf0] %vm598, %v597
    %s603 = scalar_lea.vmem %s0, 66
    %s604 = smov 3
    %v605 = vld [vmem:[%s603] ss:$16 sm:%s604]
    %s606 = scalar_lea.vmem %s0, 66
    %s607 = smov 12
    %v608 = vld [vmem:[%s606] ss:$16 sm:%s607]
    %vm609 = vcmask 1043458
    %v610 = vsel %vm609, %v608, %v605
    %s611 = scalar_lea.vmem %s0, 10
    %s612 = smov 48
    %v613 = vld [vmem:[%s611] ss:$16 sm:%s612]
    %vm614 = vcmask 1045508
    %v615 = vsel %vm614, %v613, %v610
    %s616 = scalar_lea.vmem %s0, 10
    %s617 = smov 192
    %v618 = vld [vmem:[%s616] ss:$16 sm:%s617]
    %vm619 = vcmask 1047558
    %v620 = vsel %vm619, %v618, %v615
    %621 = vrot.lane.b32.xlu0 %v620, 32
    %v622 = vpop.permute.xlu0 %621
    %vm623 = vcmask 392448
    %s624 = scalar_lea.vmem [#allocation0], 16
    %625 = vst.msk [vmem:[%s624] sm:$0xf] %vm623, %v622
    %s626 = scalar_lea.vmem [#allocation0], 20
    %627 = vst.msk [vmem:[%s626] sm:$0xf0] %vm623, %v622
    %s628 = scalar_lea.vmem %s0, 194
    %s629 = smov 3
    %v630 = vld [vmem:[%s628] ss:$16 sm:%s629]
    %s631 = scalar_lea.vmem %s0, 194
    %s632 = smov 12
    %v633 = vld [vmem:[%s631] ss:$16 sm:%s632]
    %vm634 = vcmask 1043458
    %v635 = vsel %vm634, %v633, %v630
    %s636 = scalar_lea.vmem %s0, 138
    %s637 = smov 48
    %v638 = vld [vmem:[%s636] ss:$16 sm:%s637]
    %vm639 = vcmask 1045508
    %v640 = vsel %vm639, %v638, %v635
    %s641 = scalar_lea.vmem %s0, 138
    %s642 = smov 192
    %v643 = vld [vmem:[%s641] ss:$16 sm:%s642]
    %vm644 = vcmask 1047558
    %v645 = vsel %vm644, %v643, %v640
    %646 = vrot.lane.b32.xlu0 %v645, 32
    %v647 = vpop.permute.xlu0 %646
    %vm648 = vcmask 392448
    %s649 = scalar_lea.vmem [#allocation0], 48
    %650 = vst.msk [vmem:[%s649] sm:$0xf] %vm648, %v647
    %s651 = scalar_lea.vmem [#allocation0], 52
    %652 = vst.msk [vmem:[%s651] sm:$0xf0] %vm648, %v647
    %s653 = scalar_lea.vmem %s0, 1
    %s654 = smov 3
    %v655 = vld [vmem:[%s653] ss:$16 sm:%s654]
    %s656 = scalar_lea.vmem %s0, 1
    %s657 = smov 12
    %v658 = vld [vmem:[%s656] ss:$16 sm:%s657]
    %vm659 = vcmask 1043458
    %v660 = vsel %vm659, %v658, %v655
    %s661 = scalar_lea.vmem %s0, 4294967241
    %s662 = smov 48
    %v663 = vld [vmem:[%s661] ss:$16 sm:%s662]
    %vm664 = vcmask 1045508
    %v665 = vsel %vm664, %v663, %v660
    %s666 = scalar_lea.vmem %s0, 4294967241
    %s667 = smov 192
    %v668 = vld [vmem:[%s666] ss:$16 sm:%s667]
    %vm669 = vcmask 1047558
    %v670 = vsel %vm669, %v668, %v665
    %671 = vrot.lane.b32.xlu0 %v670, 16
    %v672 = vpop.permute.xlu0 %671
    %vm673 = vcmask 261248
    %674 = vst.msk [vmem:[#allocation0] sm:$0xf] %vm673, %v672
    %s675 = scalar_lea.vmem [#allocation0], 4
    %676 = vst.msk [vmem:[%s675] sm:$0xf0] %vm673, %v672
    %s677 = scalar_lea.vmem %s0, 129
    %s678 = smov 3
    %v679 = vld [vmem:[%s677] ss:$16 sm:%s678]
    %s680 = scalar_lea.vmem %s0, 129
    %s681 = smov 12
    %v682 = vld [vmem:[%s680] ss:$16 sm:%s681]
    %vm683 = vcmask 1043458
    %v684 = vsel %vm683, %v682, %v679
    %s685 = scalar_lea.vmem %s0, 73
    %s686 = smov 48
    %v687 = vld [vmem:[%s685] ss:$16 sm:%s686]
    %vm688 = vcmask 1045508
    %v689 = vsel %vm688, %v687, %v684
    %s690 = scalar_lea.vmem %s0, 73
    %s691 = smov 192
    %v692 = vld [vmem:[%s690] ss:$16 sm:%s691]
    %vm693 = vcmask 1047558
    %v694 = vsel %vm693, %v692, %v689
    %695 = vrot.lane.b32.xlu0 %v694, 16
    %v696 = vpop.permute.xlu0 %695
    %vm697 = vcmask 261248
    %s698 = scalar_lea.vmem [#allocation0], 32
    %699 = vst.msk [vmem:[%s698] sm:$0xf] %vm697, %v696
    %s700 = scalar_lea.vmem [#allocation0], 36
    %701 = vst.msk [vmem:[%s700] sm:$0xf0] %vm697, %v696
    %s702 = scalar_lea.vmem %s0, 65
    %s703 = smov 3
    %v704 = vld [vmem:[%s702] ss:$16 sm:%s703]
    %s705 = scalar_lea.vmem %s0, 65
    %s706 = smov 12
    %v707 = vld [vmem:[%s705] ss:$16 sm:%s706]
    %vm708 = vcmask 1043458
    %v709 = vsel %vm708, %v707, %v704
    %s710 = scalar_lea.vmem %s0, 9
    %s711 = smov 48
    %v712 = vld [vmem:[%s710] ss:$16 sm:%s711]
    %vm713 = vcmask 1045508
    %v714 = vsel %vm713, %v712, %v709
    %s715 = scalar_lea.vmem %s0, 9
    %s716 = smov 192
    %v717 = vld [vmem:[%s715] ss:$16 sm:%s716]
    %vm718 = vcmask 1047558
    %v719 = vsel %vm718, %v717, %v714
    %720 = vrot.lane.b32.xlu0 %v719, 16
    %v721 = vpop.permute.xlu0 %720
    %vm722 = vcmask 261248
    %s723 = scalar_lea.vmem [#allocation0], 16
    %724 = vst.msk [vmem:[%s723] sm:$0xf] %vm722, %v721
    %s725 = scalar_lea.vmem [#allocation0], 20
    %726 = vst.msk [vmem:[%s725] sm:$0xf0] %vm722, %v721
    %s727 = scalar_lea.vmem %s0, 193
    %s728 = smov 3
    %v729 = vld [vmem:[%s727] ss:$16 sm:%s728]
    %s730 = scalar_lea.vmem %s0, 193
    %s731 = smov 12
    %v732 = vld [vmem:[%s730] ss:$16 sm:%s731]
    %vm733 = vcmask 1043458
    %v734 = vsel %vm733, %v732, %v729
    %s735 = scalar_lea.vmem %s0, 137
    %s736 = smov 48
    %v737 = vld [vmem:[%s735] ss:$16 sm:%s736]
    %vm738 = vcmask 1045508
    %v739 = vsel %vm738, %v737, %v734
    %s740 = scalar_lea.vmem %s0, 137
    %s741 = smov 192
    %v742 = vld [vmem:[%s740] ss:$16 sm:%s741]
    %vm743 = vcmask 1047558
    %v744 = vsel %vm743, %v742, %v739
    %745 = vrot.lane.b32.xlu0 %v744, 16
    %v746 = vpop.permute.xlu0 %745
    %vm747 = vcmask 261248
    %s748 = scalar_lea.vmem [#allocation0], 48
    %749 = vst.msk [vmem:[%s748] sm:$0xf] %vm747, %v746
    %s750 = scalar_lea.vmem [#allocation0], 52
    %751 = vst.msk [vmem:[%s750] sm:$0xf0] %vm747, %v746
    %s753 = sshllo.u32 0, 4
    %v755 = vld [vmem:[#allocation0] sm:%s753]
    %s756 = sshllo.u32 0, 4
    %757 = vst [vmem:[%s1] sm:%s756] %v755
    %s758 = scalar_lea.vmem [#allocation0], 8
    %v759 = vld [vmem:[%s758] sm:%s753]
    %s760 = sshllo.u32 0, 4
    %s761 = scalar_lea.vmem %s1, 4
    %762 = vst [vmem:[%s761] sm:%s760] %v759
    %s763 = scalar_lea.vmem [#allocation0], 16
    %v764 = vld [vmem:[%s763] sm:%s753]
    %s765 = sshllo.u32 0, 4
    %s766 = smul.addr 4, 2
    %s767 = scalar_lea.vmem %s1, %s766
    %768 = vst [vmem:[%s767] sm:%s765] %v764
    %s769 = scalar_lea.vmem [#allocation0], 24
    %v770 = vld [vmem:[%s769] sm:%s753]
    %s771 = sshllo.u32 0, 4
    %s772 = smul.addr 4, 3
    %s773 = scalar_lea.vmem %s1, %s772
    %774 = vst [vmem:[%s773] sm:%s771] %v770
    %s775 = scalar_lea.vmem [#allocation0], 32
    %v776 = vld [vmem:[%s775] sm:%s753]
    %s777 = sshllo.u32 0, 4
    %s778 = smul.addr 4, 4
    %s779 = scalar_lea.vmem %s1, %s778
    %780 = vst [vmem:[%s779] sm:%s777] %v776
    %s781 = scalar_lea.vmem [#allocation0], 40
    %v782 = vld [vmem:[%s781] sm:%s753]
    %s783 = sshllo.u32 0, 4
    %s784 = smul.addr 4, 5
    %s785 = scalar_lea.vmem %s1, %s784
    %786 = vst [vmem:[%s785] sm:%s783] %v782
    %s787 = scalar_lea.vmem [#allocation0], 48
    %v788 = vld [vmem:[%s787] sm:%s753]
    %s789 = sshllo.u32 0, 4
    %s790 = smul.addr 4, 6
    %s791 = scalar_lea.vmem %s1, %s790
    %792 = vst [vmem:[%s791] sm:%s789] %v788
    %s793 = scalar_lea.vmem [#allocation0], 56
    %v794 = vld [vmem:[%s793] sm:%s753]
    %s795 = sshllo.u32 0, 4
    %s796 = smul.addr 4, 7
    %s797 = scalar_lea.vmem %s1, %s796
    %798 = vst [vmem:[%s797] sm:%s795] %v794

// kernel: fwd.2
$region0: #{fwd.2}
  #allocation0 [shape = 'u32[]', space=smem, size = 0x4, offset = 0x4, fixed_abs, tag = 'smem constant byte address 0x4 - core index']
  #allocation1 [shape = 'u32[144,128]{1,0:T(1,128)}', space=vmem, size = 0x12000, scoped, tag = 'internal scratch']
  #allocation2 [shape = 'f32[80,512]{1,0:T(8,128)}', space=vmem, size = 0x28000, scoped, tag = 'scratch operand']
  %s0 = inlined_call_operand.vmem [shape: f32[4,4,256], index: 0, kind: input, shape index: {}]
  %s1 = inlined_call_operand.vmem [shape: f32[4,4,256], index: 1, kind: input, shape index: {}]
  %s2 = inlined_call_operand.vmem [shape: f32[4,4,256], index: 2, kind: input, shape index: {}]
  %s3 = inlined_call_operand.vmem [shape: f32[4,4,256], index: 3, kind: input, shape index: {}]
  %s4 = inlined_call_operand.vmem [shape: f32[9,256], index: 4, kind: input, shape index: {}]
  %s5 = inlined_call_operand.vmem [shape: f32[8,19], index: 5, kind: input, shape index: {}]
  %s6 = inlined_call_operand.vmem [shape: f32[8,80], index: 6, kind: input, shape index: {}]
  %s7 = inlined_call_operand.vmem [shape: f32[4,4,256], index: 7, kind: output, shape index: {0}]
  %s8 = inlined_call_operand.vmem [shape: f32[4,4,256], index: 8, kind: output, shape index: {1}]
  %9 = xla_tuple %s7, %s8
  %s10 = sld [smem:[#allocation0]]
  $region69: #{fwd.2} parent=0
    _
  %s12 = ssub.s32 1, %s10
  %s13 = scalar_select 0, %s12, %s10
  loop: start=0, step=1, limit=4
  $region2: #{fwd.2} parent=0 // loop_pre_header
    _
  $region3: #{fwd.2} parent=0 // loop_header
    %s15 = sphi 0, %s19
    %p16 = scmp.ge.s32.totalorder %s15, 4
    %s25 = sphi 0, %s27
    %s28 = sphi 0, %s25
    %s29 = sphi 0, %s28
    %s45 = sphi 0, %s29
    %s51 = sphi 0, %s53
    %s54 = sphi 0, %s51
    %s55 = sphi 0, %s54
    %s71 = sphi 0, %s55
    %s77 = sphi 0, %s79
    %s80 = sphi 0, %s77
    %s81 = sphi 0, %s80
    %s97 = sphi 0, %s81
    %s103 = sphi 0, %s105
    %s106 = sphi 0, %s103
    %s107 = sphi 0, %s106
    %s123 = sphi 0, %s107
    %s127 = sphi 0, %s127
    %s129 = sphi 0, %s127
    %s130 = sphi 0, %s129
    %s144 = sphi 0, %s130
    %s148 = sphi 0, %s148
    %s150 = sphi 0, %s148
    %s151 = sphi 0, %s150
    %s165 = sphi 0, %s151
    %s169 = sphi 0, %s169
    %s171 = sphi 0, %s169
    %s172 = sphi 0, %s171
    %s186 = sphi 0, %s172
    %s192 = sphi 0, %s194
    %s195 = sphi 0, %s192
    %s196 = sphi 0, %s195
    %s212 = sphi 0, %s196
    %s218 = sphi 0, %s220
    %s221 = sphi 0, %s218
    %s222 = sphi 0, %s221
    %s238 = sphi 0, %s222
  $region4: #{fwd.2} parent=0 // loop_header_branch
    %18 = sbr.rel (%p16) target = $region8
  $region5: #{fwd.2} parent=0 // loop_body
    %s20 = ssub.s32 %s15, 1
    %s21 = ssub.s32 %s15, 2
    %s22 = sadd.s32 %s15, 1
    %s23 = ssub.s32 %s15, %s22
    %p24 = scmp.eq.s32.totalorder %s23, 0
    %s26 = sadd.s32 %s25, 1
    %s27 = scalar_select %p24, %s25, %s26
    %p30 = pneg %p24
    %p31 = scmp.eq.s32.totalorder %s15, 1
    %p32 = por %p30, %p31
    %p33 = scmp.ne.s32.totalorder %s25, %s28
    %p34 = scmp.eq.s32.totalorder %s15, 0
    %p35 = por %p33, %p34
    %p36 = scmp.ne.s32.totalorder %s25, %s28
    %p37 = scmp.eq.s32.totalorder %s20, 1
    %p38 = por %p36, %p37
    %p39 = scmp.ne.s32.totalorder %s28, %s29
    %p40 = scmp.eq.s32.totalorder %s20, 0
    %p41 = por %p39, %p40
    %p42 = scmp.ne.s32.totalorder %s28, %s29
    %p43 = scmp.eq.s32.totalorder %s21, 1
    %p44 = por %p42, %p43
    %p46 = scmp.ne.s32.totalorder %s29, %s45
    %p47 = scmp.eq.s32.totalorder %s21, 0
    %p48 = por %p46, %p47
    %s49 = ssub.s32 %s15, %s22
    %p50 = scmp.eq.s32.totalorder %s49, 0
    %s52 = sadd.s32 %s51, 1
    %s53 = scalar_select %p50, %s51, %s52
    %p56 = pneg %p50
    %p57 = scmp.eq.s32.totalorder %s15, 1
    %p58 = por %p56, %p57
    %p59 = scmp.ne.s32.totalorder %s51, %s54
    %p60 = scmp.eq.s32.totalorder %s15, 0
    %p61 = por %p59, %p60
    %p62 = scmp.ne.s32.totalorder %s51, %s54
    %p63 = scmp.eq.s32.totalorder %s20, 1
    %p64 = por %p62, %p63
    %p65 = scmp.ne.s32.totalorder %s54, %s55
    %p66 = scmp.eq.s32.totalorder %s20, 0
    %p67 = por %p65, %p66
    %p68 = scmp.ne.s32.totalorder %s54, %s55
    %p69 = scmp.eq.s32.totalorder %s21, 1
    %p70 = por %p68, %p69
    %p72 = scmp.ne.s32.totalorder %s55, %s71
    %p73 = scmp.eq.s32.totalorder %s21, 0
    %p74 = por %p72, %p73
    %s75 = ssub.s32 %s15, %s22
    %p76 = scmp.eq.s32.totalorder %s75, 0
    %s78 = sadd.s32 %s77, 1
    %s79 = scalar_select %p76, %s77, %s78
    %p82 = pneg %p76
    %p83 = scmp.eq.s32.totalorder %s15, 1
    %p84 = por %p82, %p83
    %p85 = scmp.ne.s32.totalorder %s77, %s80
    %p86 = scmp.eq.s32.totalorder %s15, 0
    %p87 = por %p85, %p86
    %p88 = scmp.ne.s32.totalorder %s77, %s80
    %p89 = scmp.eq.s32.totalorder %s20, 1
    %p90 = por %p88, %p89
    %p91 = scmp.ne.s32.totalorder %s80, %s81
    %p92 = scmp.eq.s32.totalorder %s20, 0
    %p93 = por %p91, %p92
    %p94 = scmp.ne.s32.totalorder %s80, %s81
    %p95 = scmp.eq.s32.totalorder %s21, 1
    %p96 = por %p94, %p95
    %p98 = scmp.ne.s32.totalorder %s81, %s97
    %p99 = scmp.eq.s32.totalorder %s21, 0
    %p100 = por %p98, %p99
    %s101 = ssub.s32 %s15, %s22
    %p102 = scmp.eq.s32.totalorder %s101, 0
    %s104 = sadd.s32 %s103, 1
    %s105 = scalar_select %p102, %s103, %s104
    %p108 = pneg %p102
    %p109 = scmp.eq.s32.totalorder %s15, 1
    %p110 = por %p108, %p109
    %p111 = scmp.ne.s32.totalorder %s103, %s106
    %p112 = scmp.eq.s32.totalorder %s15, 0
    %p113 = por %p111, %p112
    %p114 = scmp.ne.s32.totalorder %s103, %s106
    %p115 = scmp.eq.s32.totalorder %s20, 1
    %p116 = por %p114, %p115
    %p117 = scmp.ne.s32.totalorder %s106, %s107
    %p118 = scmp.eq.s32.totalorder %s20, 0
    %p119 = por %p117, %p118
    %p120 = scmp.ne.s32.totalorder %s106, %s107
    %p121 = scmp.eq.s32.totalorder %s21, 1
    %p122 = por %p120, %p121
    %p124 = scmp.ne.s32.totalorder %s107, %s123
    %p125 = scmp.eq.s32.totalorder %s21, 0
    %p126 = por %p124, %p125
    %s128 = sadd.s32 %s127, 1
    %p131 = scmp.eq.s32.totalorder %s15, 1
    %p132 = scmp.ne.s32.totalorder %s127, %s129
    %p133 = scmp.eq.s32.totalorder %s15, 0
    %p134 = por %p132, %p133
    %p135 = scmp.ne.s32.totalorder %s127, %s129
    %p136 = scmp.eq.s32.totalorder %s20, 1
    %p137 = por %p135, %p136
    %p138 = scmp.ne.s32.totalorder %s129, %s130
    %p139 = scmp.eq.s32.totalorder %s20, 0
    %p140 = por %p138, %p139
    %p141 = scmp.ne.s32.totalorder %s129, %s130
    %p142 = scmp.eq.s32.totalorder %s21, 1
    %p143 = por %p141, %p142
    %p145 = scmp.ne.s32.totalorder %s130, %s144
    %p146 = scmp.eq.s32.totalorder %s21, 0
    %p147 = por %p145, %p146
    %s149 = sadd.s32 %s148, 1
    %p152 = scmp.eq.s32.totalorder %s15, 1
    %p153 = scmp.ne.s32.totalorder %s148, %s150
    %p154 = scmp.eq.s32.totalorder %s15, 0
    %p155 = por %p153, %p154
    %p156 = scmp.ne.s32.totalorder %s148, %s150
    %p157 = scmp.eq.s32.totalorder %s20, 1
    %p158 = por %p156, %p157
    %p159 = scmp.ne.s32.totalorder %s150, %s151
    %p160 = scmp.eq.s32.totalorder %s20, 0
    %p161 = por %p159, %p160
    %p162 = scmp.ne.s32.totalorder %s150, %s151
    %p163 = scmp.eq.s32.totalorder %s21, 1
    %p164 = por %p162, %p163
    %p166 = scmp.ne.s32.totalorder %s151, %s165
    %p167 = scmp.eq.s32.totalorder %s21, 0
    %p168 = por %p166, %p167
    %s170 = sadd.s32 %s169, 1
    %p173 = scmp.eq.s32.totalorder %s15, 1
    %p174 = scmp.ne.s32.totalorder %s169, %s171
    %p175 = scmp.eq.s32.totalorder %s15, 0
    %p176 = por %p174, %p175
    %p177 = scmp.ne.s32.totalorder %s169, %s171
    %p178 = scmp.eq.s32.totalorder %s20, 1
    %p179 = por %p177, %p178
    %p180 = scmp.ne.s32.totalorder %s171, %s172
    %p181 = scmp.eq.s32.totalorder %s20, 0
    %p182 = por %p180, %p181
    %p183 = scmp.ne.s32.totalorder %s171, %s172
    %p184 = scmp.eq.s32.totalorder %s21, 1
    %p185 = por %p183, %p184
    %p187 = scmp.ne.s32.totalorder %s172, %s186
    %p188 = scmp.eq.s32.totalorder %s21, 0
    %p189 = por %p187, %p188
    %s190 = ssub.s32 %s15, %s22
    %p191 = scmp.eq.s32.totalorder %s190, 0
    %s193 = sadd.s32 %s192, 1
    %s194 = scalar_select %p191, %s192, %s193
    %p197 = pneg %p191
    %p198 = scmp.eq.s32.totalorder %s15, 1
    %p199 = por %p197, %p198
    %p200 = scmp.ne.s32.totalorder %s192, %s195
    %p201 = scmp.eq.s32.totalorder %s15, 0
    %p202 = por %p200, %p201
    %p203 = scmp.ne.s32.totalorder %s192, %s195
    %p204 = scmp.eq.s32.totalorder %s20, 1
    %p205 = por %p203, %p204
    %p206 = scmp.ne.s32.totalorder %s195, %s196
    %p207 = scmp.eq.s32.totalorder %s20, 0
    %p208 = por %p206, %p207
    %p209 = scmp.ne.s32.totalorder %s195, %s196
    %p210 = scmp.eq.s32.totalorder %s21, 1
    %p211 = por %p209, %p210
    %p213 = scmp.ne.s32.totalorder %s196, %s212
    %p214 = scmp.eq.s32.totalorder %s21, 0
    %p215 = por %p213, %p214
    %s216 = ssub.s32 %s15, %s22
    %p217 = scmp.eq.s32.totalorder %s216, 0
    %s219 = sadd.s32 %s218, 1
    %s220 = scalar_select %p217, %s218, %s219
    %p223 = pneg %p217
    %p224 = scmp.eq.s32.totalorder %s15, 1
    %p225 = por %p223, %p224
    %p226 = scmp.ne.s32.totalorder %s218, %s221
    %p227 = scmp.eq.s32.totalorder %s15, 0
    %p228 = por %p226, %p227
    %p229 = scmp.ne.s32.totalorder %s218, %s221
    %p230 = scmp.eq.s32.totalorder %s20, 1
    %p231 = por %p229, %p230
    %p232 = scmp.ne.s32.totalorder %s221, %s222
    %p233 = scmp.eq.s32.totalorder %s20, 0
    %p234 = por %p232, %p233
    %p235 = scmp.ne.s32.totalorder %s221, %s222
    %p236 = scmp.eq.s32.totalorder %s21, 1
    %p237 = por %p235, %p236
    %p239 = scmp.ne.s32.totalorder %s222, %s238
    %p240 = scmp.eq.s32.totalorder %s21, 0
    %p241 = por %p239, %p240
    %p242 = scmp.le.s32.totalorder 1, %s15
    %p243 = scmp.lt.s32.totalorder %s15, 3
    %p244 = pnand %p242, %p243
    %p245 = pneg %p244
    // Predicated region
    $region9: #{fwd.2} parent=5 // pred_check
      _
    $region10: #{fwd.2} parent=5 // pred_check_branch
      %247 = sbr.rel (%p244) target = $region12
    $region11: #{fwd.2} parent=5 // pred_region
      %s248 = ssub.s32 %s15, 1
      // Predicated region
      $region13: #{fwd.2} parent=11 // pred_check
        %p249 = pneg %p140
      $region14: #{fwd.2} parent=11 // pred_check_branch
        %251 = sbr.rel (%p249) target = $region16
      $region15: #{fwd.2} parent=11 // pred_region
        _
      $region16: #{fwd.2} parent=11 // pred_fallthru
        _
      // Predicated region
      $region17: #{fwd.2} parent=11 // pred_check
        %p252 = pneg %p161
      $region18: #{fwd.2} parent=11 // pred_check_branch
        %254 = sbr.rel (%p252) target = $region20
      $region19: #{fwd.2} parent=11 // pred_region
        _
      $region20: #{fwd.2} parent=11 // pred_fallthru
        _
      // Predicated region
      $region21: #{fwd.2} parent=11 // pred_check
        %p255 = pneg %p182
      $region22: #{fwd.2} parent=11 // pred_check_branch
        %257 = sbr.rel (%p255) target = $region24
      $region23: #{fwd.2} parent=11 // pred_region
        _
      $region24: #{fwd.2} parent=11 // pred_fallthru
        _
    $region12: #{fwd.2} parent=5 // pred_fallthru
      _
    %p258 = scmp.lt.s32.totalorder %s15, 2
    // Predicated region
    $region25: #{fwd.2} parent=5 // pred_check
      %p259 = pneg %p258
    $region26: #{fwd.2} parent=5 // pred_check_branch
      %261 = sbr.rel (%p259) target = $region28
    $region27: #{fwd.2} parent=5 // pred_region
      // Predicated region
      $region29: #{fwd.2} parent=27 // pred_check
        %p262 = pneg %p35
      $region30: #{fwd.2} parent=27 // pred_check_branch
        %264 = sbr.rel (%p262) target = $region32
      $region31: #{fwd.2} parent=27 // pred_region
        %s265 = smul.u32 2, %s15
        %p266 = scmp.lt.s32.totalorder %s265, 3
        %s267 = scalar_select %p266, %s265, 3
        %s268 = smul.addr %s267, 2
        %s269 = smul.addr %s268, 4
        %s270 = scalar_lea.vmem %s0, %s269
        %s271 = smul.u32 2, %s15
      $region32: #{fwd.2} parent=27 // pred_fallthru
        _
      // Predicated region
      $region33: #{fwd.2} parent=27 // pred_check
        %p272 = pneg %p61
      $region34: #{fwd.2} parent=27 // pred_check_branch
        %274 = sbr.rel (%p272) target = $region36
      $region35: #{fwd.2} parent=27 // pred_region
        %s275 = smul.u32 2, %s15
        %p276 = scmp.lt.s32.totalorder %s275, 3
        %s277 = scalar_select %p276, %s275, 3
        %s278 = smul.addr %s277, 2
        %s279 = smul.addr %s278, 4
        %s280 = scalar_lea.vmem %s1, %s279
        %s281 = smul.u32 2, %s15
      $region36: #{fwd.2} parent=27 // pred_fallthru
        _
      // Predicated region
      $region37: #{fwd.2} parent=27 // pred_check
        %p282 = pneg %p87
      $region38: #{fwd.2} parent=27 // pred_check_branch
        %284 = sbr.rel (%p282) target = $region40
      $region39: #{fwd.2} parent=27 // pred_region
        %s285 = smul.u32 2, %s15
        %p286 = scmp.lt.s32.totalorder %s285, 3
        %s287 = scalar_select %p286, %s285, 3
        %s288 = smul.addr %s287, 2
        %s289 = smul.addr %s288, 4
        %s290 = scalar_lea.vmem %s2, %s289
        %s291 = smul.u32 2, %s15
      $region40: #{fwd.2} parent=27 // pred_fallthru
        _
      // Predicated region
      $region41: #{fwd.2} parent=27 // pred_check
        %p292 = pneg %p113
      $region42: #{fwd.2} parent=27 // pred_check_branch
        %294 = sbr.rel (%p292) target = $region44
      $region43: #{fwd.2} parent=27 // pred_region
        %s295 = smul.u32 2, %s15
        %p296 = scmp.lt.s32.totalorder %s295, 3
        %s297 = scalar_select %p296, %s295, 3
        %s298 = smul.addr %s297, 2
        %s299 = smul.addr %s298, 4
        %s300 = scalar_lea.vmem %s3, %s299
        %s301 = smul.u32 2, %s15
      $region44: #{fwd.2} parent=27 // pred_fallthru
        _
    $region28: #{fwd.2} parent=5 // pred_fallthru
      _
    %p302 = scmp.le.s32.totalorder 1, %s15
    %p303 = scmp.lt.s32.totalorder %s15, 3
    %p304 = pnand %p302, %p303
    %p305 = pneg %p304
    // Predicated region
    $region45: #{fwd.2} parent=5 // pred_check
      _
    $region46: #{fwd.2} parent=5 // pred_check_branch
      %307 = sbr.rel (%p304) target = $region48
    $region47: #{fwd.2} parent=5 // pred_region
      %s308 = ssub.s32 %s15, 1
      %s309 = smul.u32 2, %s20
      %p310 = scmp.lt.s32.totalorder %s309, 3
      %s311 = scalar_select %p310, %s309, 3
      %s312 = smul.addr %s311, 2
      %s313 = smul.addr %s312, 4
      %s314 = scalar_lea.vmem %s0, %s313
      %p315 = pneg %p41
      %p316 = pneg %p38
      %s317 = smul.u32 2, %s20
      %p318 = scmp.lt.s32.totalorder %s317, 3
      %s319 = scalar_select %p318, %s317, 3
      %s320 = smul.addr %s319, 2
      %s321 = smul.addr %s320, 4
      %s322 = scalar_lea.vmem %s1, %s321
      %p323 = pneg %p67
      %p324 = pneg %p64
      %s325 = smul.u32 2, %s20
      %p326 = scmp.lt.s32.totalorder %s325, 3
      %s327 = scalar_select %p326, %s325, 3
      %s328 = smul.addr %s327, 2
      %s329 = smul.addr %s328, 4
      %s330 = scalar_lea.vmem %s2, %s329
      %p331 = pneg %p93
      %p332 = pneg %p90
      %s333 = smul.u32 2, %s20
      %p334 = scmp.lt.s32.totalorder %s333, 3
      %s335 = scalar_select %p334, %s333, 3
      %s336 = smul.addr %s335, 2
      %s337 = smul.addr %s336, 4
      %s338 = scalar_lea.vmem %s3, %s337
      %p339 = pneg %p119
      %p340 = pneg %p116
      %p341 = pneg %p140
      %p342 = pneg %p137
      %p343 = pneg %p161
      %p344 = pneg %p158
      %p345 = pneg %p182
      %p346 = pneg %p179
      %p347 = pneg %p208
      %p348 = pneg %p205
      %s349 = smul.u32 2, %s20
      %p350 = scmp.lt.s32.totalorder %s349, 3
      %s351 = scalar_select %p350, %s349, 3
      %s352 = smul.addr %s351, 2
      %s353 = smul.addr %s352, 4
      %s354 = scalar_lea.vmem %s7, %s353
      %p355 = pneg %p234
      %p356 = pneg %p231
      %s357 = smul.u32 2, %s20
      %p358 = scmp.lt.s32.totalorder %s357, 3
      %s359 = scalar_select %p358, %s357, 3
      %s360 = smul.addr %s359, 2
      %s361 = smul.addr %s360, 4
      %s362 = scalar_lea.vmem %s8, %s361
      %s363 = smul.u32 2, %s20
      %p364 = scmp.lt.s32.totalorder %s363, 3
      %s365 = scalar_select %p364, %s363, 3
      %s366 = smul.addr %s365, 2
      %s367 = smul.addr %s366, 4
      %s368 = scalar_lea.vmem %s0, %s367
      %s369 = smul.u32 2, %s20
      %s370 = smul.u32 2, %s20
      %p371 = scmp.lt.s32.totalorder %s370, 3
      %s372 = scalar_select %p371, %s370, 3
      %s373 = smul.addr %s372, 2
      %s374 = smul.addr %s373, 4
      %s375 = scalar_lea.vmem %s1, %s374
      %s376 = smul.u32 2, %s20
      %s377 = smul.u32 2, %s20
      %p378 = scmp.lt.s32.totalorder %s377, 3
      %s379 = scalar_select %p378, %s377, 3
      %s380 = smul.addr %s379, 2
      %s381 = smul.addr %s380, 4
      %s382 = scalar_lea.vmem %s2, %s381
      %s383 = smul.u32 2, %s20
      %s384 = smul.u32 2, %s20
      %p385 = scmp.lt.s32.totalorder %s384, 3
      %s386 = scalar_select %p385, %s384, 3
      %s387 = smul.addr %s386, 2
      %s388 = smul.addr %s387, 4
      %s389 = scalar_lea.vmem %s3, %s388
      %s390 = smul.u32 2, %s20
      %s391 = smul.u32 2, %s20
      %p392 = scmp.lt.s32.totalorder %s391, 3
      %s393 = scalar_select %p392, %s391, 3
      %s394 = smul.addr %s393, 2
      %s395 = smul.addr %s394, 4
      %s396 = scalar_lea.vmem %s7, %s395
      %s397 = smul.u32 2, %s20
      %s398 = smul.u32 2, %s20
      %p399 = scmp.lt.s32.totalorder %s398, 3
      %s400 = scalar_select %p399, %s398, 3
      %s401 = smul.addr %s400, 2
      %s402 = smul.addr %s401, 4
      %s403 = scalar_lea.vmem %s8, %s402
      %s404 = smul.u32 2, %s20
      %v405 = vld [vmem:[%s4] sm:$0xff]
      %v406 = vld [vmem:[%s4 + $0x8] sm:$0xff]
      %v407 = vld [vmem:[%s4 + $0x10] sm:$0x1]
      %v408 = vld [vmem:[%s4 + $0x18] sm:$0x1]
      %v409 = vld [vmem:[%s5] sm:$0xff]
      %411 = vset.pattern.permute.xlu0 18
      %412 = vperm.xlu0 %411, %v409
      %v413 = vpop.permute.xlu0 %412
      %v415 = vlaneseq
      %vm416 = vcmp.ge.s32.totalorder %v415, 0
      %vm417 = vcmp.lt.s32.totalorder %v415, 512
      %vm418 = vmand %vm416, %vm417
      %s419 = scalar_lea.vmem [#allocation2], 288
      %420 = vst.msk [vmem:[%s419] ss:$8 sm:$0xf] %vm418, 1.0
      %421 = vst.msk [vmem:[%s419] ss:$8 sm:$0x0] %vm418, 1.0
      %422 = vst [vmem:[#allocation2 + $0x120] sm:$0xfe] 0.0
      %423 = vst [vmem:[#allocation2 + $0x128] sm:$0xfe] 0.0
      %424 = vst [vmem:[#allocation2 + $0x130] sm:$0xfe] 0.0
      %425 = vst [vmem:[#allocation2 + $0x138] sm:$0xfe] 0.0
      %v426 = vld [vmem:[%s368] sm:$0xff]
      %v427 = vld [vmem:[%s375] sm:$0xff]
      %v428 = vld [vmem:[%s382] sm:$0xff]
      %v429 = vld [vmem:[%s389] sm:$0xff]
      %v430 = vmul.f32 %v426, %v428
      %v431 = vmul.f32 %v427, %v429
      %v432 = vadd.f32 %v430, %v431
      %v434 = vcombine.high %v432, %v432
      %vm436 = vcmask 1043456
      %v437 = vsel %vm436, %v432, 0.0
      %v438 = vrot.slane %v437, 4
      %v439 = vadd.f32 %v437, %v438
      %v440 = vrot.slane %v439, 2
      %v441 = vadd.f32 %v439, %v440
      %v442 = vrot.slane %v441, 1
      %v443 = vadd.f32 %v441, %v442
      %v444 = vsel %vm436, %v434, 0.0
      %v445 = vrot.slane %v444, 4
      %v446 = vadd.f32 %v444, %v445
      %v447 = vrot.slane %v446, 2
      %v448 = vadd.f32 %v446, %v447
      %v449 = vrot.slane %v448, 1
      %v450 = vadd.f32 %v448, %v449
      %v451 = vmul.f32 %v427, %v428
      %v452 = vmul.f32 %v426, %v429
      %v453 = vsub.f32 %v451, %v452
      %v455 = vcombine.high %v453, %v453
      %v457 = vsel %vm436, %v453, 0.0
      %v458 = vrot.slane %v457, 4
      %v459 = vadd.f32 %v457, %v458
      %v460 = vrot.slane %v459, 2
      %v461 = vadd.f32 %v459, %v460
      %v462 = vrot.slane %v461, 1
      %v463 = vadd.f32 %v461, %v462
      %v464 = vsel %vm436, %v455, 0.0
      %v465 = vrot.slane %v464, 4
      %v466 = vadd.f32 %v464, %v465
      %v467 = vrot.slane %v466, 2
      %v468 = vadd.f32 %v466, %v467
      %v469 = vrot.slane %v468, 1
      %v470 = vadd.f32 %v468, %v469
      %471 = vrot.lane.b32.xlu0 %v443, 17
      %v472 = vpop.permute.xlu0 %471
      %473 = vrot.lane.b32.xlu0 %v450, 17
      %v474 = vpop.permute.xlu0 %473
      %v475 = vlaneseq
      %v476 = vand.u32 %v475, 127
      %vm477 = vcmp.lt.s32.totalorder %v476, 17
      %v478 = vsel %vm477, %v472, %v474
      %v479 = vsel %vm477, %v474, %v472
      %v480 = vmul.f32 %v479, %v405
      %v481 = vmul.f32 %v478, %v406
      %482 = vrot.lane.b32.xlu0 %v463, 17
      %v483 = vpop.permute.xlu0 %482
      %484 = vrot.lane.b32.xlu0 %v470, 17
      %v485 = vpop.permute.xlu0 %484
      %v486 = vsel %vm477, %v483, %v485
      %v487 = vsel %vm477, %v485, %v483
      %v488 = vmul.f32 %v487, %v405
      %v489 = vmul.f32 %v486, %v406
      %490 = vset.pattern.permute.xlu0 0
      %491 = vperm.xlu0 %490, %v409
      %v492 = vpop.permute.xlu0 %491
      %v494 = vlaneseq
      %v495 = vshrl.u32 %v494, 7
      %v496 = vsub.s32 0, %v495
      %v497 = vrot.slane %v480, %v496
      %v498 = vlaneseq
      %v499 = vshrl.u32 %v498, 7
      %v500 = vsub.s32 0, %v499
      %v501 = vrot.slane %v481, %v500
      %v502 = vmul.f32 %v492, %v497
      %v503 = vmul.f32 %v492, %v501
      %v504 = vadd.f32 %v413, %v502
      %v505 = vadd.f32 %v413, %v503
      %506 = vset.pattern.permute.xlu0 1
      %507 = vperm.xlu0 %506, %v409
      %v508 = vpop.permute.xlu0 %507
      %v510 = vlaneseq
      %v511 = vshrl.u32 %v510, 7
      %v512 = vsub.s32 0, %v511
      %v513 = vrot.slane %v488, %v512
      %v514 = vlaneseq
      %v515 = vshrl.u32 %v514, 7
      %v516 = vsub.s32 0, %v515
      %v517 = vrot.slane %v489, %v516
      %v518 = vmul.f32 %v508, %v513
      %v519 = vmul.f32 %v508, %v517
      %v520 = vadd.f32 %v504, %v518
      %v521 = vadd.f32 %v505, %v519
      %522 = vrot.lane.b32.xlu0 %v443, 16
      %v523 = vpop.permute.xlu0 %522
      %524 = vrot.lane.b32.xlu0 %v450, 16
      %v525 = vpop.permute.xlu0 %524
      %vm526 = vcmp.lt.s32.totalorder %v476, 16
      %v527 = vsel %vm526, %v523, %v525
      %v528 = vsel %vm526, %v525, %v523
      %v531 = vrot.slane %v405, 1
      %v532 = vrot.slane %v406, 1
      %v535 = vmul.f32 %v528, %v531
      %v536 = vmul.f32 %v527, %v532
      %537 = vrot.lane.b32.xlu0 %v463, 16
      %v538 = vpop.permute.xlu0 %537
      %539 = vrot.lane.b32.xlu0 %v470, 16
      %v540 = vpop.permute.xlu0 %539
      %v541 = vsel %vm526, %v538, %v540
      %v542 = vsel %vm526, %v540, %v538
      %v543 = vmul.f32 %v542, %v531
      %v544 = vmul.f32 %v541, %v532
      %545 = vset.pattern.permute.xlu0 2
      %546 = vperm.xlu0 %545, %v409
      %v547 = vpop.permute.xlu0 %546
      %v549 = vlaneseq
      %v550 = vshrl.u32 %v549, 7
      %v551 = vsub.s32 0, %v550
      %v552 = vrot.slane %v535, %v551
      %v553 = vlaneseq
      %v554 = vshrl.u32 %v553, 7
      %v555 = vsub.s32 0, %v554
      %v556 = vrot.slane %v536, %v555
      %v557 = vmul.f32 %v547, %v552
      %v558 = vmul.f32 %v547, %v556
      %v559 = vadd.f32 %v520, %v557
      %v560 = vadd.f32 %v521, %v558
      %561 = vset.pattern.permute.xlu0 3
      %562 = vperm.xlu0 %561, %v409
      %v563 = vpop.permute.xlu0 %562
      %v565 = vlaneseq
      %v566 = vshrl.u32 %v565, 7
      %v567 = vsub.s32 0, %v566
      %v568 = vrot.slane %v543, %v567
      %v569 = vlaneseq
      %v570 = vshrl.u32 %v569, 7
      %v571 = vsub.s32 0, %v570
      %v572 = vrot.slane %v544, %v571
      %v573 = vmul.f32 %v563, %v568
      %v574 = vmul.f32 %v563, %v572
      %v575 = vadd.f32 %v559, %v573
      %v576 = vadd.f32 %v560, %v574
      %577 = vrot.lane.b32.xlu0 %v443, 15
      %v578 = vpop.permute.xlu0 %577
      %579 = vrot.lane.b32.xlu0 %v450, 15
      %v580 = vpop.permute.xlu0 %579
      %vm581 = vcmp.lt.s32.totalorder %v476, 15
      %v582 = vsel %vm581, %v578, %v580
      %v583 = vsel %vm581, %v580, %v578
      %v584 = vrot.slane %v405, 2
      %v585 = vrot.slane %v406, 2
      %v588 = vmul.f32 %v583, %v584
      %v589 = vmul.f32 %v582, %v585
      %590 = vrot.lane.b32.xlu0 %v463, 15
      %v591 = vpop.permute.xlu0 %590
      %592 = vrot.lane.b32.xlu0 %v470, 15
      %v593 = vpop.permute.xlu0 %592
      %v594 = vsel %vm581, %v591, %v593
      %v595 = vsel %vm581, %v593, %v591
      %v596 = vmul.f32 %v595, %v584
      %v597 = vmul.f32 %v594, %v585
      %598 = vset.pattern.permute.xlu0 4
      %599 = vperm.xlu0 %598, %v409
      %v600 = vpop.permute.xlu0 %599
      %v602 = vlaneseq
      %v603 = vshrl.u32 %v602, 7
      %v604 = vsub.s32 0, %v603
      %v605 = vrot.slane %v588, %v604
      %v606 = vlaneseq
      %v607 = vshrl.u32 %v606, 7
      %v608 = vsub.s32 0, %v607
      %v609 = vrot.slane %v589, %v608
      %v610 = vmul.f32 %v600, %v605
      %v611 = vmul.f32 %v600, %v609
      %v612 = vadd.f32 %v575, %v610
      %v613 = vadd.f32 %v576, %v611
      %614 = vset.pattern.permute.xlu0 5
      %615 = vperm.xlu0 %614, %v409
      %v616 = vpop.permute.xlu0 %615
      %v618 = vlaneseq
      %v619 = vshrl.u32 %v618, 7
      %v620 = vsub.s32 0, %v619
      %v621 = vrot.slane %v596, %v620
      %v622 = vlaneseq
      %v623 = vshrl.u32 %v622, 7
      %v624 = vsub.s32 0, %v623
      %v625 = vrot.slane %v597, %v624
      %v626 = vmul.f32 %v616, %v621
      %v627 = vmul.f32 %v616, %v625
      %v628 = vadd.f32 %v612, %v626
      %v629 = vadd.f32 %v613, %v627
      %630 = vrot.lane.b32.xlu0 %v443, 1
      %v631 = vpop.permute.xlu0 %630
      %632 = vrot.lane.b32.xlu0 %v450, 1
      %v633 = vpop.permute.xlu0 %632
      %vm634 = vcmp.lt.s32.totalorder %v476, 1
      %v635 = vsel %vm634, %v631, %v633
      %v636 = vsel %vm634, %v633, %v631
      %v637 = vrot.slane %v405, 3
      %v638 = vrot.slane %v406, 3
      %v641 = vmul.f32 %v636, %v637
      %v642 = vmul.f32 %v635, %v638
      %643 = vrot.lane.b32.xlu0 %v463, 1
      %v644 = vpop.permute.xlu0 %643
      %645 = vrot.lane.b32.xlu0 %v470, 1
      %v646 = vpop.permute.xlu0 %645
      %v647 = vsel %vm634, %v644, %v646
      %v648 = vsel %vm634, %v646, %v644
      %v649 = vmul.f32 %v648, %v637
      %v650 = vmul.f32 %v647, %v638
      %651 = vset.pattern.permute.xlu0 6
      %652 = vperm.xlu0 %651, %v409
      %v653 = vpop.permute.xlu0 %652
      %v655 = vlaneseq
      %v656 = vshrl.u32 %v655, 7
      %v657 = vsub.s32 0, %v656
      %v658 = vrot.slane %v641, %v657
      %v659 = vlaneseq
      %v660 = vshrl.u32 %v659, 7
      %v661 = vsub.s32 0, %v660
      %v662 = vrot.slane %v642, %v661
      %v663 = vmul.f32 %v653, %v658
      %v664 = vmul.f32 %v653, %v662
      %v665 = vadd.f32 %v628, %v663
      %v666 = vadd.f32 %v629, %v664
      %667 = vset.pattern.permute.xlu0 7
      %668 = vperm.xlu0 %667, %v409
      %v669 = vpop.permute.xlu0 %668
      %v671 = vlaneseq
      %v672 = vshrl.u32 %v671, 7
      %v673 = vsub.s32 0, %v672
      %v674 = vrot.slane %v649, %v673
      %v675 = vlaneseq
      %v676 = vshrl.u32 %v675, 7
      %v677 = vsub.s32 0, %v676
      %v678 = vrot.slane %v650, %v677
      %v679 = vmul.f32 %v669, %v674
      %v680 = vmul.f32 %v669, %v678
      %v681 = vadd.f32 %v665, %v679
      %v682 = vadd.f32 %v666, %v680
      %683 = vset.pattern.permute.xlu0 8
      %684 = vperm.xlu0 %683, %v409
      %v685 = vpop.permute.xlu0 %684
      %v687 = vmul.f32 %v685, %v443
      %v688 = vmul.f32 %v685, %v450
      %v689 = vadd.f32 %v681, %v687
      %v690 = vadd.f32 %v682, %v688
      %691 = vset.pattern.permute.xlu0 9
      %692 = vperm.xlu0 %691, %v409
      %v693 = vpop.permute.xlu0 %692
      %v695 = vmul.f32 %v693, %v463
      %v696 = vmul.f32 %v693, %v470
      %v697 = vadd.f32 %v689, %v695
      %v698 = vadd.f32 %v690, %v696
      %699 = vrot.lane.b32.xlu0 %v443, 127
      %v700 = vpop.permute.xlu0 %699
      %701 = vrot.lane.b32.xlu0 %v450, 127
      %v702 = vpop.permute.xlu0 %701
      %vm703 = vcmp.lt.s32.totalorder %v476, 127
      %v704 = vsel %vm703, %v700, %v702
      %v705 = vsel %vm703, %v702, %v700
      %v706 = vrot.slane %v405, 5
      %v707 = vrot.slane %v406, 5
      %v710 = vmul.f32 %v704, %v706
      %v711 = vmul.f32 %v705, %v707
      %712 = vrot.lane.b32.xlu0 %v463, 127
      %v713 = vpop.permute.xlu0 %712
      %714 = vrot.lane.b32.xlu0 %v470, 127
      %v715 = vpop.permute.xlu0 %714
      %v716 = vsel %vm703, %v713, %v715
      %v717 = vsel %vm703, %v715, %v713
      %v718 = vmul.f32 %v716, %v706
      %v719 = vmul.f32 %v717, %v707
      %720 = vset.pattern.permute.xlu0 10
      %721 = vperm.xlu0 %720, %v409
      %v722 = vpop.permute.xlu0 %721
      %v724 = vlaneseq
      %v725 = vshrl.u32 %v724, 7
      %v726 = vsub.s32 0, %v725
      %v727 = vrot.slane %v710, %v726
      %v728 = vlaneseq
      %v729 = vshrl.u32 %v728, 7
      %v730 = vsub.s32 0, %v729
      %v731 = vrot.slane %v711, %v730
      %v732 = vmul.f32 %v722, %v727
      %v733 = vmul.f32 %v722, %v731
      %v734 = vadd.f32 %v697, %v732
      %v735 = vadd.f32 %v698, %v733
      %736 = vset.pattern.permute.xlu0 11
      %737 = vperm.xlu0 %736, %v409
      %v738 = vpop.permute.xlu0 %737
      %v740 = vlaneseq
      %v741 = vshrl.u32 %v740, 7
      %v742 = vsub.s32 0, %v741
      %v743 = vrot.slane %v718, %v742
      %v744 = vlaneseq
      %v745 = vshrl.u32 %v744, 7
      %v746 = vsub.s32 0, %v745
      %v747 = vrot.slane %v719, %v746
      %v748 = vmul.f32 %v738, %v743
      %v749 = vmul.f32 %v738, %v747
      %v750 = vadd.f32 %v734, %v748
      %v751 = vadd.f32 %v735, %v749
      %752 = vrot.lane.b32.xlu0 %v443, 113
      %v753 = vpop.permute.xlu0 %752
      %754 = vrot.lane.b32.xlu0 %v450, 113
      %v755 = vpop.permute.xlu0 %754
      %vm756 = vcmp.lt.s32.totalorder %v476, 113
      %v757 = vsel %vm756, %v753, %v755
      %v758 = vsel %vm756, %v755, %v753
      %v759 = vrot.slane %v405, 6
      %v760 = vrot.slane %v406, 6
      %v763 = vmul.f32 %v757, %v759
      %v764 = vmul.f32 %v758, %v760
      %765 = vrot.lane.b32.xlu0 %v463, 113
      %v766 = vpop.permute.xlu0 %765
      %767 = vrot.lane.b32.xlu0 %v470, 113
      %v768 = vpop.permute.xlu0 %767
      %v769 = vsel %vm756, %v766, %v768
      %v770 = vsel %vm756, %v768, %v766
      %v771 = vmul.f32 %v769, %v759
      %v772 = vmul.f32 %v770, %v760
      %773 = vset.pattern.permute.xlu0 12
      %774 = vperm.xlu0 %773, %v409
      %v775 = vpop.permute.xlu0 %774
      %v777 = vlaneseq
      %v778 = vshrl.u32 %v777, 7
      %v779 = vsub.s32 0, %v778
      %v780 = vrot.slane %v763, %v779
      %v781 = vlaneseq
      %v782 = vshrl.u32 %v781, 7
      %v783 = vsub.s32 0, %v782
      %v784 = vrot.slane %v764, %v783
      %v785 = vmul.f32 %v775, %v780
      %v786 = vmul.f32 %v775, %v784
      %v787 = vadd.f32 %v750, %v785
      %v788 = vadd.f32 %v751, %v786
      %789 = vset.pattern.permute.xlu0 13
      %790 = vperm.xlu0 %789, %v409
      %v791 = vpop.permute.xlu0 %790
      %v793 = vlaneseq
      %v794 = vshrl.u32 %v793, 7
      %v795 = vsub.s32 0, %v794
      %v796 = vrot.slane %v771, %v795
      %v797 = vlaneseq
      %v798 = vshrl.u32 %v797, 7
      %v799 = vsub.s32 0, %v798
      %v800 = vrot.slane %v772, %v799
      %v801 = vmul.f32 %v791, %v796
      %v802 = vmul.f32 %v791, %v800
      %v803 = vadd.f32 %v787, %v801
      %v804 = vadd.f32 %v788, %v802
      %805 = vrot.lane.b32.xlu0 %v443, 112
      %v806 = vpop.permute.xlu0 %805
      %807 = vrot.lane.b32.xlu0 %v450, 112
      %v808 = vpop.permute.xlu0 %807
      %vm809 = vcmp.lt.s32.totalorder %v476, 112
      %v810 = vsel %vm809, %v806, %v808
      %v811 = vsel %vm809, %v808, %v806
      %v812 = vrot.slane %v405, 7
      %v813 = vrot.slane %v406, 7
      %v816 = vmul.f32 %v810, %v812
      %v817 = vmul.f32 %v811, %v813
      %818 = vrot.lane.b32.xlu0 %v463, 112
      %v819 = vpop.permute.xlu0 %818
      %820 = vrot.lane.b32.xlu0 %v470, 112
      %v821 = vpop.permute.xlu0 %820
      %v822 = vsel %vm809, %v819, %v821
      %v823 = vsel %vm809, %v821, %v819
      %v824 = vmul.f32 %v822, %v812
      %v825 = vmul.f32 %v823, %v813
      %826 = vset.pattern.permute.xlu0 14
      %827 = vperm.xlu0 %826, %v409
      %v828 = vpop.permute.xlu0 %827
      %v830 = vlaneseq
      %v831 = vshrl.u32 %v830, 7
      %v832 = vsub.s32 0, %v831
      %v833 = vrot.slane %v816, %v832
      %v834 = vlaneseq
      %v835 = vshrl.u32 %v834, 7
      %v836 = vsub.s32 0, %v835
      %v837 = vrot.slane %v817, %v836
      %v838 = vmul.f32 %v828, %v833
      %v839 = vmul.f32 %v828, %v837
      %v840 = vadd.f32 %v803, %v838
      %v841 = vadd.f32 %v804, %v839
      %842 = vset.pattern.permute.xlu0 15
      %843 = vperm.xlu0 %842, %v409
      %v844 = vpop.permute.xlu0 %843
      %v846 = vlaneseq
      %v847 = vshrl.u32 %v846, 7
      %v848 = vsub.s32 0, %v847
      %v849 = vrot.slane %v824, %v848
      %v850 = vlaneseq
      %v851 = vshrl.u32 %v850, 7
      %v852 = vsub.s32 0, %v851
      %v853 = vrot.slane %v825, %v852
      %v854 = vmul.f32 %v844, %v849
      %v855 = vmul.f32 %v844, %v853
      %v856 = vadd.f32 %v840, %v854
      %v857 = vadd.f32 %v841, %v855
      %858 = vrot.lane.b32.xlu0 %v443, 111
      %v859 = vpop.permute.xlu0 %858
      %860 = vrot.lane.b32.xlu0 %v450, 111
      %v861 = vpop.permute.xlu0 %860
      %vm862 = vcmp.lt.s32.totalorder %v476, 111
      %v863 = vsel %vm862, %v859, %v861
      %v864 = vsel %vm862, %v861, %v859
      %v865 = vmul.f32 %v863, %v407
      %v866 = vmul.f32 %v864, %v408
      %867 = vrot.lane.b32.xlu0 %v463, 111
      %v868 = vpop.permute.xlu0 %867
      %869 = vrot.lane.b32.xlu0 %v470, 111
      %v870 = vpop.permute.xlu0 %869
      %v871 = vsel %vm862, %v868, %v870
      %v872 = vsel %vm862, %v870, %v868
      %v873 = vmul.f32 %v871, %v407
      %v874 = vmul.f32 %v872, %v408
      %875 = vset.pattern.permute.xlu0 16
      %876 = vperm.xlu0 %875, %v409
      %v877 = vpop.permute.xlu0 %876
      %v879 = vlaneseq
      %v880 = vshrl.u32 %v879, 7
      %v881 = vsub.s32 0, %v880
      %v882 = vrot.slane %v865, %v881
      %v883 = vlaneseq
      %v884 = vshrl.u32 %v883, 7
      %v885 = vsub.s32 0, %v884
      %v886 = vrot.slane %v866, %v885
      %v887 = vmul.f32 %v877, %v882
      %v888 = vmul.f32 %v877, %v886
      %v889 = vadd.f32 %v856, %v887
      %v890 = vadd.f32 %v857, %v888
      %891 = vset.pattern.permute.xlu0 17
      %892 = vperm.xlu0 %891, %v409
      %v893 = vpop.permute.xlu0 %892
      %v895 = vlaneseq
      %v896 = vshrl.u32 %v895, 7
      %v897 = vsub.s32 0, %v896
      %v898 = vrot.slane %v873, %v897
      %v899 = vlaneseq
      %v900 = vshrl.u32 %v899, 7
      %v901 = vsub.s32 0, %v900
      %v902 = vrot.slane %v874, %v901
      %v903 = vmul.f32 %v893, %v898
      %v904 = vmul.f32 %v893, %v902
      %v905 = vadd.f32 %v889, %v903
      %v906 = vadd.f32 %v890, %v904
      %v907 = vmax.f32 %v905, 0.0
      %v908 = vmax.f32 %v906, 0.0
      %909 = vrot.lane.b32.xlu0 %v907, 17
      %v910 = vpop.permute.xlu0 %909
      %911 = vrot.lane.b32.xlu0 %v908, 17
      %v912 = vpop.permute.xlu0 %911
      %v913 = vsel %vm477, %v910, %v912
      %v914 = vsel %vm477, %v912, %v910
      %v915 = vlaneseq
      %v916 = vshrl.u32 %v915, 7
      %v917 = vsub.s32 0, %v916
      %v918 = vrot.slane %v405, %v917
      %v919 = vlaneseq
      %v920 = vshrl.u32 %v919, 7
      %v921 = vsub.s32 0, %v920
      %v922 = vrot.slane %v406, %v921
      %v923 = vmul.f32 %v914, %v918
      %v924 = vmul.f32 %v913, %v922
      %925 = vst [vmem:[#allocation2] sm:$0xff] %v923
      %926 = vst [vmem:[#allocation2 + $0x8] sm:$0xff] %v924
      %927 = vrot.lane.b32.xlu0 %v907, 16
      %v928 = vpop.permute.xlu0 %927
      %929 = vrot.lane.b32.xlu0 %v908, 16
      %v930 = vpop.permute.xlu0 %929
      %v931 = vsel %vm526, %v928, %v930
      %v932 = vsel %vm526, %v930, %v928
      %v933 = vlaneseq
      %v934 = vshrl.u32 %v933, 7
      %v935 = vsub.s32 1, %v934
      %v936 = vrot.slane %v405, %v935
      %v937 = vlaneseq
      %v938 = vshrl.u32 %v937, 7
      %v939 = vsub.s32 1, %v938
      %v940 = vrot.slane %v406, %v939
      %v941 = vmul.f32 %v932, %v936
      %v942 = vmul.f32 %v931, %v940
      %943 = vst [vmem:[#allocation2 + $0x20] sm:$0xff] %v941
      %944 = vst [vmem:[#allocation2 + $0x28] sm:$0xff] %v942
      %945 = vrot.lane.b32.xlu0 %v907, 15
      %v946 = vpop.permute.xlu0 %945
      %947 = vrot.lane.b32.xlu0 %v908, 15
      %v948 = vpop.permute.xlu0 %947
      %v949 = vsel %vm581, %v946, %v948
      %v950 = vsel %vm581, %v948, %v946
      %v951 = vlaneseq
      %v952 = vshrl.u32 %v951, 7
      %v953 = vsub.s32 2, %v952
      %v954 = vrot.slane %v405, %v953
      %v955 = vlaneseq
      %v956 = vshrl.u32 %v955, 7
      %v957 = vsub.s32 2, %v956
      %v958 = vrot.slane %v406, %v957
      %v959 = vmul.f32 %v950, %v954
      %v960 = vmul.f32 %v949, %v958
      %961 = vst [vmem:[#allocation2 + $0x40] sm:$0xff] %v959
      %962 = vst [vmem:[#allocation2 + $0x48] sm:$0xff] %v960
      %963 = vrot.lane.b32.xlu0 %v907, 1
      %v964 = vpop.permute.xlu0 %963
      %965 = vrot.lane.b32.xlu0 %v908, 1
      %v966 = vpop.permute.xlu0 %965
      %v967 = vsel %vm634, %v964, %v966
      %v968 = vsel %vm634, %v966, %v964
      %v969 = vlaneseq
      %v970 = vshrl.u32 %v969, 7
      %v971 = vsub.s32 3, %v970
      %v972 = vrot.slane %v405, %v971
      %v973 = vlaneseq
      %v974 = vshrl.u32 %v973, 7
      %v975 = vsub.s32 3, %v974
      %v976 = vrot.slane %v406, %v975
      %v977 = vmul.f32 %v968, %v972
      %v978 = vmul.f32 %v967, %v976
      %979 = vst [vmem:[#allocation2 + $0x60] sm:$0xff] %v977
      %980 = vst [vmem:[#allocation2 + $0x68] sm:$0xff] %v978
      %981 = vst [vmem:[#allocation2 + $0x80] sm:$0xff] %v907
      %982 = vst [vmem:[#allocation2 + $0x88] sm:$0xff] %v908
      %983 = vrot.lane.b32.xlu0 %v907, 127
      %v984 = vpop.permute.xlu0 %983
      %985 = vrot.lane.b32.xlu0 %v908, 127
      %v986 = vpop.permute.xlu0 %985
      %v987 = vsel %vm703, %v984, %v986
      %v988 = vsel %vm703, %v986, %v984
      %v989 = vlaneseq
      %v990 = vshrl.u32 %v989, 7
      %v991 = vsub.s32 5, %v990
      %v992 = vrot.slane %v405, %v991
      %v993 = vlaneseq
      %v994 = vshrl.u32 %v993, 7
      %v995 = vsub.s32 5, %v994
      %v996 = vrot.slane %v406, %v995
      %v997 = vmul.f32 %v987, %v992
      %v998 = vmul.f32 %v988, %v996
      %999 = vst [vmem:[#allocation2 + $0xa0] sm:$0xff] %v997
      %1000 = vst [vmem:[#allocation2 + $0xa8] sm:$0xff] %v998
      %1001 = vrot.lane.b32.xlu0 %v907, 113
      %v1002 = vpop.permute.xlu0 %1001
      %1003 = vrot.lane.b32.xlu0 %v908, 113
      %v1004 = vpop.permute.xlu0 %1003
      %v1005 = vsel %vm756, %v1002, %v1004
      %v1006 = vsel %vm756, %v1004, %v1002
      %v1007 = vlaneseq
      %v1008 = vshrl.u32 %v1007, 7
      %v1009 = vsub.s32 6, %v1008
      %v1010 = vrot.slane %v405, %v1009
      %v1011 = vlaneseq
      %v1012 = vshrl.u32 %v1011, 7
      %v1013 = vsub.s32 6, %v1012
      %v1014 = vrot.slane %v406, %v1013
      %v1015 = vmul.f32 %v1005, %v1010
      %v1016 = vmul.f32 %v1006, %v1014
      %1017 = vst [vmem:[#allocation2 + $0xc0] sm:$0xff] %v1015
      %1018 = vst [vmem:[#allocation2 + $0xc8] sm:$0xff] %v1016
      %1019 = vrot.lane.b32.xlu0 %v907, 112
      %v1020 = vpop.permute.xlu0 %1019
      %1021 = vrot.lane.b32.xlu0 %v908, 112
      %v1022 = vpop.permute.xlu0 %1021
      %v1023 = vsel %vm809, %v1020, %v1022
      %v1024 = vsel %vm809, %v1022, %v1020
      %v1025 = vlaneseq
      %v1026 = vshrl.u32 %v1025, 7
      %v1027 = vsub.s32 7, %v1026
      %v1028 = vrot.slane %v405, %v1027
      %v1029 = vlaneseq
      %v1030 = vshrl.u32 %v1029, 7
      %v1031 = vsub.s32 7, %v1030
      %v1032 = vrot.slane %v406, %v1031
      %v1033 = vmul.f32 %v1023, %v1028
      %v1034 = vmul.f32 %v1024, %v1032
      %1035 = vst [vmem:[#allocation2 + $0xe0] sm:$0xff] %v1033
      %1036 = vst [vmem:[#allocation2 + $0xe8] sm:$0xff] %v1034
      %1037 = vrot.lane.b32.xlu0 %v907, 111
      %v1038 = vpop.permute.xlu0 %1037
      %1039 = vrot.lane.b32.xlu0 %v908, 111
      %v1040 = vpop.permute.xlu0 %1039
      %v1041 = vsel %vm862, %v1038, %v1040
      %v1042 = vsel %vm862, %v1040, %v1038
      %v1043 = vlaneseq
      %v1044 = vshrl.u32 %v1043, 7
      %v1045 = vsub.s32 0, %v1044
      %v1046 = vrot.slane %v407, %v1045
      %v1047 = vlaneseq
      %v1048 = vshrl.u32 %v1047, 7
      %v1049 = vsub.s32 0, %v1048
      %v1050 = vrot.slane %v408, %v1049
      %v1051 = vmul.f32 %v1041, %v1046
      %v1052 = vmul.f32 %v1042, %v1050
      %1053 = vst [vmem:[#allocation2 + $0x100] sm:$0xff] %v1051
      %1054 = vst [vmem:[#allocation2 + $0x108] sm:$0xff] %v1052
      %s1055 = scalar_lea.vmem %s368, 8
      %v1056 = vld [vmem:[%s1055] sm:$0xff]
      %s1057 = scalar_lea.vmem %s375, 8
      %v1058 = vld [vmem:[%s1057] sm:$0xff]
      %s1059 = scalar_lea.vmem %s382, 8
      %v1060 = vld [vmem:[%s1059] sm:$0xff]
      %s1061 = scalar_lea.vmem %s389, 8
      %v1062 = vld [vmem:[%s1061] sm:$0xff]
      %v1063 = vmul.f32 %v1056, %v1060
      %v1064 = vmul.f32 %v1058, %v1062
      %v1065 = vadd.f32 %v1063, %v1064
      %v1067 = vcombine.high %v1065, %v1065
      %v1069 = vsel %vm436, %v1065, 0.0
      %v1070 = vrot.slane %v1069, 4
      %v1071 = vadd.f32 %v1069, %v1070
      %v1072 = vrot.slane %v1071, 2
      %v1073 = vadd.f32 %v1071, %v1072
      %v1074 = vrot.slane %v1073, 1
      %v1075 = vadd.f32 %v1073, %v1074
      %v1076 = vsel %vm436, %v1067, 0.0
      %v1077 = vrot.slane %v1076, 4
      %v1078 = vadd.f32 %v1076, %v1077
      %v1079 = vrot.slane %v1078, 2
      %v1080 = vadd.f32 %v1078, %v1079
      %v1081 = vrot.slane %v1080, 1
      %v1082 = vadd.f32 %v1080, %v1081
      %v1083 = vmul.f32 %v1058, %v1060
      %v1084 = vmul.f32 %v1056, %v1062
      %v1085 = vsub.f32 %v1083, %v1084
      %v1087 = vcombine.high %v1085, %v1085
      %v1089 = vsel %vm436, %v1085, 0.0
      %v1090 = vrot.slane %v1089, 4
      %v1091 = vadd.f32 %v1089, %v1090
      %v1092 = vrot.slane %v1091, 2
      %v1093 = vadd.f32 %v1091, %v1092
      %v1094 = vrot.slane %v1093, 1
      %v1095 = vadd.f32 %v1093, %v1094
      %v1096 = vsel %vm436, %v1087, 0.0
      %v1097 = vrot.slane %v1096, 4
      %v1098 = vadd.f32 %v1096, %v1097
      %v1099 = vrot.slane %v1098, 2
      %v1100 = vadd.f32 %v1098, %v1099
      %v1101 = vrot.slane %v1100, 1
      %v1102 = vadd.f32 %v1100, %v1101
      %1103 = vrot.lane.b32.xlu0 %v1075, 17
      %v1104 = vpop.permute.xlu0 %1103
      %1105 = vrot.lane.b32.xlu0 %v1082, 17
      %v1106 = vpop.permute.xlu0 %1105
      %v1107 = vsel %vm477, %v1104, %v1106
      %v1108 = vsel %vm477, %v1106, %v1104
      %v1109 = vmul.f32 %v1108, %v405
      %v1110 = vmul.f32 %v1107, %v406
      %1111 = vrot.lane.b32.xlu0 %v1095, 17
      %v1112 = vpop.permute.xlu0 %1111
      %1113 = vrot.lane.b32.xlu0 %v1102, 17
      %v1114 = vpop.permute.xlu0 %1113
      %v1115 = vsel %vm477, %v1112, %v1114
      %v1116 = vsel %vm477, %v1114, %v1112
      %v1117 = vmul.f32 %v1116, %v405
      %v1118 = vmul.f32 %v1115, %v406
      %v1119 = vlaneseq
      %v1120 = vshrl.u32 %v1119, 7
      %v1121 = vsub.s32 0, %v1120
      %v1122 = vrot.slane %v1109, %v1121
      %v1123 = vlaneseq
      %v1124 = vshrl.u32 %v1123, 7
      %v1125 = vsub.s32 0, %v1124
      %v1126 = vrot.slane %v1110, %v1125
      %v1127 = vmul.f32 %v492, %v1122
      %v1128 = vmul.f32 %v492, %v1126
      %v1129 = vadd.f32 %v413, %v1127
      %v1130 = vadd.f32 %v413, %v1128
      %v1131 = vlaneseq
      %v1132 = vshrl.u32 %v1131, 7
      %v1133 = vsub.s32 0, %v1132
      %v1134 = vrot.slane %v1117, %v1133
      %v1135 = vlaneseq
      %v1136 = vshrl.u32 %v1135, 7
      %v1137 = vsub.s32 0, %v1136
      %v1138 = vrot.slane %v1118, %v1137
      %v1139 = vmul.f32 %v508, %v1134
      %v1140 = vmul.f32 %v508, %v1138
      %v1141 = vadd.f32 %v1129, %v1139
      %v1142 = vadd.f32 %v1130, %v1140
      %1143 = vrot.lane.b32.xlu0 %v1075, 16
      %v1144 = vpop.permute.xlu0 %1143
      %1145 = vrot.lane.b32.xlu0 %v1082, 16
      %v1146 = vpop.permute.xlu0 %1145
      %v1147 = vsel %vm526, %v1144, %v1146
      %v1148 = vsel %vm526, %v1146, %v1144
      %v1149 = vmul.f32 %v1148, %v531
      %v1150 = vmul.f32 %v1147, %v532
      %1151 = vrot.lane.b32.xlu0 %v1095, 16
      %v1152 = vpop.permute.xlu0 %1151
      %1153 = vrot.lane.b32.xlu0 %v1102, 16
      %v1154 = vpop.permute.xlu0 %1153
      %v1155 = vsel %vm526, %v1152, %v1154
      %v1156 = vsel %vm526, %v1154, %v1152
      %v1157 = vmul.f32 %v1156, %v531
      %v1158 = vmul.f32 %v1155, %v532
      %v1159 = vlaneseq
      %v1160 = vshrl.u32 %v1159, 7
      %v1161 = vsub.s32 0, %v1160
      %v1162 = vrot.slane %v1149, %v1161
      %v1163 = vlaneseq
      %v1164 = vshrl.u32 %v1163, 7
      %v1165 = vsub.s32 0, %v1164
      %v1166 = vrot.slane %v1150, %v1165
      %v1167 = vmul.f32 %v547, %v1162
      %v1168 = vmul.f32 %v547, %v1166
      %v1169 = vadd.f32 %v1141, %v1167
      %v1170 = vadd.f32 %v1142, %v1168
      %v1171 = vlaneseq
      %v1172 = vshrl.u32 %v1171, 7
      %v1173 = vsub.s32 0, %v1172
      %v1174 = vrot.slane %v1157, %v1173
      %v1175 = vlaneseq
      %v1176 = vshrl.u32 %v1175, 7
      %v1177 = vsub.s32 0, %v1176
      %v1178 = vrot.slane %v1158, %v1177
      %v1179 = vmul.f32 %v563, %v1174
      %v1180 = vmul.f32 %v563, %v1178
      %v1181 = vadd.f32 %v1169, %v1179
      %v1182 = vadd.f32 %v1170, %v1180
      %1183 = vrot.lane.b32.xlu0 %v1075, 15
      %v1184 = vpop.permute.xlu0 %1183
      %1185 = vrot.lane.b32.xlu0 %v1082, 15
      %v1186 = vpop.permute.xlu0 %1185
      %v1187 = vsel %vm581, %v1184, %v1186
      %v1188 = vsel %vm581, %v1186, %v1184
      %v1189 = vmul.f32 %v1188, %v584
      %v1190 = vmul.f32 %v1187, %v585
      %1191 = vrot.lane.b32.xlu0 %v1095, 15
      %v1192 = vpop.permute.xlu0 %1191
      %1193 = vrot.lane.b32.xlu0 %v1102, 15
      %v1194 = vpop.permute.xlu0 %1193
      %v1195 = vsel %vm581, %v1192, %v1194
      %v1196 = vsel %vm581, %v1194, %v1192
      %v1197 = vmul.f32 %v1196, %v584
      %v1198 = vmul.f32 %v1195, %v585
      %v1199 = vlaneseq
      %v1200 = vshrl.u32 %v1199, 7
      %v1201 = vsub.s32 0, %v1200
      %v1202 = vrot.slane %v1189, %v1201
      %v1203 = vlaneseq
      %v1204 = vshrl.u32 %v1203, 7
      %v1205 = vsub.s32 0, %v1204
      %v1206 = vrot.slane %v1190, %v1205
      %v1207 = vmul.f32 %v600, %v1202
      %v1208 = vmul.f32 %v600, %v1206
      %v1209 = vadd.f32 %v1181, %v1207
      %v1210 = vadd.f32 %v1182, %v1208
      %v1211 = vlaneseq
      %v1212 = vshrl.u32 %v1211, 7
      %v1213 = vsub.s32 0, %v1212
      %v1214 = vrot.slane %v1197, %v1213
      %v1215 = vlaneseq
      %v1216 = vshrl.u32 %v1215, 7
      %v1217 = vsub.s32 0, %v1216
      %v1218 = vrot.slane %v1198, %v1217
      %v1219 = vmul.f32 %v616, %v1214
      %v1220 = vmul.f32 %v616, %v1218
      %v1221 = vadd.f32 %v1209, %v1219
      %v1222 = vadd.f32 %v1210, %v1220
      %1223 = vrot.lane.b32.xlu0 %v1075, 1
      %v1224 = vpop.permute.xlu0 %1223
      %1225 = vrot.lane.b32.xlu0 %v1082, 1
      %v1226 = vpop.permute.xlu0 %1225
      %v1227 = vsel %vm634, %v1224, %v1226
      %v1228 = vsel %vm634, %v1226, %v1224
      %v1229 = vmul.f32 %v1228, %v637
      %v1230 = vmul.f32 %v1227, %v638
      %1231 = vrot.lane.b32.xlu0 %v1095, 1
      %v1232 = vpop.permute.xlu0 %1231
      %1233 = vrot.lane.b32.xlu0 %v1102, 1
      %v1234 = vpop.permute.xlu0 %1233
      %v1235 = vsel %vm634, %v1232, %v1234
      %v1236 = vsel %vm634, %v1234, %v1232
      %v1237 = vmul.f32 %v1236, %v637
      %v1238 = vmul.f32 %v1235, %v638
      %v1239 = vlaneseq
      %v1240 = vshrl.u32 %v1239, 7
      %v1241 = vsub.s32 0, %v1240
      %v1242 = vrot.slane %v1229, %v1241
      %v1243 = vlaneseq
      %v1244 = vshrl.u32 %v1243, 7
      %v1245 = vsub.s32 0, %v1244
      %v1246 = vrot.slane %v1230, %v1245
      %v1247 = vmul.f32 %v653, %v1242
      %v1248 = vmul.f32 %v653, %v1246
      %v1249 = vadd.f32 %v1221, %v1247
      %v1250 = vadd.f32 %v1222, %v1248
      %v1251 = vlaneseq
      %v1252 = vshrl.u32 %v1251, 7
      %v1253 = vsub.s32 0, %v1252
      %v1254 = vrot.slane %v1237, %v1253
      %v1255 = vlaneseq
      %v1256 = vshrl.u32 %v1255, 7
      %v1257 = vsub.s32 0, %v1256
      %v1258 = vrot.slane %v1238, %v1257
      %v1259 = vmul.f32 %v669, %v1254
      %v1260 = vmul.f32 %v669, %v1258
      %v1261 = vadd.f32 %v1249, %v1259
      %v1262 = vadd.f32 %v1250, %v1260
      %v1263 = vmul.f32 %v685, %v1075
      %v1264 = vmul.f32 %v685, %v1082
      %v1265 = vadd.f32 %v1261, %v1263
      %v1266 = vadd.f32 %v1262, %v1264
      %v1267 = vmul.f32 %v693, %v1095
      %v1268 = vmul.f32 %v693, %v1102
      %v1269 = vadd.f32 %v1265, %v1267
      %v1270 = vadd.f32 %v1266, %v1268
      %1271 = vrot.lane.b32.xlu0 %v1075, 127
      %v1272 = vpop.permute.xlu0 %1271
      %1273 = vrot.lane.b32.xlu0 %v1082, 127
      %v1274 = vpop.permute.xlu0 %1273
      %v1275 = vsel %vm703, %v1272, %v1274
      %v1276 = vsel %vm703, %v1274, %v1272
      %v1277 = vmul.f32 %v1275, %v706
      %v1278 = vmul.f32 %v1276, %v707
      %1279 = vrot.lane.b32.xlu0 %v1095, 127
      %v1280 = vpop.permute.xlu0 %1279
      %1281 = vrot.lane.b32.xlu0 %v1102, 127
      %v1282 = vpop.permute.xlu0 %1281
      %v1283 = vsel %vm703, %v1280, %v1282
      %v1284 = vsel %vm703, %v1282, %v1280
      %v1285 = vmul.f32 %v1283, %v706
      %v1286 = vmul.f32 %v1284, %v707
      %v1287 = vlaneseq
      %v1288 = vshrl.u32 %v1287, 7
      %v1289 = vsub.s32 0, %v1288
      %v1290 = vrot.slane %v1277, %v1289
      %v1291 = vlaneseq
      %v1292 = vshrl.u32 %v1291, 7
      %v1293 = vsub.s32 0, %v1292
      %v1294 = vrot.slane %v1278, %v1293
      %v1295 = vmul.f32 %v722, %v1290
      %v1296 = vmul.f32 %v722, %v1294
      %v1297 = vadd.f32 %v1269, %v1295
      %v1298 = vadd.f32 %v1270, %v1296
      %v1299 = vlaneseq
      %v1300 = vshrl.u32 %v1299, 7
      %v1301 = vsub.s32 0, %v1300
      %v1302 = vrot.slane %v1285, %v1301
      %v1303 = vlaneseq
      %v1304 = vshrl.u32 %v1303, 7
      %v1305 = vsub.s32 0, %v1304
      %v1306 = vrot.slane %v1286, %v1305
      %v1307 = vmul.f32 %v738, %v1302
      %v1308 = vmul.f32 %v738, %v1306
      %v1309 = vadd.f32 %v1297, %v1307
      %v1310 = vadd.f32 %v1298, %v1308
      %1311 = vrot.lane.b32.xlu0 %v1075, 113
      %v1312 = vpop.permute.xlu0 %1311
      %1313 = vrot.lane.b32.xlu0 %v1082, 113
      %v1314 = vpop.permute.xlu0 %1313
      %v1315 = vsel %vm756, %v1312, %v1314
      %v1316 = vsel %vm756, %v1314, %v1312
      %v1317 = vmul.f32 %v1315, %v759
      %v1318 = vmul.f32 %v1316, %v760
      %1319 = vrot.lane.b32.xlu0 %v1095, 113
      %v1320 = vpop.permute.xlu0 %1319
      %1321 = vrot.lane.b32.xlu0 %v1102, 113
      %v1322 = vpop.permute.xlu0 %1321
      %v1323 = vsel %vm756, %v1320, %v1322
      %v1324 = vsel %vm756, %v1322, %v1320
      %v1325 = vmul.f32 %v1323, %v759
      %v1326 = vmul.f32 %v1324, %v760
      %v1327 = vlaneseq
      %v1328 = vshrl.u32 %v1327, 7
      %v1329 = vsub.s32 0, %v1328
      %v1330 = vrot.slane %v1317, %v1329
      %v1331 = vlaneseq
      %v1332 = vshrl.u32 %v1331, 7
      %v1333 = vsub.s32 0, %v1332
      %v1334 = vrot.slane %v1318, %v1333
      %v1335 = vmul.f32 %v775, %v1330
      %v1336 = vmul.f32 %v775, %v1334
      %v1337 = vadd.f32 %v1309, %v1335
      %v1338 = vadd.f32 %v1310, %v1336
      %v1339 = vlaneseq
      %v1340 = vshrl.u32 %v1339, 7
      %v1341 = vsub.s32 0, %v1340
      %v1342 = vrot.slane %v1325, %v1341
      %v1343 = vlaneseq
      %v1344 = vshrl.u32 %v1343, 7
      %v1345 = vsub.s32 0, %v1344
      %v1346 = vrot.slane %v1326, %v1345
      %v1347 = vmul.f32 %v791, %v1342
      %v1348 = vmul.f32 %v791, %v1346
      %v1349 = vadd.f32 %v1337, %v1347
      %v1350 = vadd.f32 %v1338, %v1348
      %1351 = vrot.lane.b32.xlu0 %v1075, 112
      %v1352 = vpop.permute.xlu0 %1351
      %1353 = vrot.lane.b32.xlu0 %v1082, 112
      %v1354 = vpop.permute.xlu0 %1353
      %v1355 = vsel %vm809, %v1352, %v1354
      %v1356 = vsel %vm809, %v1354, %v1352
      %v1357 = vmul.f32 %v1355, %v812
      %v1358 = vmul.f32 %v1356, %v813
      %1359 = vrot.lane.b32.xlu0 %v1095, 112
      %v1360 = vpop.permute.xlu0 %1359
      %1361 = vrot.lane.b32.xlu0 %v1102, 112
      %v1362 = vpop.permute.xlu0 %1361
      %v1363 = vsel %vm809, %v1360, %v1362
      %v1364 = vsel %vm809, %v1362, %v1360
      %v1365 = vmul.f32 %v1363, %v812
      %v1366 = vmul.f32 %v1364, %v813
      %v1367 = vlaneseq
      %v1368 = vshrl.u32 %v1367, 7
      %v1369 = vsub.s32 0, %v1368
      %v1370 = vrot.slane %v1357, %v1369
      %v1371 = vlaneseq
      %v1372 = vshrl.u32 %v1371, 7
      %v1373 = vsub.s32 0, %v1372
      %v1374 = vrot.slane %v1358, %v1373
      %v1375 = vmul.f32 %v828, %v1370
      %v1376 = vmul.f32 %v828, %v1374
      %v1377 = vadd.f32 %v1349, %v1375
      %v1378 = vadd.f32 %v1350, %v1376
      %v1379 = vlaneseq
      %v1380 = vshrl.u32 %v1379, 7
      %v1381 = vsub.s32 0, %v1380
      %v1382 = vrot.slane %v1365, %v1381
      %v1383 = vlaneseq
      %v1384 = vshrl.u32 %v1383, 7
      %v1385 = vsub.s32 0, %v1384
      %v1386 = vrot.slane %v1366, %v1385
      %v1387 = vmul.f32 %v844, %v1382
      %v1388 = vmul.f32 %v844, %v1386
      %v1389 = vadd.f32 %v1377, %v1387
      %v1390 = vadd.f32 %v1378, %v1388
      %1391 = vrot.lane.b32.xlu0 %v1075, 111
      %v1392 = vpop.permute.xlu0 %1391
      %1393 = vrot.lane.b32.xlu0 %v1082, 111
      %v1394 = vpop.permute.xlu0 %1393
      %v1395 = vsel %vm862, %v1392, %v1394
      %v1396 = vsel %vm862, %v1394, %v1392
      %v1397 = vmul.f32 %v1395, %v407
      %v1398 = vmul.f32 %v1396, %v408
      %1399 = vrot.lane.b32.xlu0 %v1095, 111
      %v1400 = vpop.permute.xlu0 %1399
      %1401 = vrot.lane.b32.xlu0 %v1102, 111
      %v1402 = vpop.permute.xlu0 %1401
      %v1403 = vsel %vm862, %v1400, %v1402
      %v1404 = vsel %vm862, %v1402, %v1400
      %v1405 = vmul.f32 %v1403, %v407
      %v1406 = vmul.f32 %v1404, %v408
      %v1407 = vlaneseq
      %v1408 = vshrl.u32 %v1407, 7
      %v1409 = vsub.s32 0, %v1408
      %v1410 = vrot.slane %v1397, %v1409
      %v1411 = vlaneseq
      %v1412 = vshrl.u32 %v1411, 7
      %v1413 = vsub.s32 0, %v1412
      %v1414 = vrot.slane %v1398, %v1413
      %v1415 = vmul.f32 %v877, %v1410
      %v1416 = vmul.f32 %v877, %v1414
      %v1417 = vadd.f32 %v1389, %v1415
      %v1418 = vadd.f32 %v1390, %v1416
      %v1419 = vlaneseq
      %v1420 = vshrl.u32 %v1419, 7
      %v1421 = vsub.s32 0, %v1420
      %v1422 = vrot.slane %v1405, %v1421
      %v1423 = vlaneseq
      %v1424 = vshrl.u32 %v1423, 7
      %v1425 = vsub.s32 0, %v1424
      %v1426 = vrot.slane %v1406, %v1425
      %v1427 = vmul.f32 %v893, %v1422
      %v1428 = vmul.f32 %v893, %v1426
      %v1429 = vadd.f32 %v1417, %v1427
      %v1430 = vadd.f32 %v1418, %v1428
      %v1431 = vmax.f32 %v1429, 0.0
      %v1432 = vmax.f32 %v1430, 0.0
      %1433 = vrot.lane.b32.xlu0 %v1431, 17
      %v1434 = vpop.permute.xlu0 %1433
      %1435 = vrot.lane.b32.xlu0 %v1432, 17
      %v1436 = vpop.permute.xlu0 %1435
      %v1437 = vsel %vm477, %v1434, %v1436
      %v1438 = vsel %vm477, %v1436, %v1434
      %v1439 = vmul.f32 %v1438, %v918
      %v1440 = vmul.f32 %v1437, %v922
      %1441 = vst [vmem:[#allocation2 + $0x10] sm:$0xff] %v1439
      %1442 = vst [vmem:[#allocation2 + $0x18] sm:$0xff] %v1440
      %1443 = vrot.lane.b32.xlu0 %v1431, 16
      %v1444 = vpop.permute.xlu0 %1443
      %1445 = vrot.lane.b32.xlu0 %v1432, 16
      %v1446 = vpop.permute.xlu0 %1445
      %v1447 = vsel %vm526, %v1444, %v1446
      %v1448 = vsel %vm526, %v1446, %v1444
      %v1449 = vmul.f32 %v1448, %v936
      %v1450 = vmul.f32 %v1447, %v940
      %1451 = vst [vmem:[#allocation2 + $0x30] sm:$0xff] %v1449
      %1452 = vst [vmem:[#allocation2 + $0x38] sm:$0xff] %v1450
      %1453 = vrot.lane.b32.xlu0 %v1431, 15
      %v1454 = vpop.permute.xlu0 %1453
      %1455 = vrot.lane.b32.xlu0 %v1432, 15
      %v1456 = vpop.permute.xlu0 %1455
      %v1457 = vsel %vm581, %v1454, %v1456
      %v1458 = vsel %vm581, %v1456, %v1454
      %v1459 = vmul.f32 %v1458, %v954
      %v1460 = vmul.f32 %v1457, %v958
      %1461 = vst [vmem:[#allocation2 + $0x50] sm:$0xff] %v1459
      %1462 = vst [vmem:[#allocation2 + $0x58] sm:$0xff] %v1460
      %1463 = vrot.lane.b32.xlu0 %v1431, 1
      %v1464 = vpop.permute.xlu0 %1463
      %1465 = vrot.lane.b32.xlu0 %v1432, 1
      %v1466 = vpop.permute.xlu0 %1465
      %v1467 = vsel %vm634, %v1464, %v1466
      %v1468 = vsel %vm634, %v1466, %v1464
      %v1469 = vmul.f32 %v1468, %v972
      %v1470 = vmul.f32 %v1467, %v976
      %1471 = vst [vmem:[#allocation2 + $0x70] sm:$0xff] %v1469
      %1472 = vst [vmem:[#allocation2 + $0x78] sm:$0xff] %v1470
      %1473 = vst [vmem:[#allocation2 + $0x90] sm:$0xff] %v1431
      %1474 = vst [vmem:[#allocation2 + $0x98] sm:$0xff] %v1432
      %1475 = vrot.lane.b32.xlu0 %v1431, 127
      %v1476 = vpop.permute.xlu0 %1475
      %1477 = vrot.lane.b32.xlu0 %v1432, 127
      %v1478 = vpop.permute.xlu0 %1477
      %v1479 = vsel %vm703, %v1476, %v1478
      %v1480 = vsel %vm703, %v1478, %v1476
      %v1481 = vmul.f32 %v1479, %v992
      %v1482 = vmul.f32 %v1480, %v996
      %1483 = vst [vmem:[#allocation2 + $0xb0] sm:$0xff] %v1481
      %1484 = vst [vmem:[#allocation2 + $0xb8] sm:$0xff] %v1482
      %1485 = vrot.lane.b32.xlu0 %v1431, 113
      %v1486 = vpop.permute.xlu0 %1485
      %1487 = vrot.lane.b32.xlu0 %v1432, 113
      %v1488 = vpop.permute.xlu0 %1487
      %v1489 = vsel %vm756, %v1486, %v1488
      %v1490 = vsel %vm756, %v1488, %v1486
      %v1491 = vmul.f32 %v1489, %v1010
      %v1492 = vmul.f32 %v1490, %v1014
      %1493 = vst [vmem:[#allocation2 + $0xd0] sm:$0xff] %v1491
      %1494 = vst [vmem:[#allocation2 + $0xd8] sm:$0xff] %v1492
      %1495 = vrot.lane.b32.xlu0 %v1431, 112
      %v1496 = vpop.permute.xlu0 %1495
      %1497 = vrot.lane.b32.xlu0 %v1432, 112
      %v1498 = vpop.permute.xlu0 %1497
      %v1499 = vsel %vm809, %v1496, %v1498
      %v1500 = vsel %vm809, %v1498, %v1496
      %v1501 = vmul.f32 %v1499, %v1028
      %v1502 = vmul.f32 %v1500, %v1032
      %1503 = vst [vmem:[#allocation2 + $0xf0] sm:$0xff] %v1501
      %1504 = vst [vmem:[#allocation2 + $0xf8] sm:$0xff] %v1502
      %1505 = vrot.lane.b32.xlu0 %v1431, 111
      %v1506 = vpop.permute.xlu0 %1505
      %1507 = vrot.lane.b32.xlu0 %v1432, 111
      %v1508 = vpop.permute.xlu0 %1507
      %v1509 = vsel %vm862, %v1506, %v1508
      %v1510 = vsel %vm862, %v1508, %v1506
      %v1511 = vmul.f32 %v1509, %v1046
      %v1512 = vmul.f32 %v1510, %v1050
      %1513 = vst [vmem:[#allocation2 + $0x110] sm:$0xff] %v1511
      %1514 = vst [vmem:[#allocation2 + $0x118] sm:$0xff] %v1512
      %v1515 = vld [vmem:[%s6] sm:$0xff]
      %v1516 = vld [vmem:[#allocation2] sm:$0xff]
      %v1517 = vld [vmem:[#allocation2 + $0x8] sm:$0xff]
      %v1518 = vld [vmem:[#allocation2 + $0x10] sm:$0xff]
      %v1519 = vld [vmem:[#allocation2 + $0x18] sm:$0xff]
      %v1520 = vld [vmem:[#allocation2 + $0x20] sm:$0xff]
      %v1521 = vld [vmem:[#allocation2 + $0x28] sm:$0xff]
      %v1522 = vld [vmem:[#allocation2 + $0x30] sm:$0xff]
      %v1523 = vld [vmem:[#allocation2 + $0x38] sm:$0xff]
      %v1524 = vld [vmem:[#allocation2 + $0x40] sm:$0xff]
      %v1525 = vld [vmem:[#allocation2 + $0x48] sm:$0xff]
      %v1526 = vld [vmem:[#allocation2 + $0x50] sm:$0xff]
      %v1527 = vld [vmem:[#allocation2 + $0x58] sm:$0xff]
      %v1528 = vld [vmem:[#allocation2 + $0x60] sm:$0xff]
      %v1529 = vld [vmem:[#allocation2 + $0x68] sm:$0xff]
      %v1530 = vld [vmem:[#allocation2 + $0x70] sm:$0xff]
      %v1531 = vld [vmem:[#allocation2 + $0x78] sm:$0xff]
      %v1532 = vld [vmem:[#allocation2 + $0x80] sm:$0xff]
      %v1533 = vld [vmem:[#allocation2 + $0x88] sm:$0xff]
      %v1534 = vld [vmem:[#allocation2 + $0x90] sm:$0xff]
      %v1535 = vld [vmem:[#allocation2 + $0x98] sm:$0xff]
      %v1536 = vld [vmem:[#allocation2 + $0xa0] sm:$0xff]
      %v1537 = vld [vmem:[#allocation2 + $0xa8] sm:$0xff]
      %v1538 = vld [vmem:[#allocation2 + $0xb0] sm:$0xff]
      %v1539 = vld [vmem:[#allocation2 + $0xb8] sm:$0xff]
      %v1540 = vld [vmem:[#allocation2 + $0xc0] sm:$0xff]
      %v1541 = vld [vmem:[#allocation2 + $0xc8] sm:$0xff]
      %v1542 = vld [vmem:[#allocation2 + $0xd0] sm:$0xff]
      %v1543 = vld [vmem:[#allocation2 + $0xd8] sm:$0xff]
      %v1544 = vld [vmem:[#allocation2 + $0xe0] sm:$0xff]
      %v1545 = vld [vmem:[#allocation2 + $0xe8] sm:$0xff]
      %v1546 = vld [vmem:[#allocation2 + $0xf0] sm:$0xff]
      %v1547 = vld [vmem:[#allocation2 + $0xf8] sm:$0xff]
      %v1548 = vld [vmem:[#allocation2 + $0x100] sm:$0xff]
      %v1549 = vld [vmem:[#allocation2 + $0x108] sm:$0xff]
      %v1550 = vld [vmem:[#allocation2 + $0x110] sm:$0xff]
      %v1551 = vld [vmem:[#allocation2 + $0x118] sm:$0xff]
      %v1552 = vld [vmem:[#allocation2 + $0x120] sm:$0xff]
      %v1553 = vld [vmem:[#allocation2 + $0x128] sm:$0xff]
      %v1554 = vld [vmem:[#allocation2 + $0x130] sm:$0xff]
      %v1555 = vld [vmem:[#allocation2 + $0x138] sm:$0xff]
      %vm1556 = vcmask 654336
      %v1558 = vsel %vm1556, %v1515, 0
      %1560 = vmatprep.subr.mxu0 %v1517
      %1561 = vmatpush1.msra.mxu0 %v1516
      %1562 = vmatprep.subr.mxu0 %v1521
      %1563 = vmatpush1.msra.mxu0 %v1520
      %1564 = vmatprep.subr.mxu0 %v1525
      %1565 = vmatpush1.msra.mxu0 %v1524
      %1566 = vmatprep.subr.mxu0 %v1529
      %1567 = vmatpush1.msra.mxu0 %v1528
      %1568 = vmatprep.subr.mxu0 %v1533
      %1569 = vmatpush1.msra.mxu0 %v1532
      %1570 = vmatprep.subr.mxu0 %v1537
      %1571 = vmatpush1.msra.mxu0 %v1536
      %1572 = vmatprep.subr.mxu0 %v1541
      %1573 = vmatpush1.msra.mxu0 %v1540
      %1574 = vmatprep.subr.mxu0 %v1545
      %1575 = vmatpush1.msra.mxu0 %v1544
      %1576 = vmatprep.subr.mxu0 %v1549
      %1577 = vmatpush1.msra.mxu0 %v1548
      %1578 = vmatprep.subr.mxu0 %v1553
      %1579 = vmatpush1.msra.mxu0 %v1552
      %1580 = vmatprep.subr.mxu0 0.0
      %1581 = vmatpush1.msra.mxu0 0.0
      %1582 = vmatprep.subr.mxu0 0.0
      %1583 = vmatpush1.msra.mxu0 0.0
      %1584 = vmatprep.subr.mxu0 0.0
      %1585 = vmatpush1.msra.mxu0 0.0
      %1586 = vmatprep.subr.mxu0 0.0
      %1587 = vmatpush1.msra.mxu0 0.0
      %1588 = vmatprep.subr.mxu0 0.0
      %1589 = vmatpush1.msra.mxu0 0.0
      %1590 = vmatprep.subr.mxu0 0.0
      %1591 = vmatpush1.msra.mxu0 0.0
      %1592 = vmatprep.subr.mxu0 0.0
      %1593 = vmatpush1.msra.mxu0 0.0
      %1594 = vmatprep.subr.mxu0 0.0
      %1595 = vmatpush1.msra.mxu0 0.0
      %1596 = vmatprep.subr.mxu0 0.0
      %1597 = vmatpush1.msra.mxu0 0.0
      %1598 = vmatprep.subr.mxu0 0.0
      %1599 = vmatpush1.msra.mxu0 0.0
      %1600 = vmatprep.subr.mxu0 0.0
      %1601 = vmatpush1.msra.mxu0 0.0
      %1602 = vmatprep.subr.mxu0 0.0
      %1603 = vmatpush1.msra.mxu0 0.0
      %1604 = vmatprep.subr.mxu0 0.0
      %1605 = vmatpush1.msra.mxu0 0.0
      %1606 = vmatprep.subr.mxu0 0.0
      %1607 = vmatpush1.msra.mxu0 0.0
      %1608 = vmatprep.subr.mxu0 0.0
      %1609 = vmatpush1.msra.mxu0 0.0
      %1610 = vmatprep.subr.mxu0 0.0
      %1611 = vmatpush1.msra.mxu0 0.0
      %1612 = vmatprep.subr.mxu0 0.0
      %1613 = vmatpush1.msra.mxu0 0.0
      %1614 = vmatprep.subr.mxu0 0.0
      %1615 = vmatpush1.msra.mxu0 0.0
      %1616 = vmatprep.subr.mxu0 0.0
      %1617 = vmatpush1.msra.mxu0 0.0
      %1618 = vmatprep.subr.mxu0 0.0
      %1619 = vmatpush1.msra.mxu0 0.0
      %1620 = vmatprep.subr.mxu0 0.0
      %1621 = vmatpush1.msra.mxu0 0.0
      %1622 = vmatprep.subr.mxu0 0.0
      %1623 = vmatpush1.msra.mxu0 0.0
      %1624 = vmatprep.mubr.f32.mxu0 0.0
      %1625 = vmatmul.mubr.f32.gmra.mrb[0].mxu0 %v1558
      %v1626 = vpop.f32.mrb[0].mxu0
      %v1627 = vadd.f32 0.0, %v1626
      %v1628 = vpop.f32.mrb[0].mxu0
      %v1629 = vadd.f32 0.0, %v1628
      %1630 = vdwg.mxu0
      %1631 = vmatprep.subr.mxu0 %v1519
      %1632 = vmatpush1.msra.mxu0 %v1518
      %1633 = vmatprep.subr.mxu0 %v1523
      %1634 = vmatpush1.msra.mxu0 %v1522
      %1635 = vmatprep.subr.mxu0 %v1527
      %1636 = vmatpush1.msra.mxu0 %v1526
      %1637 = vmatprep.subr.mxu0 %v1531
      %1638 = vmatpush1.msra.mxu0 %v1530
      %1639 = vmatprep.subr.mxu0 %v1535
      %1640 = vmatpush1.msra.mxu0 %v1534
      %1641 = vmatprep.subr.mxu0 %v1539
      %1642 = vmatpush1.msra.mxu0 %v1538
      %1643 = vmatprep.subr.mxu0 %v1543
      %1644 = vmatpush1.msra.mxu0 %v1542
      %1645 = vmatprep.subr.mxu0 %v1547
      %1646 = vmatpush1.msra.mxu0 %v1546
      %1647 = vmatprep.subr.mxu0 %v1551
      %1648 = vmatpush1.msra.mxu0 %v1550
      %1649 = vmatprep.subr.mxu0 %v1555
      %1650 = vmatpush1.msra.mxu0 %v1554
      %1651 = vmatprep.subr.mxu0 0.0
      %1652 = vmatpush1.msra.mxu0 0.0
      %1653 = vmatprep.subr.mxu0 0.0
      %1654 = vmatpush1.msra.mxu0 0.0
      %1655 = vmatprep.subr.mxu0 0.0
      %1656 = vmatpush1.msra.mxu0 0.0
      %1657 = vmatprep.subr.mxu0 0.0
      %1658 = vmatpush1.msra.mxu0 0.0
      %1659 = vmatprep.subr.mxu0 0.0
      %1660 = vmatpush1.msra.mxu0 0.0
      %1661 = vmatprep.subr.mxu0 0.0
      %1662 = vmatpush1.msra.mxu0 0.0
      %1663 = vmatprep.subr.mxu0 0.0
      %1664 = vmatpush1.msra.mxu0 0.0
      %1665 = vmatprep.subr.mxu0 0.0
      %1666 = vmatpush1.msra.mxu0 0.0
      %1667 = vmatprep.subr.mxu0 0.0
      %1668 = vmatpush1.msra.mxu0 0.0
      %1669 = vmatprep.subr.mxu0 0.0
      %1670 = vmatpush1.msra.mxu0 0.0
      %1671 = vmatprep.subr.mxu0 0.0
      %1672 = vmatpush1.msra.mxu0 0.0
      %1673 = vmatprep.subr.mxu0 0.0
      %1674 = vmatpush1.msra.mxu0 0.0
      %1675 = vmatprep.subr.mxu0 0.0
      %1676 = vmatpush1.msra.mxu0 0.0
      %1677 = vmatprep.subr.mxu0 0.0
      %1678 = vmatpush1.msra.mxu0 0.0
      %1679 = vmatprep.subr.mxu0 0.0
      %1680 = vmatpush1.msra.mxu0 0.0
      %1681 = vmatprep.subr.mxu0 0.0
      %1682 = vmatpush1.msra.mxu0 0.0
      %1683 = vmatprep.subr.mxu0 0.0
      %1684 = vmatpush1.msra.mxu0 0.0
      %1685 = vmatprep.subr.mxu0 0.0
      %1686 = vmatpush1.msra.mxu0 0.0
      %1687 = vmatprep.subr.mxu0 0.0
      %1688 = vmatpush1.msra.mxu0 0.0
      %1689 = vmatprep.subr.mxu0 0.0
      %1690 = vmatpush1.msra.mxu0 0.0
      %1691 = vmatprep.subr.mxu0 0.0
      %1692 = vmatpush1.msra.mxu0 0.0
      %1693 = vmatprep.subr.mxu0 0.0
      %1694 = vmatpush1.msra.mxu0 0.0
      %1695 = vmatprep.mubr.f32.mxu0 0.0
      %1696 = vmatmul.mubr.f32.gmra.mrb[0].mxu0 %v1558
      %v1697 = vpop.f32.mrb[0].mxu0
      %v1698 = vadd.f32 0.0, %v1697
      %v1699 = vpop.f32.mrb[0].mxu0
      %v1700 = vadd.f32 0.0, %v1699
      %1701 = vdwg.mxu0
      %v1702 = vld [vmem:[%s382] sm:$0xff]
      %v1703 = vld [vmem:[%s389] sm:$0xff]
      %v1704 = vlaneseq
      %v1705 = vshrl.u32 %v1704, 7
      %v1706 = vsub.s32 0, %v1705
      %v1707 = vrot.slane %v1627, %v1706
      %v1708 = vlaneseq
      %v1709 = vshrl.u32 %v1708, 7
      %v1710 = vsub.s32 0, %v1709
      %v1711 = vrot.slane %v1629, %v1710
      %v1713 = vcombine.high %v1702, %v1702
      %v1715 = vmul.f32 %v1707, %v1702
      %v1716 = vmul.f32 %v1711, %v1713
      %v1717 = vlaneseq
      %v1718 = vshrl.u32 %v1717, 7
      %v1719 = vsub.s32 1, %v1718
      %v1720 = vrot.slane %v1627, %v1719
      %v1721 = vlaneseq
      %v1722 = vshrl.u32 %v1721, 7
      %v1723 = vsub.s32 1, %v1722
      %v1724 = vrot.slane %v1629, %v1723
      %v1726 = vcombine.high %v1703, %v1703
      %v1728 = vmul.f32 %v1720, %v1703
      %v1729 = vmul.f32 %v1724, %v1726
      %v1730 = vsub.f32 %v1715, %v1728
      %v1731 = vsub.f32 %v1716, %v1729
      %v1734 = vcombine.low %v1730, %v1731
      %1736 = vst [vmem:[%s396] sm:$0xff] %v1734
      %v1737 = vmul.f32 %v1707, %v1703
      %v1738 = vmul.f32 %v1711, %v1726
      %v1739 = vmul.f32 %v1720, %v1702
      %v1740 = vmul.f32 %v1724, %v1713
      %v1741 = vadd.f32 %v1737, %v1739
      %v1742 = vadd.f32 %v1738, %v1740
      %v1745 = vcombine.low %v1741, %v1742
      %1747 = vst [vmem:[%s403] sm:$0xff] %v1745
      %v1748 = vld [vmem:[%s1059] sm:$0xff]
      %v1749 = vld [vmem:[%s1061] sm:$0xff]
      %v1750 = vlaneseq
      %v1751 = vshrl.u32 %v1750, 7
      %v1752 = vsub.s32 0, %v1751
      %v1753 = vrot.slane %v1698, %v1752
      %v1754 = vlaneseq
      %v1755 = vshrl.u32 %v1754, 7
      %v1756 = vsub.s32 0, %v1755
      %v1757 = vrot.slane %v1700, %v1756
      %v1759 = vcombine.high %v1748, %v1748
      %v1761 = vmul.f32 %v1753, %v1748
      %v1762 = vmul.f32 %v1757, %v1759
      %v1763 = vlaneseq
      %v1764 = vshrl.u32 %v1763, 7
      %v1765 = vsub.s32 1, %v1764
      %v1766 = vrot.slane %v1698, %v1765
      %v1767 = vlaneseq
      %v1768 = vshrl.u32 %v1767, 7
      %v1769 = vsub.s32 1, %v1768
      %v1770 = vrot.slane %v1700, %v1769
      %v1772 = vcombine.high %v1749, %v1749
      %v1774 = vmul.f32 %v1766, %v1749
      %v1775 = vmul.f32 %v1770, %v1772
      %v1776 = vsub.f32 %v1761, %v1774
      %v1777 = vsub.f32 %v1762, %v1775
      %v1780 = vcombine.low %v1776, %v1777
      %s1782 = scalar_lea.vmem %s396, 8
      %1783 = vst [vmem:[%s1782] sm:$0xff] %v1780
      %v1784 = vmul.f32 %v1753, %v1749
      %v1785 = vmul.f32 %v1757, %v1772
      %v1786 = vmul.f32 %v1766, %v1748
      %v1787 = vmul.f32 %v1770, %v1759
      %v1788 = vadd.f32 %v1784, %v1786
      %v1789 = vadd.f32 %v1785, %v1787
      %v1792 = vcombine.low %v1788, %v1789
      %s1794 = scalar_lea.vmem %s403, 8
      %1795 = vst [vmem:[%s1794] sm:$0xff] %v1792
      %s1796 = smul.u32 2, %s20
      %p1797 = scmp.lt.s32.totalorder %s1796, 3
      %s1798 = scalar_select %p1797, %s1796, 3
      %s1799 = smul.addr %s1798, 2
      %s1800 = smul.addr %s1799, 4
      %s1801 = scalar_lea.vmem %s7, %s1800
      %s1802 = smul.u32 2, %s20
      %p1803 = scmp.lt.s32.totalorder %s1802, 3
      %s1804 = scalar_select %p1803, %s1802, 3
      %s1805 = smul.addr %s1804, 2
      %s1806 = smul.addr %s1805, 4
      %s1807 = scalar_lea.vmem %s8, %s1806
      // Predicated region
      $region49: #{fwd.2} parent=47 // pred_check
        %p1808 = pneg %p205
      $region50: #{fwd.2} parent=47 // pred_check_branch
        %1810 = sbr.rel (%p1808) target = $region52
      $region51: #{fwd.2} parent=47 // pred_region
        %s1811 = smul.u32 2, %s20
      $region52: #{fwd.2} parent=47 // pred_fallthru
        _
      // Predicated region
      $region53: #{fwd.2} parent=47 // pred_check
        %p1812 = pneg %p231
      $region54: #{fwd.2} parent=47 // pred_check_branch
        %1814 = sbr.rel (%p1812) target = $region56
      $region55: #{fwd.2} parent=47 // pred_region
        %s1815 = smul.u32 2, %s20
      $region56: #{fwd.2} parent=47 // pred_fallthru
        _
    $region48: #{fwd.2} parent=5 // pred_fallthru
      _
    %p1816 = scmp.le.s32.totalorder 2, %s15
    // Predicated region
    $region57: #{fwd.2} parent=5 // pred_check
      %p1817 = pneg %p1816
    $region58: #{fwd.2} parent=5 // pred_check_branch
      %1819 = sbr.rel (%p1817) target = $region60
    $region59: #{fwd.2} parent=5 // pred_region
      %s1820 = ssub.s32 %s15, 2
      // Predicated region
      $region61: #{fwd.2} parent=59 // pred_check
        %p1821 = pneg %p211
      $region62: #{fwd.2} parent=59 // pred_check_branch
        %1823 = sbr.rel (%p1821) target = $region64
      $region63: #{fwd.2} parent=59 // pred_region
        %s1824 = smul.u32 2, %s21
        %p1825 = scmp.lt.s32.totalorder %s1824, 3
        %s1826 = scalar_select %p1825, %s1824, 3
        %s1827 = smul.addr %s1826, 2
        %s1828 = smul.addr %s1827, 4
        %s1829 = scalar_lea.vmem %s7, %s1828
      $region64: #{fwd.2} parent=59 // pred_fallthru
        _
      // Predicated region
      $region65: #{fwd.2} parent=59 // pred_check
        %p1830 = pneg %p237
      $region66: #{fwd.2} parent=59 // pred_check_branch
        %1832 = sbr.rel (%p1830) target = $region68
      $region67: #{fwd.2} parent=59 // pred_region
        %s1833 = smul.u32 2, %s21
        %p1834 = scmp.lt.s32.totalorder %s1833, 3
        %s1835 = scalar_select %p1834, %s1833, 3
        %s1836 = smul.addr %s1835, 2
        %s1837 = smul.addr %s1836, 4
        %s1838 = scalar_lea.vmem %s8, %s1837
      $region68: #{fwd.2} parent=59 // pred_fallthru
        _
    $region60: #{fwd.2} parent=5 // pred_fallthru
      _
  $region6: #{fwd.2} parent=0 // loop_footer
    %s19 = sadd.s32 1, %s15
  $region7: #{fwd.2} parent=0 // loop_footer_branch
    %14 = sbr.rel target = $region3
  $region8: #{fwd.2} parent=0 // loop_exit
    _

// kernel: fwd.3
$region0: #{fwd.3}
  #allocation0 [shape = 'u32[]', space=smem, size = 0x4, offset = 0x4, fixed_abs, tag = 'smem constant byte address 0x4 - core index']
  #allocation1 [shape = 'u32[144,128]{1,0:T(1,128)}', space=vmem, size = 0x12000, scoped, tag = 'internal scratch']
  %s0 = inlined_call_operand.vmem [shape: f32[4,1,256], index: 0, kind: input, shape index: {}]
  %s1 = inlined_call_operand.vmem [shape: f32[4,4,256], index: 1, kind: input, shape index: {}, may-alias: {1,7}]
  %s2 = inlined_call_operand.vmem [shape: f32[4,4,256], index: 2, kind: input, shape index: {}, may-alias: {2,8}]
  %s3 = inlined_call_operand.vmem [shape: f32[4,4,256], index: 3, kind: input, shape index: {}]
  %s4 = inlined_call_operand.vmem [shape: f32[4,4,256], index: 4, kind: input, shape index: {}]
  %s5 = inlined_call_operand.vmem [shape: f32[4,4,256], index: 5, kind: input, shape index: {}]
  %s6 = inlined_call_operand.vmem [shape: f32[4,4,256], index: 6, kind: input, shape index: {}]
  %s7 = inlined_call_operand.vmem [shape: f32[4,4,256], index: 7, kind: output, shape index: {0}, may-alias: {1,7}]
  %s8 = inlined_call_operand.vmem [shape: f32[4,4,256], index: 8, kind: output, shape index: {1}, may-alias: {2,8}]
  %9 = xla_tuple %s7, %s8
  %s10 = sld [smem:[#allocation0]]
  $region69: #{fwd.3} parent=0
    _
  %s12 = ssub.s32 1, %s10
  %s13 = scalar_select 0, %s12, %s10
  loop: start=0, step=1, limit=4
  $region2: #{fwd.3} parent=0 // loop_pre_header
    _
  $region3: #{fwd.3} parent=0 // loop_header
    %s15 = sphi 0, %s19
    %p16 = scmp.ge.s32.totalorder %s15, 4
    %s25 = sphi 0, %s27
    %s28 = sphi 0, %s25
    %s29 = sphi 0, %s28
    %s45 = sphi 0, %s29
    %s51 = sphi 0, %s53
    %s54 = sphi 0, %s51
    %s55 = sphi 0, %s54
    %s71 = sphi 0, %s55
    %s77 = sphi 0, %s79
    %s80 = sphi 0, %s77
    %s81 = sphi 0, %s80
    %s97 = sphi 0, %s81
    %s103 = sphi 0, %s105
    %s106 = sphi 0, %s103
    %s107 = sphi 0, %s106
    %s123 = sphi 0, %s107
    %s129 = sphi 0, %s131
    %s132 = sphi 0, %s129
    %s133 = sphi 0, %s132
    %s149 = sphi 0, %s133
    %s155 = sphi 0, %s157
    %s158 = sphi 0, %s155
    %s159 = sphi 0, %s158
    %s175 = sphi 0, %s159
    %s181 = sphi 0, %s183
    %s184 = sphi 0, %s181
    %s185 = sphi 0, %s184
    %s201 = sphi 0, %s185
    %s207 = sphi 0, %s209
    %s210 = sphi 0, %s207
    %s211 = sphi 0, %s210
    %s227 = sphi 0, %s211
    %s233 = sphi 0, %s235
    %s236 = sphi 0, %s233
    %s237 = sphi 0, %s236
    %s253 = sphi 0, %s237
  $region4: #{fwd.3} parent=0 // loop_header_branch
    %18 = sbr.rel (%p16) target = $region8
  $region5: #{fwd.3} parent=0 // loop_body
    %s20 = ssub.s32 %s15, 1
    %s21 = ssub.s32 %s15, 2
    %s22 = sadd.s32 %s15, 1
    %s23 = ssub.s32 %s15, %s22
    %p24 = scmp.eq.s32.totalorder %s23, 0
    %s26 = sadd.s32 %s25, 1
    %s27 = scalar_select %p24, %s25, %s26
    %p30 = pneg %p24
    %p31 = scmp.eq.s32.totalorder %s15, 1
    %p32 = por %p30, %p31
    %p33 = scmp.ne.s32.totalorder %s25, %s28
    %p34 = scmp.eq.s32.totalorder %s15, 0
    %p35 = por %p33, %p34
    %p36 = scmp.ne.s32.totalorder %s25, %s28
    %p37 = scmp.eq.s32.totalorder %s20, 1
    %p38 = por %p36, %p37
    %p39 = scmp.ne.s32.totalorder %s28, %s29
    %p40 = scmp.eq.s32.totalorder %s20, 0
    %p41 = por %p39, %p40
    %p42 = scmp.ne.s32.totalorder %s28, %s29
    %p43 = scmp.eq.s32.totalorder %s21, 1
    %p44 = por %p42, %p43
    %p46 = scmp.ne.s32.totalorder %s29, %s45
    %p47 = scmp.eq.s32.totalorder %s21, 0
    %p48 = por %p46, %p47
    %s49 = ssub.s32 %s15, %s22
    %p50 = scmp.eq.s32.totalorder %s49, 0
    %s52 = sadd.s32 %s51, 1
    %s53 = scalar_select %p50, %s51, %s52
    %p56 = pneg %p50
    %p57 = scmp.eq.s32.totalorder %s15, 1
    %p58 = por %p56, %p57
    %p59 = scmp.ne.s32.totalorder %s51, %s54
    %p60 = scmp.eq.s32.totalorder %s15, 0
    %p61 = por %p59, %p60
    %p62 = scmp.ne.s32.totalorder %s51, %s54
    %p63 = scmp.eq.s32.totalorder %s20, 1
    %p64 = por %p62, %p63
    %p65 = scmp.ne.s32.totalorder %s54, %s55
    %p66 = scmp.eq.s32.totalorder %s20, 0
    %p67 = por %p65, %p66
    %p68 = scmp.ne.s32.totalorder %s54, %s55
    %p69 = scmp.eq.s32.totalorder %s21, 1
    %p70 = por %p68, %p69
    %p72 = scmp.ne.s32.totalorder %s55, %s71
    %p73 = scmp.eq.s32.totalorder %s21, 0
    %p74 = por %p72, %p73
    %s75 = ssub.s32 %s15, %s22
    %p76 = scmp.eq.s32.totalorder %s75, 0
    %s78 = sadd.s32 %s77, 1
    %s79 = scalar_select %p76, %s77, %s78
    %p82 = pneg %p76
    %p83 = scmp.eq.s32.totalorder %s15, 1
    %p84 = por %p82, %p83
    %p85 = scmp.ne.s32.totalorder %s77, %s80
    %p86 = scmp.eq.s32.totalorder %s15, 0
    %p87 = por %p85, %p86
    %p88 = scmp.ne.s32.totalorder %s77, %s80
    %p89 = scmp.eq.s32.totalorder %s20, 1
    %p90 = por %p88, %p89
    %p91 = scmp.ne.s32.totalorder %s80, %s81
    %p92 = scmp.eq.s32.totalorder %s20, 0
    %p93 = por %p91, %p92
    %p94 = scmp.ne.s32.totalorder %s80, %s81
    %p95 = scmp.eq.s32.totalorder %s21, 1
    %p96 = por %p94, %p95
    %p98 = scmp.ne.s32.totalorder %s81, %s97
    %p99 = scmp.eq.s32.totalorder %s21, 0
    %p100 = por %p98, %p99
    %s101 = ssub.s32 %s15, %s22
    %p102 = scmp.eq.s32.totalorder %s101, 0
    %s104 = sadd.s32 %s103, 1
    %s105 = scalar_select %p102, %s103, %s104
    %p108 = pneg %p102
    %p109 = scmp.eq.s32.totalorder %s15, 1
    %p110 = por %p108, %p109
    %p111 = scmp.ne.s32.totalorder %s103, %s106
    %p112 = scmp.eq.s32.totalorder %s15, 0
    %p113 = por %p111, %p112
    %p114 = scmp.ne.s32.totalorder %s103, %s106
    %p115 = scmp.eq.s32.totalorder %s20, 1
    %p116 = por %p114, %p115
    %p117 = scmp.ne.s32.totalorder %s106, %s107
    %p118 = scmp.eq.s32.totalorder %s20, 0
    %p119 = por %p117, %p118
    %p120 = scmp.ne.s32.totalorder %s106, %s107
    %p121 = scmp.eq.s32.totalorder %s21, 1
    %p122 = por %p120, %p121
    %p124 = scmp.ne.s32.totalorder %s107, %s123
    %p125 = scmp.eq.s32.totalorder %s21, 0
    %p126 = por %p124, %p125
    %s127 = ssub.s32 %s15, %s22
    %p128 = scmp.eq.s32.totalorder %s127, 0
    %s130 = sadd.s32 %s129, 1
    %s131 = scalar_select %p128, %s129, %s130
    %p134 = pneg %p128
    %p135 = scmp.eq.s32.totalorder %s15, 1
    %p136 = por %p134, %p135
    %p137 = scmp.ne.s32.totalorder %s129, %s132
    %p138 = scmp.eq.s32.totalorder %s15, 0
    %p139 = por %p137, %p138
    %p140 = scmp.ne.s32.totalorder %s129, %s132
    %p141 = scmp.eq.s32.totalorder %s20, 1
    %p142 = por %p140, %p141
    %p143 = scmp.ne.s32.totalorder %s132, %s133
    %p144 = scmp.eq.s32.totalorder %s20, 0
    %p145 = por %p143, %p144
    %p146 = scmp.ne.s32.totalorder %s132, %s133
    %p147 = scmp.eq.s32.totalorder %s21, 1
    %p148 = por %p146, %p147
    %p150 = scmp.ne.s32.totalorder %s133, %s149
    %p151 = scmp.eq.s32.totalorder %s21, 0
    %p152 = por %p150, %p151
    %s153 = ssub.s32 %s15, %s22
    %p154 = scmp.eq.s32.totalorder %s153, 0
    %s156 = sadd.s32 %s155, 1
    %s157 = scalar_select %p154, %s155, %s156
    %p160 = pneg %p154
    %p161 = scmp.eq.s32.totalorder %s15, 1
    %p162 = por %p160, %p161
    %p163 = scmp.ne.s32.totalorder %s155, %s158
    %p164 = scmp.eq.s32.totalorder %s15, 0
    %p165 = por %p163, %p164
    %p166 = scmp.ne.s32.totalorder %s155, %s158
    %p167 = scmp.eq.s32.totalorder %s20, 1
    %p168 = por %p166, %p167
    %p169 = scmp.ne.s32.totalorder %s158, %s159
    %p170 = scmp.eq.s32.totalorder %s20, 0
    %p171 = por %p169, %p170
    %p172 = scmp.ne.s32.totalorder %s158, %s159
    %p173 = scmp.eq.s32.totalorder %s21, 1
    %p174 = por %p172, %p173
    %p176 = scmp.ne.s32.totalorder %s159, %s175
    %p177 = scmp.eq.s32.totalorder %s21, 0
    %p178 = por %p176, %p177
    %s179 = ssub.s32 %s15, %s22
    %p180 = scmp.eq.s32.totalorder %s179, 0
    %s182 = sadd.s32 %s181, 1
    %s183 = scalar_select %p180, %s181, %s182
    %p186 = pneg %p180
    %p187 = scmp.eq.s32.totalorder %s15, 1
    %p188 = por %p186, %p187
    %p189 = scmp.ne.s32.totalorder %s181, %s184
    %p190 = scmp.eq.s32.totalorder %s15, 0
    %p191 = por %p189, %p190
    %p192 = scmp.ne.s32.totalorder %s181, %s184
    %p193 = scmp.eq.s32.totalorder %s20, 1
    %p194 = por %p192, %p193
    %p195 = scmp.ne.s32.totalorder %s184, %s185
    %p196 = scmp.eq.s32.totalorder %s20, 0
    %p197 = por %p195, %p196
    %p198 = scmp.ne.s32.totalorder %s184, %s185
    %p199 = scmp.eq.s32.totalorder %s21, 1
    %p200 = por %p198, %p199
    %p202 = scmp.ne.s32.totalorder %s185, %s201
    %p203 = scmp.eq.s32.totalorder %s21, 0
    %p204 = por %p202, %p203
    %s205 = ssub.s32 %s15, %s22
    %p206 = scmp.eq.s32.totalorder %s205, 0
    %s208 = sadd.s32 %s207, 1
    %s209 = scalar_select %p206, %s207, %s208
    %p212 = pneg %p206
    %p213 = scmp.eq.s32.totalorder %s15, 1
    %p214 = por %p212, %p213
    %p215 = scmp.ne.s32.totalorder %s207, %s210
    %p216 = scmp.eq.s32.totalorder %s15, 0
    %p217 = por %p215, %p216
    %p218 = scmp.ne.s32.totalorder %s207, %s210
    %p219 = scmp.eq.s32.totalorder %s20, 1
    %p220 = por %p218, %p219
    %p221 = scmp.ne.s32.totalorder %s210, %s211
    %p222 = scmp.eq.s32.totalorder %s20, 0
    %p223 = por %p221, %p222
    %p224 = scmp.ne.s32.totalorder %s210, %s211
    %p225 = scmp.eq.s32.totalorder %s21, 1
    %p226 = por %p224, %p225
    %p228 = scmp.ne.s32.totalorder %s211, %s227
    %p229 = scmp.eq.s32.totalorder %s21, 0
    %p230 = por %p228, %p229
    %s231 = ssub.s32 %s15, %s22
    %p232 = scmp.eq.s32.totalorder %s231, 0
    %s234 = sadd.s32 %s233, 1
    %s235 = scalar_select %p232, %s233, %s234
    %p238 = pneg %p232
    %p239 = scmp.eq.s32.totalorder %s15, 1
    %p240 = por %p238, %p239
    %p241 = scmp.ne.s32.totalorder %s233, %s236
    %p242 = scmp.eq.s32.totalorder %s15, 0
    %p243 = por %p241, %p242
    %p244 = scmp.ne.s32.totalorder %s233, %s236
    %p245 = scmp.eq.s32.totalorder %s20, 1
    %p246 = por %p244, %p245
    %p247 = scmp.ne.s32.totalorder %s236, %s237
    %p248 = scmp.eq.s32.totalorder %s20, 0
    %p249 = por %p247, %p248
    %p250 = scmp.ne.s32.totalorder %s236, %s237
    %p251 = scmp.eq.s32.totalorder %s21, 1
    %p252 = por %p250, %p251
    %p254 = scmp.ne.s32.totalorder %s237, %s253
    %p255 = scmp.eq.s32.totalorder %s21, 0
    %p256 = por %p254, %p255
    %p257 = scmp.le.s32.totalorder 1, %s15
    %p258 = scmp.lt.s32.totalorder %s15, 3
    %p259 = pnand %p257, %p258
    %p260 = pneg %p259
    // Predicated region
    $region9: #{fwd.3} parent=5 // pred_check
      _
    $region10: #{fwd.3} parent=5 // pred_check_branch
      %262 = sbr.rel (%p259) target = $region12
    $region11: #{fwd.3} parent=5 // pred_region
      %s263 = ssub.s32 %s15, 1
    $region12: #{fwd.3} parent=5 // pred_fallthru
      _
    %p264 = scmp.lt.s32.totalorder %s15, 2
    // Predicated region
    $region13: #{fwd.3} parent=5 // pred_check
      %p265 = pneg %p264
    $region14: #{fwd.3} parent=5 // pred_check_branch
      %267 = sbr.rel (%p265) target = $region16
    $region15: #{fwd.3} parent=5 // pred_region
      // Predicated region
      $region17: #{fwd.3} parent=15 // pred_check
        %p268 = pneg %p35
      $region18: #{fwd.3} parent=15 // pred_check_branch
        %270 = sbr.rel (%p268) target = $region20
      $region19: #{fwd.3} parent=15 // pred_region
        %s271 = smul.u32 2, %s15
        %p272 = scmp.lt.s32.totalorder %s271, 3
        %s273 = scalar_select %p272, %s271, 3
        %s274 = smul.addr %s273, 2
        %s275 = scalar_lea.vmem %s0, %s274
        %s276 = smul.u32 2, %s15
      $region20: #{fwd.3} parent=15 // pred_fallthru
        _
      // Predicated region
      $region21: #{fwd.3} parent=15 // pred_check
        %p277 = pneg %p61
      $region22: #{fwd.3} parent=15 // pred_check_branch
        %279 = sbr.rel (%p277) target = $region24
      $region23: #{fwd.3} parent=15 // pred_region
        %s280 = smul.u32 2, %s15
        %p281 = scmp.lt.s32.totalorder %s280, 3
        %s282 = scalar_select %p281, %s280, 3
        %s283 = smul.addr %s282, 2
        %s284 = smul.addr %s283, 4
        %s285 = scalar_lea.vmem %s1, %s284
        %s286 = smul.u32 2, %s15
      $region24: #{fwd.3} parent=15 // pred_fallthru
        _
      // Predicated region
      $region25: #{fwd.3} parent=15 // pred_check
        %p287 = pneg %p87
      $region26: #{fwd.3} parent=15 // pred_check_branch
        %289 = sbr.rel (%p287) target = $region28
      $region27: #{fwd.3} parent=15 // pred_region
        %s290 = smul.u32 2, %s15
        %p291 = scmp.lt.s32.totalorder %s290, 3
        %s292 = scalar_select %p291, %s290, 3
        %s293 = smul.addr %s292, 2
        %s294 = smul.addr %s293, 4
        %s295 = scalar_lea.vmem %s2, %s294
        %s296 = smul.u32 2, %s15
      $region28: #{fwd.3} parent=15 // pred_fallthru
        _
      // Predicated region
      $region29: #{fwd.3} parent=15 // pred_check
        %p297 = pneg %p113
      $region30: #{fwd.3} parent=15 // pred_check_branch
        %299 = sbr.rel (%p297) target = $region32
      $region31: #{fwd.3} parent=15 // pred_region
        %s300 = smul.u32 2, %s15
        %p301 = scmp.lt.s32.totalorder %s300, 3
        %s302 = scalar_select %p301, %s300, 3
        %s303 = smul.addr %s302, 2
        %s304 = smul.addr %s303, 4
        %s305 = scalar_lea.vmem %s3, %s304
        %s306 = smul.u32 2, %s15
      $region32: #{fwd.3} parent=15 // pred_fallthru
        _
      // Predicated region
      $region33: #{fwd.3} parent=15 // pred_check
        %p307 = pneg %p139
      $region34: #{fwd.3} parent=15 // pred_check_branch
        %309 = sbr.rel (%p307) target = $region36
      $region35: #{fwd.3} parent=15 // pred_region
        %s310 = smul.u32 2, %s15
        %p311 = scmp.lt.s32.totalorder %s310, 3
        %s312 = scalar_select %p311, %s310, 3
        %s313 = smul.addr %s312, 2
        %s314 = smul.addr %s313, 4
        %s315 = scalar_lea.vmem %s4, %s314
        %s316 = smul.u32 2, %s15
      $region36: #{fwd.3} parent=15 // pred_fallthru
        _
      // Predicated region
      $region37: #{fwd.3} parent=15 // pred_check
        %p317 = pneg %p165
      $region38: #{fwd.3} parent=15 // pred_check_branch
        %319 = sbr.rel (%p317) target = $region40
      $region39: #{fwd.3} parent=15 // pred_region
        %s320 = smul.u32 2, %s15
        %p321 = scmp.lt.s32.totalorder %s320, 3
        %s322 = scalar_select %p321, %s320, 3
        %s323 = smul.addr %s322, 2
        %s324 = smul.addr %s323, 4
        %s325 = scalar_lea.vmem %s5, %s324
        %s326 = smul.u32 2, %s15
      $region40: #{fwd.3} parent=15 // pred_fallthru
        _
      // Predicated region
      $region41: #{fwd.3} parent=15 // pred_check
        %p327 = pneg %p191
      $region42: #{fwd.3} parent=15 // pred_check_branch
        %329 = sbr.rel (%p327) target = $region44
      $region43: #{fwd.3} parent=15 // pred_region
        %s330 = smul.u32 2, %s15
        %p331 = scmp.lt.s32.totalorder %s330, 3
        %s332 = scalar_select %p331, %s330, 3
        %s333 = smul.addr %s332, 2
        %s334 = smul.addr %s333, 4
        %s335 = scalar_lea.vmem %s6, %s334
        %s336 = smul.u32 2, %s15
      $region44: #{fwd.3} parent=15 // pred_fallthru
        _
    $region16: #{fwd.3} parent=5 // pred_fallthru
      _
    %p337 = scmp.le.s32.totalorder 1, %s15
    %p338 = scmp.lt.s32.totalorder %s15, 3
    %p339 = pnand %p337, %p338
    %p340 = pneg %p339
    // Predicated region
    $region45: #{fwd.3} parent=5 // pred_check
      _
    $region46: #{fwd.3} parent=5 // pred_check_branch
      %342 = sbr.rel (%p339) target = $region48
    $region47: #{fwd.3} parent=5 // pred_region
      %s343 = ssub.s32 %s15, 1
      %s344 = smul.u32 2, %s20
      %p345 = scmp.lt.s32.totalorder %s344, 3
      %s346 = scalar_select %p345, %s344, 3
      %s347 = smul.addr %s346, 2
      %s348 = scalar_lea.vmem %s0, %s347
      %p349 = pneg %p41
      %p350 = pneg %p38
      %s351 = smul.u32 2, %s20
      %p352 = scmp.lt.s32.totalorder %s351, 3
      %s353 = scalar_select %p352, %s351, 3
      %s354 = smul.addr %s353, 2
      %s355 = smul.addr %s354, 4
      %s356 = scalar_lea.vmem %s1, %s355
      %p357 = pneg %p67
      %p358 = pneg %p64
      %s359 = smul.u32 2, %s20
      %p360 = scmp.lt.s32.totalorder %s359, 3
      %s361 = scalar_select %p360, %s359, 3
      %s362 = smul.addr %s361, 2
      %s363 = smul.addr %s362, 4
      %s364 = scalar_lea.vmem %s2, %s363
      %p365 = pneg %p93
      %p366 = pneg %p90
      %s367 = smul.u32 2, %s20
      %p368 = scmp.lt.s32.totalorder %s367, 3
      %s369 = scalar_select %p368, %s367, 3
      %s370 = smul.addr %s369, 2
      %s371 = smul.addr %s370, 4
      %s372 = scalar_lea.vmem %s3, %s371
      %p373 = pneg %p119
      %p374 = pneg %p116
      %s375 = smul.u32 2, %s20
      %p376 = scmp.lt.s32.totalorder %s375, 3
      %s377 = scalar_select %p376, %s375, 3
      %s378 = smul.addr %s377, 2
      %s379 = smul.addr %s378, 4
      %s380 = scalar_lea.vmem %s4, %s379
      %p381 = pneg %p145
      %p382 = pneg %p142
      %s383 = smul.u32 2, %s20
      %p384 = scmp.lt.s32.totalorder %s383, 3
      %s385 = scalar_select %p384, %s383, 3
      %s386 = smul.addr %s385, 2
      %s387 = smul.addr %s386, 4
      %s388 = scalar_lea.vmem %s5, %s387
      %p389 = pneg %p171
      %p390 = pneg %p168
      %s391 = smul.u32 2, %s20
      %p392 = scmp.lt.s32.totalorder %s391, 3
      %s393 = scalar_select %p392, %s391, 3
      %s394 = smul.addr %s393, 2
      %s395 = smul.addr %s394, 4
      %s396 = scalar_lea.vmem %s6, %s395
      %p397 = pneg %p197
      %p398 = pneg %p194
      %p399 = pneg %p223
      %p400 = pneg %p220
      %s401 = smul.u32 2, %s20
      %p402 = scmp.lt.s32.totalorder %s401, 3
      %s403 = scalar_select %p402, %s401, 3
      %s404 = smul.addr %s403, 2
      %s405 = smul.addr %s404, 4
      %s406 = scalar_lea.vmem %s7, %s405
      %p407 = pneg %p249
      %p408 = pneg %p246
      %s409 = smul.u32 2, %s20
      %p410 = scmp.lt.s32.totalorder %s409, 3
      %s411 = scalar_select %p410, %s409, 3
      %s412 = smul.addr %s411, 2
      %s413 = smul.addr %s412, 4
      %s414 = scalar_lea.vmem %s8, %s413
      %s415 = smul.u32 2, %s20
      %p416 = scmp.lt.s32.totalorder %s415, 3
      %s417 = scalar_select %p416, %s415, 3
      %s418 = smul.addr %s417, 2
      %s419 = scalar_lea.vmem %s0, %s418
      %s420 = smul.u32 2, %s20
      %s421 = smul.u32 2, %s20
      %p422 = scmp.lt.s32.totalorder %s421, 3
      %s423 = scalar_select %p422, %s421, 3
      %s424 = smul.addr %s423, 2
      %s425 = smul.addr %s424, 4
      %s426 = scalar_lea.vmem %s1, %s425
      %s427 = smul.u32 2, %s20
      %s428 = smul.u32 2, %s20
      %p429 = scmp.lt.s32.totalorder %s428, 3
      %s430 = scalar_select %p429, %s428, 3
      %s431 = smul.addr %s430, 2
      %s432 = smul.addr %s431, 4
      %s433 = scalar_lea.vmem %s2, %s432
      %s434 = smul.u32 2, %s20
      %s435 = smul.u32 2, %s20
      %p436 = scmp.lt.s32.totalorder %s435, 3
      %s437 = scalar_select %p436, %s435, 3
      %s438 = smul.addr %s437, 2
      %s439 = smul.addr %s438, 4
      %s440 = scalar_lea.vmem %s3, %s439
      %s441 = smul.u32 2, %s20
      %s442 = smul.u32 2, %s20
      %p443 = scmp.lt.s32.totalorder %s442, 3
      %s444 = scalar_select %p443, %s442, 3
      %s445 = smul.addr %s444, 2
      %s446 = smul.addr %s445, 4
      %s447 = scalar_lea.vmem %s4, %s446
      %s448 = smul.u32 2, %s20
      %s449 = smul.u32 2, %s20
      %p450 = scmp.lt.s32.totalorder %s449, 3
      %s451 = scalar_select %p450, %s449, 3
      %s452 = smul.addr %s451, 2
      %s453 = smul.addr %s452, 4
      %s454 = scalar_lea.vmem %s5, %s453
      %s455 = smul.u32 2, %s20
      %s456 = smul.u32 2, %s20
      %p457 = scmp.lt.s32.totalorder %s456, 3
      %s458 = scalar_select %p457, %s456, 3
      %s459 = smul.addr %s458, 2
      %s460 = smul.addr %s459, 4
      %s461 = scalar_lea.vmem %s6, %s460
      %s462 = smul.u32 2, %s20
      %s463 = smul.u32 2, %s20
      %p464 = scmp.lt.s32.totalorder %s463, 3
      %s465 = scalar_select %p464, %s463, 3
      %s466 = smul.addr %s465, 2
      %s467 = smul.addr %s466, 4
      %s468 = scalar_lea.vmem %s7, %s467
      %s469 = smul.u32 2, %s20
      %s470 = smul.u32 2, %s20
      %p471 = scmp.lt.s32.totalorder %s470, 3
      %s472 = scalar_select %p471, %s470, 3
      %s473 = smul.addr %s472, 2
      %s474 = smul.addr %s473, 4
      %s475 = scalar_lea.vmem %s8, %s474
      %s476 = smul.u32 2, %s20
      %v477 = vld [vmem:[%s419] sm:$0x3]
      %v478 = vld [vmem:[%s426] sm:$0xff]
      %v479 = vld [vmem:[%s433] sm:$0xff]
      %v480 = vld [vmem:[%s440] sm:$0xff]
      %v481 = vsub.f32 %v478, %v480
      %v483 = vlaneseq
      %v484 = vshrl.u32 %v483, 7
      %v485 = vsub.s32 0, %v484
      %v486 = vrot.slane %v477, %v485
      %v487 = vlaneseq
      %v488 = vshrl.u32 %v487, 7
      %v489 = vsub.s32 1, %v488
      %v490 = vrot.slane %v477, %v489
      %v491 = vcombine.low %v486, %v490
      %v493 = vmul.f32 %v481, %v491
      %v494 = vsub.f32 %v478, %v493
      %v495 = vld [vmem:[%s454] sm:$0xff]
      %v496 = vsub.f32 %v494, %v495
      %497 = vst [vmem:[%s468] sm:$0xff] %v496
      %v498 = vld [vmem:[%s447] sm:$0xff]
      %v499 = vsub.f32 %v479, %v498
      %v500 = vmul.f32 %v499, %v491
      %v501 = vsub.f32 %v479, %v500
      %v502 = vld [vmem:[%s461] sm:$0xff]
      %v503 = vsub.f32 %v501, %v502
      %504 = vst [vmem:[%s475] sm:$0xff] %v503
      %s505 = scalar_lea.vmem %s419, 2
      %v506 = vld [vmem:[%s505] sm:$0x3]
      %s507 = scalar_lea.vmem %s426, 8
      %v508 = vld [vmem:[%s507] sm:$0xff]
      %s509 = scalar_lea.vmem %s433, 8
      %v510 = vld [vmem:[%s509] sm:$0xff]
      %s511 = scalar_lea.vmem %s440, 8
      %v512 = vld [vmem:[%s511] sm:$0xff]
      %v513 = vsub.f32 %v508, %v512
      %v515 = vlaneseq
      %v516 = vshrl.u32 %v515, 7
      %v517 = vsub.s32 0, %v516
      %v518 = vrot.slane %v506, %v517
      %v519 = vlaneseq
      %v520 = vshrl.u32 %v519, 7
      %v521 = vsub.s32 1, %v520
      %v522 = vrot.slane %v506, %v521
      %v523 = vcombine.low %v518, %v522
      %v525 = vmul.f32 %v513, %v523
      %v526 = vsub.f32 %v508, %v525
      %s527 = scalar_lea.vmem %s454, 8
      %v528 = vld [vmem:[%s527] sm:$0xff]
      %v529 = vsub.f32 %v526, %v528
      %s530 = scalar_lea.vmem %s468, 8
      %531 = vst [vmem:[%s530] sm:$0xff] %v529
      %s532 = scalar_lea.vmem %s447, 8
      %v533 = vld [vmem:[%s532] sm:$0xff]
      %v534 = vsub.f32 %v510, %v533
      %v535 = vmul.f32 %v534, %v523
      %v536 = vsub.f32 %v510, %v535
      %s537 = scalar_lea.vmem %s461, 8
      %v538 = vld [vmem:[%s537] sm:$0xff]
      %v539 = vsub.f32 %v536, %v538
      %s540 = scalar_lea.vmem %s475, 8
      %541 = vst [vmem:[%s540] sm:$0xff] %v539
      %s542 = smul.u32 2, %s20
      %p543 = scmp.lt.s32.totalorder %s542, 3
      %s544 = scalar_select %p543, %s542, 3
      %s545 = smul.addr %s544, 2
      %s546 = smul.addr %s545, 4
      %s547 = scalar_lea.vmem %s7, %s546
      %s548 = smul.u32 2, %s20
      %p549 = scmp.lt.s32.totalorder %s548, 3
      %s550 = scalar_select %p549, %s548, 3
      %s551 = smul.addr %s550, 2
      %s552 = smul.addr %s551, 4
      %s553 = scalar_lea.vmem %s8, %s552
      // Predicated region
      $region49: #{fwd.3} parent=47 // pred_check
        %p554 = pneg %p220
      $region50: #{fwd.3} parent=47 // pred_check_branch
        %556 = sbr.rel (%p554) target = $region52
      $region51: #{fwd.3} parent=47 // pred_region
        %s557 = smul.u32 2, %s20
      $region52: #{fwd.3} parent=47 // pred_fallthru
        _
      // Predicated region
      $region53: #{fwd.3} parent=47 // pred_check
        %p558 = pneg %p246
      $region54: #{fwd.3} parent=47 // pred_check_branch
        %560 = sbr.rel (%p558) target = $region56
      $region55: #{fwd.3} parent=47 // pred_region
        %s561 = smul.u32 2, %s20
      $region56: #{fwd.3} parent=47 // pred_fallthru
        _
    $region48: #{fwd.3} parent=5 // pred_fallthru
      _
    %p562 = scmp.le.s32.totalorder 2, %s15
    // Predicated region
    $region57: #{fwd.3} parent=5 // pred_check
      %p563 = pneg %p562
    $region58: #{fwd.3} parent=5 // pred_check_branch
      %565 = sbr.rel (%p563) target = $region60
    $region59: #{fwd.3} parent=5 // pred_region
      %s566 = ssub.s32 %s15, 2
      // Predicated region
      $region61: #{fwd.3} parent=59 // pred_check
        %p567 = pneg %p226
      $region62: #{fwd.3} parent=59 // pred_check_branch
        %569 = sbr.rel (%p567) target = $region64
      $region63: #{fwd.3} parent=59 // pred_region
        %s570 = smul.u32 2, %s21
        %p571 = scmp.lt.s32.totalorder %s570, 3
        %s572 = scalar_select %p571, %s570, 3
        %s573 = smul.addr %s572, 2
        %s574 = smul.addr %s573, 4
        %s575 = scalar_lea.vmem %s7, %s574
      $region64: #{fwd.3} parent=59 // pred_fallthru
        _
      // Predicated region
      $region65: #{fwd.3} parent=59 // pred_check
        %p576 = pneg %p252
      $region66: #{fwd.3} parent=59 // pred_check_branch
        %578 = sbr.rel (%p576) target = $region68
      $region67: #{fwd.3} parent=59 // pred_region
        %s579 = smul.u32 2, %s21
        %p580 = scmp.lt.s32.totalorder %s579, 3
        %s581 = scalar_select %p580, %s579, 3
        %s582 = smul.addr %s581, 2
        %s583 = smul.addr %s582, 4
        %s584 = scalar_lea.vmem %s8, %s583
      $region68: #{fwd.3} parent=59 // pred_fallthru
        _
    $region60: #{fwd.3} parent=5 // pred_fallthru
      _
  $region6: #{fwd.3} parent=0 // loop_footer
    %s19 = sadd.s32 1, %s15
  $region7: #{fwd.3} parent=0 // loop_footer_branch
    %14 = sbr.rel target = $region3
  $region8: #{fwd.3} parent=0 // loop_exit
    _

</llo_original>
